<compile_context>
chip_gen: v6e
topology: v6e:2x2x1
jax: 0.10.0
libtpu: 0.0.40
codegen_flags: <defaults>
</compile_context>

<pallas_src>
import functools
import math

import jax
import jax.numpy as jnp
from jax import lax
from jax.experimental import pallas as pl
from jax.experimental.pallas import tpu as pltpu


NEG_INF = -1e30  # f32-safe mask value (mask applied in f32)


# ----------------------------------------------------------------------------
# Helpers
# ----------------------------------------------------------------------------
def _layernorm_f32(x, g, b, eps=1e-5):
    # LayerNorm math kept in f32 (VPU/EUP friendly on v5e too).
    mu = jnp.mean(x, axis=-1, keepdims=True)
    var = jnp.mean((x - mu) ** 2, axis=-1, keepdims=True)
    return (x - mu) * lax.rsqrt(var + eps) * g + b


# ----------------------------------------------------------------------------
# Kernel 1: pre-LN + fused QKV projection (2-D, row-tiled)
# ----------------------------------------------------------------------------
def ln_qkv_kernel(x_ref, g_ref, b_ref, wqkv_ref, bqkv_ref, qkv_ref):
    x = x_ref[...]                                        # (rt, E) f32
    h = _layernorm_f32(x, g_ref[...], b_ref[...])
    qkv = jnp.dot(h.astype(jnp.bfloat16), wqkv_ref[...],
                  preferred_element_type=jnp.float32) + bqkv_ref[...]
    qkv_ref[...] = qkv.astype(qkv_ref.dtype)              # bf16 activations


def run_ln_qkv(x2d, p, *, row_tile):
    N, E = x2d.shape
    nr = N // row_tile
    return pl.pallas_call(
        ln_qkv_kernel,
        out_shape=jax.ShapeDtypeStruct((N, 3 * E), jnp.bfloat16),
        grid=(nr,),
        in_specs=[
            pl.BlockSpec((row_tile, E), lambda r: (r, 0)),
            pl.BlockSpec((1, E), lambda r: (0, 0)),
            pl.BlockSpec((1, E), lambda r: (0, 0)),
            pl.BlockSpec((E, 3 * E), lambda r: (0, 0)),
            pl.BlockSpec((1, 3 * E), lambda r: (0, 0)),
        ],
        out_specs=pl.BlockSpec((row_tile, 3 * E), lambda r: (r, 0)),
        compiler_params=pltpu.CompilerParams(
            dimension_semantics=("parallel",)),
    )(x2d, p['ln1_g'], p['ln1_b'], p['wqkv'], p['bqkv'])


# ----------------------------------------------------------------------------
# Kernel 2: flash-attention style causal multi-head attention
# ----------------------------------------------------------------------------
def flash_attn_kernel(num_heads, head_dim, q_tile, kv_tile,
                      qkv_q_ref, qkv_kv_ref, o_ref, m_sc, l_sc, acc_sc):
    qi = pl.program_id(1)
    ki = pl.program_id(2)
    nk = pl.num_programs(2)
    E = num_heads * head_dim
    scale = 1.0 / math.sqrt(head_dim)

    @pl.when(ki == 0)
    def _():
        m_sc[...] = jnp.full_like(m_sc, NEG_INF)
        l_sc[...] = jnp.zeros_like(l_sc)
        acc_sc[...] = jnp.zeros_like(acc_sc)

    q_start = qi * q_tile
    k_start = ki * kv_tile

    # Skip kv tiles entirely in the future of this q tile (causal).
    @pl.when(k_start <= q_start + (q_tile - 1))
    def _():
        qkv_q = qkv_q_ref[0]                              # (tq, 3E) bf16
        qkv_kv = qkv_kv_ref[0]                            # (tk, 3E) bf16

        # Causal mask shared across heads (built once per tile).
        q_pos = q_start + lax.broadcasted_iota(jnp.int32, (q_tile, kv_tile), 0)
        k_pos = k_start + lax.broadcasted_iota(jnp.int32, (q_tile, kv_tile), 1)
        causal = k_pos <= q_pos                           # (tq, tk) bool

        # Per-head unrolled 2-D flash-attention update (no 3-D relayouts).
        for h in range(num_heads):
            lo = h * head_dim
            hi = lo + head_dim
            q_h = qkv_q[:, lo:hi]                         # (tq, Dh) bf16
            k_h = qkv_kv[:, E + lo:E + hi]                # (tk, Dh) bf16
            v_h = qkv_kv[:, 2 * E + lo:2 * E + hi]        # (tk, Dh) bf16

            # scores = q @ k^T (contract on Dh without explicit transpose)
            s = lax.dot_general(
                q_h, k_h, (((1,), (1,)), ((), ())),
                preferred_element_type=jnp.float32) * scale        # (tq, tk)
            s = jnp.where(causal, s, NEG_INF)

            m_prev = m_sc[h]                              # (tq, 1) f32
            m_new = jnp.maximum(m_prev, jnp.max(s, axis=-1, keepdims=True))
            alpha = jnp.exp(m_prev - m_new)
            p = jnp.exp(s - m_new)                        # (tq, tk) f32
            l_sc[h] = alpha * l_sc[h] + jnp.sum(p, axis=-1, keepdims=True)
            acc_sc[h] = alpha * acc_sc[h] + jnp.dot(
                p.astype(jnp.bfloat16), v_h,
                preferred_element_type=jnp.float32)       # (tq, Dh)
            m_sc[h] = m_new

    @pl.when(ki == nk - 1)
    def _():
        outs = []
        for h in range(num_heads):
            outs.append(acc_sc[h] * pl.reciprocal(l_sc[h], approx=True))
        # Merge heads along the lane dim -> one lane-dense (tq, E) store.
        o_ref[0] = jnp.concatenate(outs, axis=-1).astype(o_ref.dtype)


def run_attention(qkv, *, num_heads, q_tile, kv_tile):
    B, S, E3 = qkv.shape
    E = E3 // 3
    Dh = E // num_heads
    nq = S // q_tile
    nk = S // kv_tile
    kern = functools.partial(flash_attn_kernel, num_heads, Dh, q_tile, kv_tile)
    return pl.pallas_call(
        kern,
        out_shape=jax.ShapeDtypeStruct((B, S, E), jnp.bfloat16),
        grid=(B, nq, nk),
        in_specs=[
            pl.BlockSpec((1, q_tile, E3), lambda b, qi, ki: (b, qi, 0)),   # Q src
            pl.BlockSpec((1, kv_tile, E3), lambda b, qi, ki: (b, ki, 0)),  # K/V src
        ],
        out_specs=pl.BlockSpec((1, q_tile, E), lambda b, qi, ki: (b, qi, 0)),
        scratch_shapes=[
            pltpu.VMEM((num_heads, q_tile, 1), jnp.float32),   # running max
            pltpu.VMEM((num_heads, q_tile, 1), jnp.float32),   # running sum
            pltpu.VMEM((num_heads, q_tile, Dh), jnp.float32),  # output accum
        ],
        compiler_params=pltpu.CompilerParams(
            dimension_semantics=("parallel", "parallel", "arbitrary")),
    )(qkv, qkv)


# ----------------------------------------------------------------------------
# Kernel 3: attention out-projection + residual + LN2 + MLP (4E streamed)
# ----------------------------------------------------------------------------
def proj_mlp_kernel(x_ref, attn_ref, wo_ref, bo_ref, g2_ref, beta2_ref,
                    w1_ref, b1_ref, w2_ref, b2_ref, o_ref,
                    res_sc, h2_sc, acc_sc):
    fi = pl.program_id(1)
    nf = pl.num_programs(1)

    @pl.when(fi == 0)
    def _():
        proj = jnp.dot(attn_ref[...], wo_ref[...],
                       preferred_element_type=jnp.float32) + bo_ref[...]
        res = x_ref[...] + proj                           # f32 residual stream
        res_sc[...] = res
        h2 = _layernorm_f32(res, g2_ref[...], beta2_ref[...])
        h2_sc[...] = h2.astype(jnp.bfloat16)
        acc_sc[...] = jnp.zeros_like(acc_sc)

    # MLP: stream one (E, tf) block of w1 and (tf, E) block of w2 per step.
    # TODO(synk): Decoder internals are not shown in the spec; standard GPT-2
    # pre-LN block with tanh-GELU MLP is assumed.
    m = jnp.dot(h2_sc[...], w1_ref[...],
                preferred_element_type=jnp.float32) + b1_ref[...]
    m = jax.nn.gelu(m, approximate=True)
    acc_sc[...] += jnp.dot(m.astype(jnp.bfloat16), w2_ref[...],
                           preferred_element_type=jnp.float32)

    @pl.when(fi == nf - 1)
    def _():
        o_ref[...] = (res_sc[...] + acc_sc[...] + b2_ref[...]).astype(o_ref.dtype)


def run_proj_mlp(x2d, attn2d, p, *, row_tile, ff_tile):
    N, E = x2d.shape
    F = p['w1'].shape[1]
    nr = N // row_tile
    nf = F // ff_tile
    return pl.pallas_call(
        proj_mlp_kernel,
        out_shape=jax.ShapeDtypeStruct((N, E), jnp.float32),
        grid=(nr, nf),
        in_specs=[
            pl.BlockSpec((row_tile, E), lambda r, f: (r, 0)),   # x (residual)
            pl.BlockSpec((row_tile, E), lambda r, f: (r, 0)),   # attn (heads merged)
            pl.BlockSpec((E, E), lambda r, f: (0, 0)),          # wo
            pl.BlockSpec((1, E), lambda r, f: (0, 0)),          # bo
            pl.BlockSpec((1, E), lambda r, f: (0, 0)),          # ln2_g
            pl.BlockSpec((1, E), lambda r, f: (0, 0)),          # ln2_b
            pl.BlockSpec((E, ff_tile), lambda r, f: (0, f)),    # w1 block
            pl.BlockSpec((1, ff_tile), lambda r, f: (0, f)),    # b1 block
            pl.BlockSpec((ff_tile, E), lambda r, f: (f, 0)),    # w2 block
            pl.BlockSpec((1, E), lambda r, f: (0, 0)),          # b2
        ],
        out_specs=pl.BlockSpec((row_tile, E), lambda r, f: (r, 0)),
        scratch_shapes=[
            pltpu.VMEM((row_tile, E), jnp.float32),    # post-attn residual
            pltpu.VMEM((row_tile, E), jnp.bfloat16),   # LN2 output (MXU input)
            pltpu.VMEM((row_tile, E), jnp.float32),    # MLP accumulator
        ],
        compiler_params=pltpu.CompilerParams(
            dimension_semantics=("parallel", "arbitrary")),
    )(x2d, attn2d, p['wo'], p['bo'], p['ln2_g'], p['ln2_b'],
      p['w1'], p['b1'], p['w2'], p['b2'])


# ----------------------------------------------------------------------------
# Kernel 4: logit projection, tiled over the vocabulary (no wte.T in HBM)
# ----------------------------------------------------------------------------
def logits_kernel(x_ref, wte_ref, o_ref):
    x = x_ref[...].astype(jnp.bfloat16)                   # (B, E)
    w = wte_ref[...]                                      # (tv, E) bf16
    o_ref[...] = lax.dot_general(
        x, w, (((1,), (1,)), ((), ())),                   # x @ w^T
        preferred_element_type=jnp.float32).astype(o_ref.dtype)


def run_logits(x_sel, wte_bf16, *, vocab_tile):
    B, E = x_sel.shape
    V = wte_bf16.shape[0]
    nv = V // vocab_tile
    return pl.pallas_call(
        logits_kernel,
        out_shape=jax.ShapeDtypeStruct((B, V), jnp.float32),
        grid=(nv,),
        in_specs=[
            pl.BlockSpec((B, E), lambda v: (0, 0)),              # resident
            pl.BlockSpec((vocab_tile, E), lambda v: (v, 0)),     # streamed
        ],
        out_specs=pl.BlockSpec((B, vocab_tile), lambda v: (0, v)),
        compiler_params=pltpu.CompilerParams(
            dimension_semantics=("parallel",)),
    )(x_sel, wte_bf16)


# ----------------------------------------------------------------------------
# Model glue
# ----------------------------------------------------------------------------
def run_decoder(x2d, p, *, batch, seq, num_heads, row_tile, seq_tile, ff_tile):
    E = x2d.shape[-1]
    qkv = run_ln_qkv(x2d, p, row_tile=row_tile)           # (N, 3E) bf16
    qkv = qkv.reshape(batch, seq, 3 * E)                  # free reshape (glue)
    attn = run_attention(qkv, num_heads=num_heads,
                         q_tile=seq_tile, kv_tile=seq_tile)  # (B, S, E) bf16
    attn2d = attn.reshape(batch * seq, E)                 # free reshape (glue)
    return run_proj_mlp(x2d, attn2d, p, row_tile=row_tile, ff_tile=ff_tile)


def positional_encoding(context_length, embedding_size, scalar, coefficient):
    # sinusoidal PE: angle(pos, j) = pos / scalar**(coefficient * (j // 2) / E)
    # even j -> sin, odd j -> cos
    # TODO(synk): exact PositionalEncoder formula not shown in the module;
    # standard sinusoidal encoding parameterized by (scalar, coefficient) used.
    pos = jnp.arange(context_length, dtype=jnp.float32)[:, None]      # (S, 1)
    j = jnp.arange(embedding_size, dtype=jnp.float32)[None, :]        # (1, E)
    pair = jnp.floor(j / 2.0)
    angle = pos / jnp.power(jnp.float32(scalar),
                            coefficient * pair / embedding_size)
    pe = jnp.where((jnp.arange(embedding_size) % 2) == 0,
                   jnp.sin(angle), jnp.cos(angle))
    return pe.astype(jnp.float32)                                      # (S, E)


def init_params(key, vocab, embed, num_decoders):
    keys = jax.random.split(key, 1 + num_decoders * 6)
    wte = 0.02 * jax.random.normal(keys[0], (vocab, embed), jnp.float32)
    decoders = []
    for d in range(num_decoders):
        k = keys[1 + d * 6: 1 + (d + 1) * 6]
        wq = 0.02 * jax.random.normal(k[0], (embed, embed), jnp.float32)
        wk = 0.02 * jax.random.normal(k[1], (embed, embed), jnp.float32)
        wv = 0.02 * jax.random.normal(k[2], (embed, embed), jnp.float32)
        decoders.append(dict(
            ln1_g=jnp.ones((1, embed), jnp.float32),
            ln1_b=jnp.zeros((1, embed), jnp.float32),
            wqkv=jnp.concatenate([wq, wk, wv], axis=1).astype(jnp.bfloat16),
            bqkv=jnp.zeros((1, 3 * embed), jnp.float32),
            wo=(0.02 * jax.random.normal(k[3], (embed, embed), jnp.float32)
                ).astype(jnp.bfloat16),
            bo=jnp.zeros((1, embed), jnp.float32),
            ln2_g=jnp.ones((1, embed), jnp.float32),
            ln2_b=jnp.zeros((1, embed), jnp.float32),
            w1=(0.02 * jax.random.normal(k[4], (embed, 4 * embed), jnp.float32)
                ).astype(jnp.bfloat16),
            b1=jnp.zeros((1, 4 * embed), jnp.float32),
            w2=(0.02 * jax.random.normal(k[5], (4 * embed, embed), jnp.float32)
                ).astype(jnp.bfloat16),
            b2=jnp.zeros((1, embed), jnp.float32),
        ))
    return wte, decoders


@functools.partial(jax.jit,
                   static_argnames=("num_heads", "row_tile", "seq_tile",
                                    "ff_tile", "vocab_tile"))
def gpt2_forward(token_ids, i, wte, decoder_params, pe, *, num_heads,
                 row_tile, seq_tile, ff_tile, vocab_tile):
    B, S = token_ids.shape
    E = wte.shape[1]
    # embedding lookup (glue gather)
    x = wte[token_ids].astype(jnp.float32)                # (B, S, E)
    # positional encoding (glue add)
    x = x + pe[None, :, :]
    # flatten residual stream to lane-dense 2-D slab for matmul kernels
    x2d = x.reshape(B * S, E)
    # decoder stack (Pallas kernels)
    # TODO(synk): cross-layer weight prefetch (cross-call futures) not implemented;
    # each layer's weights are streamed/pipelined via BlockSpecs within its calls.
    for p in decoder_params:
        x2d = run_decoder(x2d, p, batch=B, seq=S, num_heads=num_heads,
                          row_tile=row_tile, seq_tile=seq_tile, ff_tile=ff_tile)
    # x.select(dim=1, index=i)
    x_sel = x2d.reshape(B, S, E)[:, i, :]                 # (B, E)
    # logits = x_sel @ wte.T  (vocab-tiled Pallas kernel, bf16 wte stream)
    return run_logits(x_sel, wte.astype(jnp.bfloat16),
                      vocab_tile=vocab_tile)              # (B, V)


# ----------------------------------------------------------------------------
# Main
# ----------------------------------------------------------------------------
if __name__ == "__main__":
    VOCAB = 256
    EMBED = 64
    CONTEXT = 32
    BATCH = 2
    HEADS = 4            # head_dim = 16
    DECODERS = 2
    PE_SCALAR = 10000
    PE_COEFF = 2

    ROW_TILE = 32        # rows of the flat (B*S, E) residual stream per step
    SEQ_TILE = 16        # q / kv tile for attention (multiple of 8)
    FF_TILE = 128        # MLP 4E reduction tile (lane-dense)
    VOCAB_TILE = 128     # vocab tile for logit projection (lane-dense)

    key = jax.random.PRNGKey(0)
    k_tok, k_par = jax.random.split(key)

    token_ids = jax.random.randint(k_tok, (BATCH, CONTEXT), 0, VOCAB,
                                   dtype=jnp.int32)
    wte, decoder_params = init_params(k_par, VOCAB, EMBED, DECODERS)
    pe = positional_encoding(CONTEXT, EMBED, PE_SCALAR, PE_COEFF)

    i = 3  # index of the token to predict
    logits = gpt2_forward(token_ids, i, wte, decoder_params, pe,
                          num_heads=HEADS, row_tile=ROW_TILE,
                          seq_tile=SEQ_TILE, ff_tile=FF_TILE,
                          vocab_tile=VOCAB_TILE)
    logits = jax.block_until_ready(logits)

    assert logits.shape == (BATCH, VOCAB)
    assert bool(jnp.all(jnp.isfinite(logits)))
    print("KERNEL_OK")
</pallas_src>

<mosaic_0001>
module attributes {stable_mosaic.version = 11 : i64} {
  func.func @proj_mlp_kernel(%arg0: i32, %arg1: i32, %arg2: memref<32x64xf32, #tpu.memory_space<vmem>>, %arg3: memref<32x64xbf16, #tpu.memory_space<vmem>>, %arg4: memref<64x64xbf16, #tpu.memory_space<vmem>>, %arg5: memref<1x64xf32, #tpu.memory_space<vmem>>, %arg6: memref<1x64xf32, #tpu.memory_space<vmem>>, %arg7: memref<1x64xf32, #tpu.memory_space<vmem>>, %arg8: memref<64x128xbf16, #tpu.memory_space<vmem>>, %arg9: memref<1x128xf32, #tpu.memory_space<vmem>>, %arg10: memref<128x64xbf16, #tpu.memory_space<vmem>>, %arg11: memref<1x64xf32, #tpu.memory_space<vmem>>, %arg12: memref<32x64xf32, #tpu.memory_space<vmem>>, %arg13: memref<32x64xf32, #tpu.memory_space<vmem>>, %arg14: memref<32x64xbf16, #tpu.memory_space<vmem>>, %arg15: memref<32x64xf32, #tpu.memory_space<vmem>>) attributes {dimension_semantics = [#tpu.dimension_semantics<parallel>, #tpu.dimension_semantics<arbitrary>], iteration_bounds = array<i64: 2, 2>, scalar_prefetch = 0 : i64, scratch_operands = 3 : i64, tpu.core_type = #tpu.core_type<tc>, window_params = [{transform_indices = @transform_0, window_bounds = array<i64: 32, 64>}, {transform_indices = @transform_1, window_bounds = array<i64: 32, 64>}, {pipeline_mode = #tpu.pipeline_mode<synchronous>, transform_indices = @transform_2, window_bounds = array<i64: 64, 64>}, {pipeline_mode = #tpu.pipeline_mode<synchronous>, transform_indices = @transform_3, window_bounds = array<i64: 1, 64>}, {pipeline_mode = #tpu.pipeline_mode<synchronous>, transform_indices = @transform_4, window_bounds = array<i64: 1, 64>}, {pipeline_mode = #tpu.pipeline_mode<synchronous>, transform_indices = @transform_5, window_bounds = array<i64: 1, 64>}, {transform_indices = @transform_6, window_bounds = array<i64: 64, 128>}, {transform_indices = @transform_7, window_bounds = array<i64: 1, 128>}, {transform_indices = @transform_8, window_bounds = array<i64: 128, 64>}, {pipeline_mode = #tpu.pipeline_mode<synchronous>, transform_indices = @transform_9, window_bounds = array<i64: 1, 64>}, {transform_indices = @transform_10, window_bounds = array<i64: 32, 64>}]} {
    %c0_i32 = arith.constant 0 : i32
    %0 = arith.cmpi eq, %arg1, %c0_i32 : i32
    %1 = arith.extui %0 : i1 to i32
    %c0_i32_0 = arith.constant 0 : i32
    %2 = arith.cmpi ne, %1, %c0_i32_0 : i32
    scf.if %2 {
      %c0_18 = arith.constant 0 : index
      %c0_19 = arith.constant 0 : index
      %31 = vector.load %arg3[%c0_18, %c0_19] : memref<32x64xbf16, #tpu.memory_space<vmem>>, vector<32x64xbf16>
      %c0_20 = arith.constant 0 : index
      %c0_21 = arith.constant 0 : index
      %32 = vector.load %arg4[%c0_20, %c0_21] : memref<64x64xbf16, #tpu.memory_space<vmem>>, vector<64x64xbf16>
      %cst_22 = arith.constant dense<0.000000e+00> : vector<32x64xf32>
      %33 = tpu.matmul %31, %32, %cst_22 {dimension_numbers = #tpu.dot_dimension_numbers<[1], [0], [0], [1], [0, 0, 1, 1], [], []>} : vector<32x64xbf16>, vector<64x64xbf16>, vector<32x64xf32> -> vector<32x64xf32>
      %c0_23 = arith.constant 0 : index
      %c0_24 = arith.constant 0 : index
      %34 = vector.load %arg5[%c0_23, %c0_24] : memref<1x64xf32, #tpu.memory_space<vmem>>, vector<1x64xf32>
      %35 = vector.broadcast %34 : vector<1x64xf32> to vector<32x64xf32>
      %36 = arith.addf %33, %35 : vector<32x64xf32>
      %c0_25 = arith.constant 0 : index
      %c0_26 = arith.constant 0 : index
      %37 = vector.load %arg2[%c0_25, %c0_26] : memref<32x64xf32, #tpu.memory_space<vmem>>, vector<32x64xf32>
      %38 = arith.addf %37, %36 : vector<32x64xf32>
      %c0_27 = arith.constant 0 : index
      %c0_28 = arith.constant 0 : index
      %39 = vector.load %arg13[%c0_27, %c0_28] : memref<32x64xf32, #tpu.memory_space<vmem>>, vector<32x64xf32>
      tpu.vector_store %arg13[%c0_27, %c0_28], %38 {strides = array<i32>} : memref<32x64xf32, #tpu.memory_space<vmem>>, vector<32x64xf32>,
      %c0_29 = arith.constant 0 : index
      %c0_30 = arith.constant 0 : index
      %40 = vector.load %arg6[%c0_29, %c0_30] : memref<1x64xf32, #tpu.memory_space<vmem>>, vector<1x64xf32>
      %c0_31 = arith.constant 0 : index
      %c0_32 = arith.constant 0 : index
      %41 = vector.load %arg7[%c0_31, %c0_32] : memref<1x64xf32, #tpu.memory_space<vmem>>, vector<1x64xf32>
      %cst_33 = arith.constant dense<0.000000e+00> : vector<32xf32>
      %42 = vector.multi_reduction <add>, %38, %cst_33 [1] : vector<32x64xf32> to vector<32xf32>
      %43 = vector.shape_cast %42 : vector<32xf32> to vector<32x1xf32>
      %cst_34 = arith.constant 6.400000e+01 : f32
      %44 = vector.broadcast %cst_34 : f32 to vector<32x1xf32>
      %45 = arith.divf %43, %44 : vector<32x1xf32>
      %46 = vector.broadcast %45 : vector<32x1xf32> to vector<32x64xf32>
      %47 = arith.subf %38, %46 : vector<32x64xf32>
      %48 = arith.mulf %47, %47 : vector<32x64xf32>
      %cst_35 = arith.constant dense<0.000000e+00> : vector<32xf32>
      %49 = vector.multi_reduction <add>, %48, %cst_35 [1] : vector<32x64xf32> to vector<32xf32>
      %50 = vector.shape_cast %49 : vector<32xf32> to vector<32x1xf32>
      %cst_36 = arith.constant 6.400000e+01 : f32
      %51 = vector.broadcast %cst_36 : f32 to vector<32x1xf32>
      %52 = arith.divf %50, %51 : vector<32x1xf32>
      %53 = vector.broadcast %45 : vector<32x1xf32> to vector<32x64xf32>
      %54 = arith.subf %38, %53 : vector<32x64xf32>
      %cst_37 = arith.constant 9.99999974E-6 : f32
      %55 = vector.broadcast %cst_37 : f32 to vector<32x1xf32>
      %56 = arith.addf %52, %55 : vector<32x1xf32>
      %57 = math.rsqrt %56 : vector<32x1xf32>
      %58 = vector.broadcast %57 : vector<32x1xf32> to vector<32x64xf32>
      %59 = arith.mulf %54, %58 : vector<32x64xf32>
      %60 = vector.broadcast %40 : vector<1x64xf32> to vector<32x64xf32>
      %61 = arith.mulf %59, %60 : vector<32x64xf32>
      %62 = vector.broadcast %41 : vector<1x64xf32> to vector<32x64xf32>
      %63 = arith.addf %61, %62 : vector<32x64xf32>
      %64 = arith.truncf %63 : vector<32x64xf32> to vector<32x64xbf16>
      %c0_38 = arith.constant 0 : index
      %c0_39 = arith.constant 0 : index
      %65 = vector.load %arg14[%c0_38, %c0_39] : memref<32x64xbf16, #tpu.memory_space<vmem>>, vector<32x64xbf16>
      tpu.vector_store %arg14[%c0_38, %c0_39], %64 {strides = array<i32>} : memref<32x64xbf16, #tpu.memory_space<vmem>>, vector<32x64xbf16>,
      %cst_40 = arith.constant 0.000000e+00 : f32
      %66 = vector.broadcast %cst_40 : f32 to vector<32x64xf32>
      %c0_41 = arith.constant 0 : index
      %c0_42 = arith.constant 0 : index
      %67 = vector.load %arg15[%c0_41, %c0_42] : memref<32x64xf32, #tpu.memory_space<vmem>>, vector<32x64xf32>
      tpu.vector_store %arg15[%c0_41, %c0_42], %66 {strides = array<i32>} : memref<32x64xf32, #tpu.memory_space<vmem>>, vector<32x64xf32>,
    } else {
    }
    %c0 = arith.constant 0 : index
    %c0_1 = arith.constant 0 : index
    %3 = vector.load %arg14[%c0, %c0_1] : memref<32x64xbf16, #tpu.memory_space<vmem>>, vector<32x64xbf16>
    %c0_2 = arith.constant 0 : index
    %c0_3 = arith.constant 0 : index
    %4 = vector.load %arg8[%c0_2, %c0_3] : memref<64x128xbf16, #tpu.memory_space<vmem>>, vector<64x128xbf16>
    %cst = arith.constant dense<0.000000e+00> : vector<32x128xf32>
    %5 = tpu.matmul %3, %4, %cst {dimension_numbers = #tpu.dot_dimension_numbers<[1], [0], [0], [1], [0, 0, 1, 1], [], []>} : vector<32x64xbf16>, vector<64x128xbf16>, vector<32x128xf32> -> vector<32x128xf32>
    %c0_4 = arith.constant 0 : index
    %c0_5 = arith.constant 0 : index
    %6 = vector.load %arg9[%c0_4, %c0_5] : memref<1x128xf32, #tpu.memory_space<vmem>>, vector<1x128xf32>
    %7 = vector.broadcast %6 : vector<1x128xf32> to vector<32x128xf32>
    %8 = arith.addf %5, %7 : vector<32x128xf32>
    %9 = arith.mulf %8, %8 : vector<32x128xf32>
    %10 = arith.mulf %8, %9 : vector<32x128xf32>
    %cst_6 = arith.constant 4.471500e-02 : f32
    %11 = vector.broadcast %cst_6 : f32 to vector<32x128xf32>
    %12 = arith.mulf %11, %10 : vector<32x128xf32>
    %13 = arith.addf %8, %12 : vector<32x128xf32>
    %cst_7 = arith.constant 0.797884583 : f32
    %14 = vector.broadcast %cst_7 : f32 to vector<32x128xf32>
    %15 = arith.mulf %14, %13 : vector<32x128xf32>
    %16 = math.tanh %15 : vector<32x128xf32>
    %cst_8 = arith.constant 1.000000e+00 : f32
    %17 = vector.broadcast %cst_8 : f32 to vector<32x128xf32>
    %18 = arith.addf %17, %16 : vector<32x128xf32>
    %cst_9 = arith.constant 5.000000e-01 : f32
    %19 = vector.broadcast %cst_9 : f32 to vector<32x128xf32>
    %20 = arith.mulf %19, %18 : vector<32x128xf32>
    %21 = arith.mulf %8, %20 : vector<32x128xf32>
    %c0_10 = arith.constant 0 : index
    %c0_11 = arith.constant 0 : index
    %22 = vector.load %arg15[%c0_10, %c0_11] : memref<32x64xf32, #tpu.memory_space<vmem>>, vector<32x64xf32>
    %23 = arith.truncf %21 : vector<32x128xf32> to vector<32x128xbf16>
    %c0_12 = arith.constant 0 : index
    %c0_13 = arith.constant 0 : index
    %24 = vector.load %arg10[%c0_12, %c0_13] : memref<128x64xbf16, #tpu.memory_space<vmem>>, vector<128x64xbf16>
    %cst_14 = arith.constant dense<0.000000e+00> : vector<32x64xf32>
    %25 = tpu.matmul %23, %24, %cst_14 {dimension_numbers = #tpu.dot_dimension_numbers<[1], [0], [0], [1], [0, 0, 1, 1], [], []>} : vector<32x128xbf16>, vector<128x64xbf16>, vector<32x64xf32> -> vector<32x64xf32>
    %26 = arith.addf %22, %25 : vector<32x64xf32>
    %c0_15 = arith.constant 0 : index
    %c0_16 = arith.constant 0 : index
    %27 = vector.load %arg15[%c0_15, %c0_16] : memref<32x64xf32, #tpu.memory_space<vmem>>, vector<32x64xf32>
    tpu.vector_store %arg15[%c0_15, %c0_16], %26 {strides = array<i32>} : memref<32x64xf32, #tpu.memory_space<vmem>>, vector<32x64xf32>,
    %c1_i32 = arith.constant 1 : i32
    %28 = arith.cmpi eq, %arg1, %c1_i32 : i32
    %29 = arith.extui %28 : i1 to i32
    %c0_i32_17 = arith.constant 0 : i32
    %30 = arith.cmpi ne, %29, %c0_i32_17 : i32
    scf.if %30 {
      %c0_18 = arith.constant 0 : index
      %c0_19 = arith.constant 0 : index
      %31 = vector.load %arg13[%c0_18, %c0_19] : memref<32x64xf32, #tpu.memory_space<vmem>>, vector<32x64xf32>
      %c0_20 = arith.constant 0 : index
      %c0_21 = arith.constant 0 : index
      %32 = vector.load %arg15[%c0_20, %c0_21] : memref<32x64xf32, #tpu.memory_space<vmem>>, vector<32x64xf32>
      %33 = arith.addf %31, %32 : vector<32x64xf32>
      %c0_22 = arith.constant 0 : index
      %c0_23 = arith.constant 0 : index
      %34 = vector.load %arg11[%c0_22, %c0_23] : memref<1x64xf32, #tpu.memory_space<vmem>>, vector<1x64xf32>
      %35 = vector.broadcast %34 : vector<1x64xf32> to vector<32x64xf32>
      %36 = arith.addf %33, %35 : vector<32x64xf32>
      %c0_24 = arith.constant 0 : index
      %c0_25 = arith.constant 0 : index
      %37 = vector.load %arg12[%c0_24, %c0_25] : memref<32x64xf32, #tpu.memory_space<vmem>>, vector<32x64xf32>
      tpu.vector_store %arg12[%c0_24, %c0_25], %36 {strides = array<i32>} : memref<32x64xf32, #tpu.memory_space<vmem>>, vector<32x64xf32>,
    } else {
    }
    return
  }
  func.func @transform_0(%arg0: i32, %arg1: i32) -> (i32, i32) {
    %c0_i32 = arith.constant 0 : i32
    %c0_i32_0 = arith.constant 0 : i32
    return %arg0, %c0_i32 : i32, i32
  }
  func.func @transform_1(%arg0: i32, %arg1: i32) -> (i32, i32) {
    %c0_i32 = arith.constant 0 : i32
    %c0_i32_0 = arith.constant 0 : i32
    return %arg0, %c0_i32 : i32, i32
  }
  func.func @transform_2(%arg0: i32, %arg1: i32) -> (i32, i32) {
    %c0_i32 = arith.constant 0 : i32
    %c0_i32_0 = arith.constant 0 : i32
    %c0_i32_1 = arith.constant 0 : i32
    return %c0_i32, %c0_i32_0 : i32, i32
  }
  func.func @transform_3(%arg0: i32, %arg1: i32) -> (i32, i32) {
    %c0_i32 = arith.constant 0 : i32
    %c0_i32_0 = arith.constant 0 : i32
    %c0_i32_1 = arith.constant 0 : i32
    return %c0_i32, %c0_i32_0 : i32, i32
  }
  func.func @transform_4(%arg0: i32, %arg1: i32) -> (i32, i32) {
    %c0_i32 = arith.constant 0 : i32
    %c0_i32_0 = arith.constant 0 : i32
    %c0_i32_1 = arith.constant 0 : i32
    return %c0_i32, %c0_i32_0 : i32, i32
  }
  func.func @transform_5(%arg0: i32, %arg1: i32) -> (i32, i32) {
    %c0_i32 = arith.constant 0 : i32
    %c0_i32_0 = arith.constant 0 : i32
    %c0_i32_1 = arith.constant 0 : i32
    return %c0_i32, %c0_i32_0 : i32, i32
  }
  func.func @transform_6(%arg0: i32, %arg1: i32) -> (i32, i32) {
    %c0_i32 = arith.constant 0 : i32
    %c0_i32_0 = arith.constant 0 : i32
    return %c0_i32, %arg1 : i32, i32
  }
  func.func @transform_7(%arg0: i32, %arg1: i32) -> (i32, i32) {
    %c0_i32 = arith.constant 0 : i32
    %c0_i32_0 = arith.constant 0 : i32
    return %c0_i32, %arg1 : i32, i32
  }
  func.func @transform_8(%arg0: i32, %arg1: i32) -> (i32, i32) {
    %c0_i32 = arith.constant 0 : i32
    %c0_i32_0 = arith.constant 0 : i32
    return %arg1, %c0_i32 : i32, i32
  }
  func.func @transform_9(%arg0: i32, %arg1: i32) -> (i32, i32) {
    %c0_i32 = arith.constant 0 : i32
    %c0_i32_0 = arith.constant 0 : i32
    %c0_i32_1 = arith.constant 0 : i32
    return %c0_i32, %c0_i32_0 : i32, i32
  }
  func.func @transform_10(%arg0: i32, %arg1: i32) -> (i32, i32) {
    %c0_i32 = arith.constant 0 : i32
    %c0_i32_0 = arith.constant 0 : i32
    return %arg0, %c0_i32 : i32, i32
  }
}

module attributes {stable_mosaic.version = 11 : i64} {
  func.func @ln_qkv_kernel(%arg0: i32, %arg1: memref<32x64xf32, #tpu.memory_space<vmem>>, %arg2: memref<1x64xf32, #tpu.memory_space<vmem>>, %arg3: memref<1x64xf32, #tpu.memory_space<vmem>>, %arg4: memref<64x192xbf16, #tpu.memory_space<vmem>>, %arg5: memref<1x192xf32, #tpu.memory_space<vmem>>, %arg6: memref<32x192xbf16, #tpu.memory_space<vmem>>) attributes {dimension_semantics = [#tpu.dimension_semantics<parallel>], iteration_bounds = array<i64: 2>, scalar_prefetch = 0 : i64, scratch_operands = 0 : i64, tpu.core_type = #tpu.core_type<tc>, window_params = [{transform_indices = @transform_0, window_bounds = array<i64: 32, 64>}, {pipeline_mode = #tpu.pipeline_mode<synchronous>, transform_indices = @transform_1, window_bounds = array<i64: 1, 64>}, {pipeline_mode = #tpu.pipeline_mode<synchronous>, transform_indices = @transform_2, window_bounds = array<i64: 1, 64>}, {pipeline_mode = #tpu.pipeline_mode<synchronous>, transform_indices = @transform_3, window_bounds = array<i64: 64, 192>}, {pipeline_mode = #tpu.pipeline_mode<synchronous>, transform_indices = @transform_4, window_bounds = array<i64: 1, 192>}, {transform_indices = @transform_5, window_bounds = array<i64: 32, 192>}]} {
    %c0 = arith.constant 0 : index
    %c0_0 = arith.constant 0 : index
    %0 = vector.load %arg1[%c0, %c0_0] : memref<32x64xf32, #tpu.memory_space<vmem>>, vector<32x64xf32>
    %c0_1 = arith.constant 0 : index
    %c0_2 = arith.constant 0 : index
    %1 = vector.load %arg2[%c0_1, %c0_2] : memref<1x64xf32, #tpu.memory_space<vmem>>, vector<1x64xf32>
    %c0_3 = arith.constant 0 : index
    %c0_4 = arith.constant 0 : index
    %2 = vector.load %arg3[%c0_3, %c0_4] : memref<1x64xf32, #tpu.memory_space<vmem>>, vector<1x64xf32>
    %cst = arith.constant dense<0.000000e+00> : vector<32xf32>
    %3 = vector.multi_reduction <add>, %0, %cst [1] : vector<32x64xf32> to vector<32xf32>
    %4 = vector.shape_cast %3 : vector<32xf32> to vector<32x1xf32>
    %cst_5 = arith.constant 6.400000e+01 : f32
    %5 = vector.broadcast %cst_5 : f32 to vector<32x1xf32>
    %6 = arith.divf %4, %5 : vector<32x1xf32>
    %7 = vector.broadcast %6 : vector<32x1xf32> to vector<32x64xf32>
    %8 = arith.subf %0, %7 : vector<32x64xf32>
    %9 = arith.mulf %8, %8 : vector<32x64xf32>
    %cst_6 = arith.constant dense<0.000000e+00> : vector<32xf32>
    %10 = vector.multi_reduction <add>, %9, %cst_6 [1] : vector<32x64xf32> to vector<32xf32>
    %11 = vector.shape_cast %10 : vector<32xf32> to vector<32x1xf32>
    %cst_7 = arith.constant 6.400000e+01 : f32
    %12 = vector.broadcast %cst_7 : f32 to vector<32x1xf32>
    %13 = arith.divf %11, %12 : vector<32x1xf32>
    %14 = vector.broadcast %6 : vector<32x1xf32> to vector<32x64xf32>
    %15 = arith.subf %0, %14 : vector<32x64xf32>
    %cst_8 = arith.constant 9.99999974E-6 : f32
    %16 = vector.broadcast %cst_8 : f32 to vector<32x1xf32>
    %17 = arith.addf %13, %16 : vector<32x1xf32>
    %18 = math.rsqrt %17 : vector<32x1xf32>
    %19 = vector.broadcast %18 : vector<32x1xf32> to vector<32x64xf32>
    %20 = arith.mulf %15, %19 : vector<32x64xf32>
    %21 = vector.broadcast %1 : vector<1x64xf32> to vector<32x64xf32>
    %22 = arith.mulf %20, %21 : vector<32x64xf32>
    %23 = vector.broadcast %2 : vector<1x64xf32> to vector<32x64xf32>
    %24 = arith.addf %22, %23 : vector<32x64xf32>
    %25 = arith.truncf %24 : vector<32x64xf32> to vector<32x64xbf16>
    %c0_9 = arith.constant 0 : index
    %c0_10 = arith.constant 0 : index
    %26 = vector.load %arg4[%c0_9, %c0_10] : memref<64x192xbf16, #tpu.memory_space<vmem>>, vector<64x192xbf16>
    %cst_11 = arith.constant dense<0.000000e+00> : vector<32x192xf32>
    %27 = tpu.matmul %25, %26, %cst_11 {dimension_numbers = #tpu.dot_dimension_numbers<[1], [0], [0], [1], [0, 0, 1, 1], [], []>} : vector<32x64xbf16>, vector<64x192xbf16>, vector<32x192xf32> -> vector<32x192xf32>
    %c0_12 = arith.constant 0 : index
    %c0_13 = arith.constant 0 : index
    %28 = vector.load %arg5[%c0_12, %c0_13] : memref<1x192xf32, #tpu.memory_space<vmem>>, vector<1x192xf32>
    %29 = vector.broadcast %28 : vector<1x192xf32> to vector<32x192xf32>
    %30 = arith.addf %27, %29 : vector<32x192xf32>
    %31 = arith.truncf %30 : vector<32x192xf32> to vector<32x192xbf16>
    %c0_14 = arith.constant 0 : index
    %c0_15 = arith.constant 0 : index
    %32 = vector.load %arg6[%c0_14, %c0_15] : memref<32x192xbf16, #tpu.memory_space<vmem>>, vector<32x192xbf16>
    tpu.vector_store %arg6[%c0_14, %c0_15], %31 {strides = array<i32>} : memref<32x192xbf16, #tpu.memory_space<vmem>>, vector<32x192xbf16>,
    return
  }
  func.func @transform_0(%arg0: i32) -> (i32, i32) {
    %c0_i32 = arith.constant 0 : i32
    %c0_i32_0 = arith.constant 0 : i32
    return %arg0, %c0_i32 : i32, i32
  }
  func.func @transform_1(%arg0: i32) -> (i32, i32) {
    %c0_i32 = arith.constant 0 : i32
    %c0_i32_0 = arith.constant 0 : i32
    %c0_i32_1 = arith.constant 0 : i32
    return %c0_i32, %c0_i32_0 : i32, i32
  }
  func.func @transform_2(%arg0: i32) -> (i32, i32) {
    %c0_i32 = arith.constant 0 : i32
    %c0_i32_0 = arith.constant 0 : i32
    %c0_i32_1 = arith.constant 0 : i32
    return %c0_i32, %c0_i32_0 : i32, i32
  }
  func.func @transform_3(%arg0: i32) -> (i32, i32) {
    %c0_i32 = arith.constant 0 : i32
    %c0_i32_0 = arith.constant 0 : i32
    %c0_i32_1 = arith.constant 0 : i32
    return %c0_i32, %c0_i32_0 : i32, i32
  }
  func.func @transform_4(%arg0: i32) -> (i32, i32) {
    %c0_i32 = arith.constant 0 : i32
    %c0_i32_0 = arith.constant 0 : i32
    %c0_i32_1 = arith.constant 0 : i32
    return %c0_i32, %c0_i32_0 : i32, i32
  }
  func.func @transform_5(%arg0: i32) -> (i32, i32) {
    %c0_i32 = arith.constant 0 : i32
    %c0_i32_0 = arith.constant 0 : i32
    return %arg0, %c0_i32 : i32, i32
  }
}

module attributes {stable_mosaic.version = 11 : i64} {
  func.func @flash_attn_kernel(%arg0: i32, %arg1: i32, %arg2: i32, %arg3: memref<1x16x192xbf16, #tpu.memory_space<vmem>>, %arg4: memref<1x16x192xbf16, #tpu.memory_space<vmem>>, %arg5: memref<1x16x64xbf16, #tpu.memory_space<vmem>>, %arg6: memref<4x16x1xf32, #tpu.memory_space<vmem>>, %arg7: memref<4x16x1xf32, #tpu.memory_space<vmem>>, %arg8: memref<4x16x16xf32, #tpu.memory_space<vmem>>) attributes {dimension_semantics = [#tpu.dimension_semantics<parallel>, #tpu.dimension_semantics<parallel>, #tpu.dimension_semantics<arbitrary>], iteration_bounds = array<i64: 2, 2, 2>, scalar_prefetch = 0 : i64, scratch_operands = 3 : i64, tpu.core_type = #tpu.core_type<tc>, window_params = [{transform_indices = @transform_0, window_bounds = array<i64: 1, 16, 192>}, {transform_indices = @transform_1, window_bounds = array<i64: 1, 16, 192>}, {transform_indices = @transform_2, window_bounds = array<i64: 1, 16, 64>}]} {
    %c0_i32 = arith.constant 0 : i32
    %0 = arith.cmpi eq, %arg2, %c0_i32 : i32
    %1 = arith.extui %0 : i1 to i32
    %c0_i32_0 = arith.constant 0 : i32
    %2 = arith.cmpi ne, %1, %c0_i32_0 : i32
    scf.if %2 {
      %cst = arith.constant -1.000000e+30 : f32
      %12 = vector.broadcast %cst : f32 to vector<4x16x1xf32>
      %c0 = arith.constant 0 : index
      %c0_4 = arith.constant 0 : index
      %c0_5 = arith.constant 0 : index
      %13 = vector.load %arg6[%c0, %c0_4, %c0_5] : memref<4x16x1xf32, #tpu.memory_space<vmem>>, vector<4x16x1xf32>
      tpu.vector_store %arg6[%c0, %c0_4, %c0_5], %12 {strides = array<i32>} : memref<4x16x1xf32, #tpu.memory_space<vmem>>, vector<4x16x1xf32>,
      %cst_6 = arith.constant 0.000000e+00 : f32
      %14 = vector.broadcast %cst_6 : f32 to vector<4x16x1xf32>
      %c0_7 = arith.constant 0 : index
      %c0_8 = arith.constant 0 : index
      %c0_9 = arith.constant 0 : index
      %15 = vector.load %arg7[%c0_7, %c0_8, %c0_9] : memref<4x16x1xf32, #tpu.memory_space<vmem>>, vector<4x16x1xf32>
      tpu.vector_store %arg7[%c0_7, %c0_8, %c0_9], %14 {strides = array<i32>} : memref<4x16x1xf32, #tpu.memory_space<vmem>>, vector<4x16x1xf32>,
      %cst_10 = arith.constant 0.000000e+00 : f32
      %16 = vector.broadcast %cst_10 : f32 to vector<4x16x16xf32>
      %c0_11 = arith.constant 0 : index
      %c0_12 = arith.constant 0 : index
      %c0_13 = arith.constant 0 : index
      %17 = vector.load %arg8[%c0_11, %c0_12, %c0_13] : memref<4x16x16xf32, #tpu.memory_space<vmem>>, vector<4x16x16xf32>
      tpu.vector_store %arg8[%c0_11, %c0_12, %c0_13], %16 {strides = array<i32>} : memref<4x16x16xf32, #tpu.memory_space<vmem>>, vector<4x16x16xf32>,
    } else {
    }
    %c16_i32 = arith.constant 16 : i32
    %3 = arith.muli %arg1, %c16_i32 : i32
    %c16_i32_1 = arith.constant 16 : i32
    %4 = arith.muli %arg2, %c16_i32_1 : i32
    %c15_i32 = arith.constant 15 : i32
    %5 = arith.addi %3, %c15_i32 : i32
    %6 = arith.cmpi sle, %4, %5 : i32
    %7 = arith.extui %6 : i1 to i32
    %c0_i32_2 = arith.constant 0 : i32
    %8 = arith.cmpi ne, %7, %c0_i32_2 : i32
    scf.if %8 {
      %c0 = arith.constant 0 : index
      %c0_4 = arith.constant 0 : index
      %c0_5 = arith.constant 0 : index
      %12 = vector.load %arg3[%c0, %c0_4, %c0_5] : memref<1x16x192xbf16, #tpu.memory_space<vmem>>, vector<1x16x192xbf16>
      %13 = vector.shape_cast %12 : vector<1x16x192xbf16> to vector<16x192xbf16>
      %c0_6 = arith.constant 0 : index
      %c0_7 = arith.constant 0 : index
      %c0_8 = arith.constant 0 : index
      %14 = vector.load %arg4[%c0_6, %c0_7, %c0_8] : memref<1x16x192xbf16, #tpu.memory_space<vmem>>, vector<1x16x192xbf16>
      %15 = vector.shape_cast %14 : vector<1x16x192xbf16> to vector<16x192xbf16>
      %16 = tpu.iota {dimensions = array<i32: 0>} : vector<16x16xi32>
      %17 = vector.broadcast %3 : i32 to vector<16x16xi32>
      %18 = arith.addi %17, %16 : vector<16x16xi32>
      %19 = tpu.iota {dimensions = array<i32: 1>} : vector<16x16xi32>
      %20 = vector.broadcast %4 : i32 to vector<16x16xi32>
      %21 = arith.addi %20, %19 : vector<16x16xi32>
      %22 = arith.cmpi sle, %21, %18 : vector<16x16xi32>
      %23 = vector.extract_strided_slice %13 {offsets = [0, 0], sizes = [16, 16], strides = [1, 1]} : vector<16x192xbf16> to vector<16x16xbf16>
      %24 = vector.extract_strided_slice %15 {offsets = [0, 64], sizes = [16, 16], strides = [1, 1]} : vector<16x192xbf16> to vector<16x16xbf16>
      %25 = vector.extract_strided_slice %15 {offsets = [0, 128], sizes = [16, 16], strides = [1, 1]} : vector<16x192xbf16> to vector<16x16xbf16>
      %cst = arith.constant dense<0.000000e+00> : vector<16x16xf32>
      %26 = tpu.matmul %23, %24, %cst {dimension_numbers = #tpu.dot_dimension_numbers<[1], [1], [0], [0], [0, 0, 1, 0], [], []>} : vector<16x16xbf16>, vector<16x16xbf16>, vector<16x16xf32> -> vector<16x16xf32>
      %cst_9 = arith.constant 2.500000e-01 : f32
      %27 = vector.broadcast %cst_9 : f32 to vector<16x16xf32>
      %28 = arith.mulf %26, %27 : vector<16x16xf32>
      %cst_10 = arith.constant -1.000000e+30 : f32
      %29 = vector.broadcast %cst_10 : f32 to vector<16x16xf32>
      %30 = arith.select %22, %28, %29 : vector<16x16xi1>, vector<16x16xf32>
      %c0_11 = arith.constant 0 : index
      %c0_12 = arith.constant 0 : index
      %c0_13 = arith.constant 0 : index
      %31 = vector.load %arg6[%c0_11, %c0_12, %c0_13] : memref<4x16x1xf32, #tpu.memory_space<vmem>>, vector<1x16x1xf32>
      %32 = vector.shape_cast %31 : vector<1x16x1xf32> to vector<16x1xf32>
      %cst_14 = arith.constant dense<0xFF800000> : vector<16xf32>
      %33 = vector.multi_reduction <maximumf>, %30, %cst_14 [1] : vector<16x16xf32> to vector<16xf32>
      %34 = vector.shape_cast %33 : vector<16xf32> to vector<16x1xf32>
      %35 = arith.maximumf %32, %34 : vector<16x1xf32>
      %36 = arith.subf %32, %35 : vector<16x1xf32>
      %37 = math.exp %36 : vector<16x1xf32>
      %38 = vector.broadcast %35 : vector<16x1xf32> to vector<16x16xf32>
      %39 = arith.subf %30, %38 : vector<16x16xf32>
      %40 = math.exp %39 : vector<16x16xf32>
      %c0_15 = arith.constant 0 : index
      %c0_16 = arith.constant 0 : index
      %c0_17 = arith.constant 0 : index
      %41 = vector.load %arg7[%c0_15, %c0_16, %c0_17] : memref<4x16x1xf32, #tpu.memory_space<vmem>>, vector<1x16x1xf32>
      %42 = vector.shape_cast %41 : vector<1x16x1xf32> to vector<16x1xf32>
      %43 = arith.mulf %37, %42 : vector<16x1xf32>
      %cst_18 = arith.constant dense<0.000000e+00> : vector<16xf32>
      %44 = vector.multi_reduction <add>, %40, %cst_18 [1] : vector<16x16xf32> to vector<16xf32>
      %45 = vector.shape_cast %44 : vector<16xf32> to vector<16x1xf32>
      %46 = arith.addf %43, %45 : vector<16x1xf32>
      %c0_19 = arith.constant 0 : index
      %c0_20 = arith.constant 0 : index
      %c0_21 = arith.constant 0 : index
      %47 = vector.load %arg7[%c0_19, %c0_20, %c0_21] : memref<4x16x1xf32, #tpu.memory_space<vmem>>, vector<1x16x1xf32>
      %48 = vector.shape_cast %47 : vector<1x16x1xf32> to vector<16x1xf32>
      %49 = vector.shape_cast %46 : vector<16x1xf32> to vector<1x16x1xf32>
      tpu.vector_store %arg7[%c0_19, %c0_20, %c0_21], %49 {strides = array<i32>} : memref<4x16x1xf32, #tpu.memory_space<vmem>>, vector<1x16x1xf32>,
      %c0_22 = arith.constant 0 : index
      %c0_23 = arith.constant 0 : index
      %c0_24 = arith.constant 0 : index
      %50 = vector.load %arg8[%c0_22, %c0_23, %c0_24] : memref<4x16x16xf32, #tpu.memory_space<vmem>>, vector<1x16x16xf32>
      %51 = vector.shape_cast %50 : vector<1x16x16xf32> to vector<16x16xf32>
      %52 = vector.broadcast %37 : vector<16x1xf32> to vector<16x16xf32>
      %53 = arith.mulf %52, %51 : vector<16x16xf32>
      %54 = arith.truncf %40 : vector<16x16xf32> to vector<16x16xbf16>
      %cst_25 = arith.constant dense<0.000000e+00> : vector<16x16xf32>
      %55 = tpu.matmul %54, %25, %cst_25 {dimension_numbers = #tpu.dot_dimension_numbers<[1], [0], [0], [1], [0, 0, 1, 1], [], []>} : vector<16x16xbf16>, vector<16x16xbf16>, vector<16x16xf32> -> vector<16x16xf32>
      %56 = arith.addf %53, %55 : vector<16x16xf32>
      %c0_26 = arith.constant 0 : index
      %c0_27 = arith.constant 0 : index
      %c0_28 = arith.constant 0 : index
      %57 = vector.load %arg8[%c0_26, %c0_27, %c0_28] : memref<4x16x16xf32, #tpu.memory_space<vmem>>, vector<1x16x16xf32>
      %58 = vector.shape_cast %57 : vector<1x16x16xf32> to vector<16x16xf32>
      %59 = vector.shape_cast %56 : vector<16x16xf32> to vector<1x16x16xf32>
      tpu.vector_store %arg8[%c0_26, %c0_27, %c0_28], %59 {strides = array<i32>} : memref<4x16x16xf32, #tpu.memory_space<vmem>>, vector<1x16x16xf32>,
      %c0_29 = arith.constant 0 : index
      %c0_30 = arith.constant 0 : index
      %c0_31 = arith.constant 0 : index
      %60 = vector.load %arg6[%c0_29, %c0_30, %c0_31] : memref<4x16x1xf32, #tpu.memory_space<vmem>>, vector<1x16x1xf32>
      %61 = vector.shape_cast %60 : vector<1x16x1xf32> to vector<16x1xf32>
      %62 = vector.shape_cast %35 : vector<16x1xf32> to vector<1x16x1xf32>
      tpu.vector_store %arg6[%c0_29, %c0_30, %c0_31], %62 {strides = array<i32>} : memref<4x16x1xf32, #tpu.memory_space<vmem>>, vector<1x16x1xf32>,
      %63 = vector.extract_strided_slice %13 {offsets = [0, 16], sizes = [16, 16], strides = [1, 1]} : vector<16x192xbf16> to vector<16x16xbf16>
      %64 = vector.extract_strided_slice %15 {offsets = [0, 80], sizes = [16, 16], strides = [1, 1]} : vector<16x192xbf16> to vector<16x16xbf16>
      %65 = vector.extract_strided_slice %15 {offsets = [0, 144], sizes = [16, 16], strides = [1, 1]} : vector<16x192xbf16> to vector<16x16xbf16>
      %cst_32 = arith.constant dense<0.000000e+00> : vector<16x16xf32>
      %66 = tpu.matmul %63, %64, %cst_32 {dimension_numbers = #tpu.dot_dimension_numbers<[1], [1], [0], [0], [0, 0, 1, 0], [], []>} : vector<16x16xbf16>, vector<16x16xbf16>, vector<16x16xf32> -> vector<16x16xf32>
      %cst_33 = arith.constant 2.500000e-01 : f32
      %67 = vector.broadcast %cst_33 : f32 to vector<16x16xf32>
      %68 = arith.mulf %66, %67 : vector<16x16xf32>
      %cst_34 = arith.constant -1.000000e+30 : f32
      %69 = vector.broadcast %cst_34 : f32 to vector<16x16xf32>
      %70 = arith.select %22, %68, %69 : vector<16x16xi1>, vector<16x16xf32>
      %c1 = arith.constant 1 : index
      %c0_35 = arith.constant 0 : index
      %c0_36 = arith.constant 0 : index
      %71 = vector.load %arg6[%c1, %c0_35, %c0_36] : memref<4x16x1xf32, #tpu.memory_space<vmem>>, vector<1x16x1xf32>
      %72 = vector.shape_cast %71 : vector<1x16x1xf32> to vector<16x1xf32>
      %cst_37 = arith.constant dense<0xFF800000> : vector<16xf32>
      %73 = vector.multi_reduction <maximumf>, %70, %cst_37 [1] : vector<16x16xf32> to vector<16xf32>
      %74 = vector.shape_cast %73 : vector<16xf32> to vector<16x1xf32>
      %75 = arith.maximumf %72, %74 : vector<16x1xf32>
      %76 = arith.subf %72, %75 : vector<16x1xf32>
      %77 = math.exp %76 : vector<16x1xf32>
      %78 = vector.broadcast %75 : vector<16x1xf32> to vector<16x16xf32>
      %79 = arith.subf %70, %78 : vector<16x16xf32>
      %80 = math.exp %79 : vector<16x16xf32>
      %c1_38 = arith.constant 1 : index
      %c0_39 = arith.constant 0 : index
      %c0_40 = arith.constant 0 : index
      %81 = vector.load %arg7[%c1_38, %c0_39, %c0_40] : memref<4x16x1xf32, #tpu.memory_space<vmem>>, vector<1x16x1xf32>
      %82 = vector.shape_cast %81 : vector<1x16x1xf32> to vector<16x1xf32>
      %83 = arith.mulf %77, %82 : vector<16x1xf32>
      %cst_41 = arith.constant dense<0.000000e+00> : vector<16xf32>
      %84 = vector.multi_reduction <add>, %80, %cst_41 [1] : vector<16x16xf32> to vector<16xf32>
      %85 = vector.shape_cast %84 : vector<16xf32> to vector<16x1xf32>
      %86 = arith.addf %83, %85 : vector<16x1xf32>
      %c1_42 = arith.constant 1 : index
      %c0_43 = arith.constant 0 : index
      %c0_44 = arith.constant 0 : index
      %87 = vector.load %arg7[%c1_42, %c0_43, %c0_44] : memref<4x16x1xf32, #tpu.memory_space<vmem>>, vector<1x16x1xf32>
      %88 = vector.shape_cast %87 : vector<1x16x1xf32> to vector<16x1xf32>
      %89 = vector.shape_cast %86 : vector<16x1xf32> to vector<1x16x1xf32>
      tpu.vector_store %arg7[%c1_42, %c0_43, %c0_44], %89 {strides = array<i32>} : memref<4x16x1xf32, #tpu.memory_space<vmem>>, vector<1x16x1xf32>,
      %c1_45 = arith.constant 1 : index
      %c0_46 = arith.constant 0 : index
      %c0_47 = arith.constant 0 : index
      %90 = vector.load %arg8[%c1_45, %c0_46, %c0_47] : memref<4x16x16xf32, #tpu.memory_space<vmem>>, vector<1x16x16xf32>
      %91 = vector.shape_cast %90 : vector<1x16x16xf32> to vector<16x16xf32>
      %92 = vector.broadcast %77 : vector<16x1xf32> to vector<16x16xf32>
      %93 = arith.mulf %92, %91 : vector<16x16xf32>
      %94 = arith.truncf %80 : vector<16x16xf32> to vector<16x16xbf16>
      %cst_48 = arith.constant dense<0.000000e+00> : vector<16x16xf32>
      %95 = tpu.matmul %94, %65, %cst_48 {dimension_numbers = #tpu.dot_dimension_numbers<[1], [0], [0], [1], [0, 0, 1, 1], [], []>} : vector<16x16xbf16>, vector<16x16xbf16>, vector<16x16xf32> -> vector<16x16xf32>
      %96 = arith.addf %93, %95 : vector<16x16xf32>
      %c1_49 = arith.constant 1 : index
      %c0_50 = arith.constant 0 : index
      %c0_51 = arith.constant 0 : index
      %97 = vector.load %arg8[%c1_49, %c0_50, %c0_51] : memref<4x16x16xf32, #tpu.memory_space<vmem>>, vector<1x16x16xf32>
      %98 = vector.shape_cast %97 : vector<1x16x16xf32> to vector<16x16xf32>
      %99 = vector.shape_cast %96 : vector<16x16xf32> to vector<1x16x16xf32>
      tpu.vector_store %arg8[%c1_49, %c0_50, %c0_51], %99 {strides = array<i32>} : memref<4x16x16xf32, #tpu.memory_space<vmem>>, vector<1x16x16xf32>,
      %c1_52 = arith.constant 1 : index
      %c0_53 = arith.constant 0 : index
      %c0_54 = arith.constant 0 : index
      %100 = vector.load %arg6[%c1_52, %c0_53, %c0_54] : memref<4x16x1xf32, #tpu.memory_space<vmem>>, vector<1x16x1xf32>
      %101 = vector.shape_cast %100 : vector<1x16x1xf32> to vector<16x1xf32>
      %102 = vector.shape_cast %75 : vector<16x1xf32> to vector<1x16x1xf32>
      tpu.vector_store %arg6[%c1_52, %c0_53, %c0_54], %102 {strides = array<i32>} : memref<4x16x1xf32, #tpu.memory_space<vmem>>, vector<1x16x1xf32>,
      %103 = vector.extract_strided_slice %13 {offsets = [0, 32], sizes = [16, 16], strides = [1, 1]} : vector<16x192xbf16> to vector<16x16xbf16>
      %104 = vector.extract_strided_slice %15 {offsets = [0, 96], sizes = [16, 16], strides = [1, 1]} : vector<16x192xbf16> to vector<16x16xbf16>
      %105 = vector.extract_strided_slice %15 {offsets = [0, 160], sizes = [16, 16], strides = [1, 1]} : vector<16x192xbf16> to vector<16x16xbf16>
      %cst_55 = arith.constant dense<0.000000e+00> : vector<16x16xf32>
      %106 = tpu.matmul %103, %104, %cst_55 {dimension_numbers = #tpu.dot_dimension_numbers<[1], [1], [0], [0], [0, 0, 1, 0], [], []>} : vector<16x16xbf16>, vector<16x16xbf16>, vector<16x16xf32> -> vector<16x16xf32>
      %cst_56 = arith.constant 2.500000e-01 : f32
      %107 = vector.broadcast %cst_56 : f32 to vector<16x16xf32>
      %108 = arith.mulf %106, %107 : vector<16x16xf32>
      %cst_57 = arith.constant -1.000000e+30 : f32
      %109 = vector.broadcast %cst_57 : f32 to vector<16x16xf32>
      %110 = arith.select %22, %108, %109 : vector<16x16xi1>, vector<16x16xf32>
      %c2 = arith.constant 2 : index
      %c0_58 = arith.constant 0 : index
      %c0_59 = arith.constant 0 : index
      %111 = vector.load %arg6[%c2, %c0_58, %c0_59] : memref<4x16x1xf32, #tpu.memory_space<vmem>>, vector<1x16x1xf32>
      %112 = vector.shape_cast %111 : vector<1x16x1xf32> to vector<16x1xf32>
      %cst_60 = arith.constant dense<0xFF800000> : vector<16xf32>
      %113 = vector.multi_reduction <maximumf>, %110, %cst_60 [1] : vector<16x16xf32> to vector<16xf32>
      %114 = vector.shape_cast %113 : vector<16xf32> to vector<16x1xf32>
      %115 = arith.maximumf %112, %114 : vector<16x1xf32>
      %116 = arith.subf %112, %115 : vector<16x1xf32>
      %117 = math.exp %116 : vector<16x1xf32>
      %118 = vector.broadcast %115 : vector<16x1xf32> to vector<16x16xf32>
      %119 = arith.subf %110, %118 : vector<16x16xf32>
      %120 = math.exp %119 : vector<16x16xf32>
      %c2_61 = arith.constant 2 : index
      %c0_62 = arith.constant 0 : index
      %c0_63 = arith.constant 0 : index
      %121 = vector.load %arg7[%c2_61, %c0_62, %c0_63] : memref<4x16x1xf32, #tpu.memory_space<vmem>>, vector<1x16x1xf32>
      %122 = vector.shape_cast %121 : vector<1x16x1xf32> to vector<16x1xf32>
      %123 = arith.mulf %117, %122 : vector<16x1xf32>
      %cst_64 = arith.constant dense<0.000000e+00> : vector<16xf32>
      %124 = vector.multi_reduction <add>, %120, %cst_64 [1] : vector<16x16xf32> to vector<16xf32>
      %125 = vector.shape_cast %124 : vector<16xf32> to vector<16x1xf32>
      %126 = arith.addf %123, %125 : vector<16x1xf32>
      %c2_65 = arith.constant 2 : index
      %c0_66 = arith.constant 0 : index
      %c0_67 = arith.constant 0 : index
      %127 = vector.load %arg7[%c2_65, %c0_66, %c0_67] : memref<4x16x1xf32, #tpu.memory_space<vmem>>, vector<1x16x1xf32>
      %128 = vector.shape_cast %127 : vector<1x16x1xf32> to vector<16x1xf32>
      %129 = vector.shape_cast %126 : vector<16x1xf32> to vector<1x16x1xf32>
      tpu.vector_store %arg7[%c2_65, %c0_66, %c0_67], %129 {strides = array<i32>} : memref<4x16x1xf32, #tpu.memory_space<vmem>>, vector<1x16x1xf32>,
      %c2_68 = arith.constant 2 : index
      %c0_69 = arith.constant 0 : index
      %c0_70 = arith.constant 0 : index
      %130 = vector.load %arg8[%c2_68, %c0_69, %c0_70] : memref<4x16x16xf32, #tpu.memory_space<vmem>>, vector<1x16x16xf32>
      %131 = vector.shape_cast %130 : vector<1x16x16xf32> to vector<16x16xf32>
      %132 = vector.broadcast %117 : vector<16x1xf32> to vector<16x16xf32>
      %133 = arith.mulf %132, %131 : vector<16x16xf32>
      %134 = arith.truncf %120 : vector<16x16xf32> to vector<16x16xbf16>
      %cst_71 = arith.constant dense<0.000000e+00> : vector<16x16xf32>
      %135 = tpu.matmul %134, %105, %cst_71 {dimension_numbers = #tpu.dot_dimension_numbers<[1], [0], [0], [1], [0, 0, 1, 1], [], []>} : vector<16x16xbf16>, vector<16x16xbf16>, vector<16x16xf32> -> vector<16x16xf32>
      %136 = arith.addf %133, %135 : vector<16x16xf32>
      %c2_72 = arith.constant 2 : index
      %c0_73 = arith.constant 0 : index
      %c0_74 = arith.constant 0 : index
      %137 = vector.load %arg8[%c2_72, %c0_73, %c0_74] : memref<4x16x16xf32, #tpu.memory_space<vmem>>, vector<1x16x16xf32>
      %138 = vector.shape_cast %137 : vector<1x16x16xf32> to vector<16x16xf32>
      %139 = vector.shape_cast %136 : vector<16x16xf32> to vector<1x16x16xf32>
      tpu.vector_store %arg8[%c2_72, %c0_73, %c0_74], %139 {strides = array<i32>} : memref<4x16x16xf32, #tpu.memory_space<vmem>>, vector<1x16x16xf32>,
      %c2_75 = arith.constant 2 : index
      %c0_76 = arith.constant 0 : index
      %c0_77 = arith.constant 0 : index
      %140 = vector.load %arg6[%c2_75, %c0_76, %c0_77] : memref<4x16x1xf32, #tpu.memory_space<vmem>>, vector<1x16x1xf32>
      %141 = vector.shape_cast %140 : vector<1x16x1xf32> to vector<16x1xf32>
      %142 = vector.shape_cast %115 : vector<16x1xf32> to vector<1x16x1xf32>
      tpu.vector_store %arg6[%c2_75, %c0_76, %c0_77], %142 {strides = array<i32>} : memref<4x16x1xf32, #tpu.memory_space<vmem>>, vector<1x16x1xf32>,
      %143 = vector.extract_strided_slice %13 {offsets = [0, 48], sizes = [16, 16], strides = [1, 1]} : vector<16x192xbf16> to vector<16x16xbf16>
      %144 = vector.extract_strided_slice %15 {offsets = [0, 112], sizes = [16, 16], strides = [1, 1]} : vector<16x192xbf16> to vector<16x16xbf16>
      %145 = vector.extract_strided_slice %15 {offsets = [0, 176], sizes = [16, 16], strides = [1, 1]} : vector<16x192xbf16> to vector<16x16xbf16>
      %cst_78 = arith.constant dense<0.000000e+00> : vector<16x16xf32>
      %146 = tpu.matmul %143, %144, %cst_78 {dimension_numbers = #tpu.dot_dimension_numbers<[1], [1], [0], [0], [0, 0, 1, 0], [], []>} : vector<16x16xbf16>, vector<16x16xbf16>, vector<16x16xf32> -> vector<16x16xf32>
      %cst_79 = arith.constant 2.500000e-01 : f32
      %147 = vector.broadcast %cst_79 : f32 to vector<16x16xf32>
      %148 = arith.mulf %146, %147 : vector<16x16xf32>
      %cst_80 = arith.constant -1.000000e+30 : f32
      %149 = vector.broadcast %cst_80 : f32 to vector<16x16xf32>
      %150 = arith.select %22, %148, %149 : vector<16x16xi1>, vector<16x16xf32>
      %c3 = arith.constant 3 : index
      %c0_81 = arith.constant 0 : index
      %c0_82 = arith.constant 0 : index
      %151 = vector.load %arg6[%c3, %c0_81, %c0_82] : memref<4x16x1xf32, #tpu.memory_space<vmem>>, vector<1x16x1xf32>
      %152 = vector.shape_cast %151 : vector<1x16x1xf32> to vector<16x1xf32>
      %cst_83 = arith.constant dense<0xFF800000> : vector<16xf32>
      %153 = vector.multi_reduction <maximumf>, %150, %cst_83 [1] : vector<16x16xf32> to vector<16xf32>
      %154 = vector.shape_cast %153 : vector<16xf32> to vector<16x1xf32>
      %155 = arith.maximumf %152, %154 : vector<16x1xf32>
      %156 = arith.subf %152, %155 : vector<16x1xf32>
      %157 = math.exp %156 : vector<16x1xf32>
      %158 = vector.broadcast %155 : vector<16x1xf32> to vector<16x16xf32>
      %159 = arith.subf %150, %158 : vector<16x16xf32>
      %160 = math.exp %159 : vector<16x16xf32>
      %c3_84 = arith.constant 3 : index
      %c0_85 = arith.constant 0 : index
      %c0_86 = arith.constant 0 : index
      %161 = vector.load %arg7[%c3_84, %c0_85, %c0_86] : memref<4x16x1xf32, #tpu.memory_space<vmem>>, vector<1x16x1xf32>
      %162 = vector.shape_cast %161 : vector<1x16x1xf32> to vector<16x1xf32>
      %163 = arith.mulf %157, %162 : vector<16x1xf32>
      %cst_87 = arith.constant dense<0.000000e+00> : vector<16xf32>
      %164 = vector.multi_reduction <add>, %160, %cst_87 [1] : vector<16x16xf32> to vector<16xf32>
      %165 = vector.shape_cast %164 : vector<16xf32> to vector<16x1xf32>
      %166 = arith.addf %163, %165 : vector<16x1xf32>
      %c3_88 = arith.constant 3 : index
      %c0_89 = arith.constant 0 : index
      %c0_90 = arith.constant 0 : index
      %167 = vector.load %arg7[%c3_88, %c0_89, %c0_90] : memref<4x16x1xf32, #tpu.memory_space<vmem>>, vector<1x16x1xf32>
      %168 = vector.shape_cast %167 : vector<1x16x1xf32> to vector<16x1xf32>
      %169 = vector.shape_cast %166 : vector<16x1xf32> to vector<1x16x1xf32>
      tpu.vector_store %arg7[%c3_88, %c0_89, %c0_90], %169 {strides = array<i32>} : memref<4x16x1xf32, #tpu.memory_space<vmem>>, vector<1x16x1xf32>,
      %c3_91 = arith.constant 3 : index
      %c0_92 = arith.constant 0 : index
      %c0_93 = arith.constant 0 : index
      %170 = vector.load %arg8[%c3_91, %c0_92, %c0_93] : memref<4x16x16xf32, #tpu.memory_space<vmem>>, vector<1x16x16xf32>
      %171 = vector.shape_cast %170 : vector<1x16x16xf32> to vector<16x16xf32>
      %172 = vector.broadcast %157 : vector<16x1xf32> to vector<16x16xf32>
      %173 = arith.mulf %172, %171 : vector<16x16xf32>
      %174 = arith.truncf %160 : vector<16x16xf32> to vector<16x16xbf16>
      %cst_94 = arith.constant dense<0.000000e+00> : vector<16x16xf32>
      %175 = tpu.matmul %174, %145, %cst_94 {dimension_numbers = #tpu.dot_dimension_numbers<[1], [0], [0], [1], [0, 0, 1, 1], [], []>} : vector<16x16xbf16>, vector<16x16xbf16>, vector<16x16xf32> -> vector<16x16xf32>
      %176 = arith.addf %173, %175 : vector<16x16xf32>
      %c3_95 = arith.constant 3 : index
      %c0_96 = arith.constant 0 : index
      %c0_97 = arith.constant 0 : index
      %177 = vector.load %arg8[%c3_95, %c0_96, %c0_97] : memref<4x16x16xf32, #tpu.memory_space<vmem>>, vector<1x16x16xf32>
      %178 = vector.shape_cast %177 : vector<1x16x16xf32> to vector<16x16xf32>
      %179 = vector.shape_cast %176 : vector<16x16xf32> to vector<1x16x16xf32>
      tpu.vector_store %arg8[%c3_95, %c0_96, %c0_97], %179 {strides = array<i32>} : memref<4x16x16xf32, #tpu.memory_space<vmem>>, vector<1x16x16xf32>,
      %c3_98 = arith.constant 3 : index
      %c0_99 = arith.constant 0 : index
      %c0_100 = arith.constant 0 : index
      %180 = vector.load %arg6[%c3_98, %c0_99, %c0_100] : memref<4x16x1xf32, #tpu.memory_space<vmem>>, vector<1x16x1xf32>
      %181 = vector.shape_cast %180 : vector<1x16x1xf32> to vector<16x1xf32>
      %182 = vector.shape_cast %155 : vector<16x1xf32> to vector<1x16x1xf32>
      tpu.vector_store %arg6[%c3_98, %c0_99, %c0_100], %182 {strides = array<i32>} : memref<4x16x1xf32, #tpu.memory_space<vmem>>, vector<1x16x1xf32>,
    } else {
    }
    %c1_i32 = arith.constant 1 : i32
    %9 = arith.cmpi eq, %arg2, %c1_i32 : i32
    %10 = arith.extui %9 : i1 to i32
    %c0_i32_3 = arith.constant 0 : i32
    %11 = arith.cmpi ne, %10, %c0_i32_3 : i32
    scf.if %11 {
      %c0 = arith.constant 0 : index
      %c0_4 = arith.constant 0 : index
      %c0_5 = arith.constant 0 : index
      %12 = vector.load %arg8[%c0, %c0_4, %c0_5] : memref<4x16x16xf32, #tpu.memory_space<vmem>>, vector<1x16x16xf32>
      %13 = vector.shape_cast %12 : vector<1x16x16xf32> to vector<16x16xf32>
      %c0_6 = arith.constant 0 : index
      %c0_7 = arith.constant 0 : index
      %c0_8 = arith.constant 0 : index
      %14 = vector.load %arg7[%c0_6, %c0_7, %c0_8] : memref<4x16x1xf32, #tpu.memory_space<vmem>>, vector<1x16x1xf32>
      %15 = vector.shape_cast %14 : vector<1x16x1xf32> to vector<16x1xf32>
      %16 = tpu.reciprocal %15 {approx = true} : vector<16x1xf32> -> vector<16x1xf32>
      %17 = vector.broadcast %16 : vector<16x1xf32> to vector<16x16xf32>
      %18 = arith.mulf %13, %17 : vector<16x16xf32>
      %c1 = arith.constant 1 : index
      %c0_9 = arith.constant 0 : index
      %c0_10 = arith.constant 0 : index
      %19 = vector.load %arg8[%c1, %c0_9, %c0_10] : memref<4x16x16xf32, #tpu.memory_space<vmem>>, vector<1x16x16xf32>
      %20 = vector.shape_cast %19 : vector<1x16x16xf32> to vector<16x16xf32>
      %c1_11 = arith.constant 1 : index
      %c0_12 = arith.constant 0 : index
      %c0_13 = arith.constant 0 : index
      %21 = vector.load %arg7[%c1_11, %c0_12, %c0_13] : memref<4x16x1xf32, #tpu.memory_space<vmem>>, vector<1x16x1xf32>
      %22 = vector.shape_cast %21 : vector<1x16x1xf32> to vector<16x1xf32>
      %23 = tpu.reciprocal %22 {approx = true} : vector<16x1xf32> -> vector<16x1xf32>
      %24 = vector.broadcast %23 : vector<16x1xf32> to vector<16x16xf32>
      %25 = arith.mulf %20, %24 : vector<16x16xf32>
      %c2 = arith.constant 2 : index
      %c0_14 = arith.constant 0 : index
      %c0_15 = arith.constant 0 : index
      %26 = vector.load %arg8[%c2, %c0_14, %c0_15] : memref<4x16x16xf32, #tpu.memory_space<vmem>>, vector<1x16x16xf32>
      %27 = vector.shape_cast %26 : vector<1x16x16xf32> to vector<16x16xf32>
      %c2_16 = arith.constant 2 : index
      %c0_17 = arith.constant 0 : index
      %c0_18 = arith.constant 0 : index
      %28 = vector.load %arg7[%c2_16, %c0_17, %c0_18] : memref<4x16x1xf32, #tpu.memory_space<vmem>>, vector<1x16x1xf32>
      %29 = vector.shape_cast %28 : vector<1x16x1xf32> to vector<16x1xf32>
      %30 = tpu.reciprocal %29 {approx = true} : vector<16x1xf32> -> vector<16x1xf32>
      %31 = vector.broadcast %30 : vector<16x1xf32> to vector<16x16xf32>
      %32 = arith.mulf %27, %31 : vector<16x16xf32>
      %c3 = arith.constant 3 : index
      %c0_19 = arith.constant 0 : index
      %c0_20 = arith.constant 0 : index
      %33 = vector.load %arg8[%c3, %c0_19, %c0_20] : memref<4x16x16xf32, #tpu.memory_space<vmem>>, vector<1x16x16xf32>
      %34 = vector.shape_cast %33 : vector<1x16x16xf32> to vector<16x16xf32>
      %c3_21 = arith.constant 3 : index
      %c0_22 = arith.constant 0 : index
      %c0_23 = arith.constant 0 : index
      %35 = vector.load %arg7[%c3_21, %c0_22, %c0_23] : memref<4x16x1xf32, #tpu.memory_space<vmem>>, vector<1x16x1xf32>
      %36 = vector.shape_cast %35 : vector<1x16x1xf32> to vector<16x1xf32>
      %37 = tpu.reciprocal %36 {approx = true} : vector<16x1xf32> -> vector<16x1xf32>
      %38 = vector.broadcast %37 : vector<16x1xf32> to vector<16x16xf32>
      %39 = arith.mulf %34, %38 : vector<16x16xf32>
      %40 = tpu.concatenate %18, %25, %32, %39 in 1 : vector<16x16xf32>, vector<16x16xf32>, vector<16x16xf32>, vector<16x16xf32> -> vector<16x64xf32>
      %41 = arith.truncf %40 : vector<16x64xf32> to vector<16x64xbf16>
      %c0_24 = arith.constant 0 : index
      %c0_25 = arith.constant 0 : index
      %c0_26 = arith.constant 0 : index
      %42 = vector.load %arg5[%c0_24, %c0_25, %c0_26] : memref<1x16x64xbf16, #tpu.memory_space<vmem>>, vector<1x16x64xbf16>
      %43 = vector.shape_cast %42 : vector<1x16x64xbf16> to vector<16x64xbf16>
      %44 = vector.shape_cast %41 : vector<16x64xbf16> to vector<1x16x64xbf16>
      tpu.vector_store %arg5[%c0_24, %c0_25, %c0_26], %44 {strides = array<i32>} : memref<1x16x64xbf16, #tpu.memory_space<vmem>>, vector<1x16x64xbf16>,
    } else {
    }
    return
  }
  func.func @transform_0(%arg0: i32, %arg1: i32, %arg2: i32) -> (i32, i32, i32) {
    %c0_i32 = arith.constant 0 : i32
    %c0_i32_0 = arith.constant 0 : i32
    return %arg0, %arg1, %c0_i32 : i32, i32, i32
  }
  func.func @transform_1(%arg0: i32, %arg1: i32, %arg2: i32) -> (i32, i32, i32) {
    %c0_i32 = arith.constant 0 : i32
    %c0_i32_0 = arith.constant 0 : i32
    return %arg0, %arg2, %c0_i32 : i32, i32, i32
  }
  func.func @transform_2(%arg0: i32, %arg1: i32, %arg2: i32) -> (i32, i32, i32) {
    %c0_i32 = arith.constant 0 : i32
    %c0_i32_0 = arith.constant 0 : i32
    return %arg0, %arg1, %c0_i32 : i32, i32, i32
  }
}

module attributes {stable_mosaic.version = 11 : i64} {
  func.func @logits_kernel(%arg0: i32, %arg1: memref<2x64xf32, #tpu.memory_space<vmem>>, %arg2: memref<128x64xbf16, #tpu.memory_space<vmem>>, %arg3: memref<2x128xf32, #tpu.memory_space<vmem>>) attributes {dimension_semantics = [#tpu.dimension_semantics<parallel>], iteration_bounds = array<i64: 2>, scalar_prefetch = 0 : i64, scratch_operands = 0 : i64, tpu.core_type = #tpu.core_type<tc>, window_params = [{pipeline_mode = #tpu.pipeline_mode<synchronous>, transform_indices = @transform_0, window_bounds = array<i64: 2, 64>}, {transform_indices = @transform_1, window_bounds = array<i64: 128, 64>}, {transform_indices = @transform_2, window_bounds = array<i64: 2, 128>}]} {
    %c0 = arith.constant 0 : index
    %c0_0 = arith.constant 0 : index
    %0 = vector.load %arg1[%c0, %c0_0] : memref<2x64xf32, #tpu.memory_space<vmem>>, vector<2x64xf32>
    %1 = arith.truncf %0 : vector<2x64xf32> to vector<2x64xbf16>
    %c0_1 = arith.constant 0 : index
    %c0_2 = arith.constant 0 : index
    %2 = vector.load %arg2[%c0_1, %c0_2] : memref<128x64xbf16, #tpu.memory_space<vmem>>, vector<128x64xbf16>
    %cst = arith.constant dense<0.000000e+00> : vector<2x128xf32>
    %3 = tpu.matmul %1, %2, %cst {dimension_numbers = #tpu.dot_dimension_numbers<[1], [1], [0], [0], [0, 0, 1, 0], [], []>} : vector<2x64xbf16>, vector<128x64xbf16>, vector<2x128xf32> -> vector<2x128xf32>
    %c0_3 = arith.constant 0 : index
    %c0_4 = arith.constant 0 : index
    %4 = vector.load %arg3[%c0_3, %c0_4] : memref<2x128xf32, #tpu.memory_space<vmem>>, vector<2x128xf32>
    tpu.vector_store %arg3[%c0_3, %c0_4], %3 {strides = array<i32>} : memref<2x128xf32, #tpu.memory_space<vmem>>, vector<2x128xf32>,
    return
  }
  func.func @transform_0(%arg0: i32) -> (i32, i32) {
    %c0_i32 = arith.constant 0 : i32
    %c0_i32_0 = arith.constant 0 : i32
    %c0_i32_1 = arith.constant 0 : i32
    return %c0_i32, %c0_i32_0 : i32, i32
  }
  func.func @transform_1(%arg0: i32) -> (i32, i32) {
    %c0_i32 = arith.constant 0 : i32
    %c0_i32_0 = arith.constant 0 : i32
    return %arg0, %c0_i32 : i32, i32
  }
  func.func @transform_2(%arg0: i32) -> (i32, i32) {
    %c0_i32 = arith.constant 0 : i32
    %c0_i32_0 = arith.constant 0 : i32
    return %c0_i32, %arg0 : i32, i32
  }
}

</mosaic_0001>

<llo_original>
// kernel: gpt2_forward.7
$region0: #{gpt2_forward.7}
  #allocation0 [shape = 'u32[]', space=smem, size = 0x4, offset = 0x4, fixed_abs, tag = 'smem constant byte address 0x4 - core index']
  #allocation1 [shape = 'u32[144,128]{1,0:T(1,128)}', space=vmem, size = 0x12000, scoped, tag = 'internal scratch']
  %s0 = inlined_call_operand.vmem [shape: f32[64,64], index: 0, kind: input, shape index: {}]
  %s1 = inlined_call_operand.vmem [shape: f32[1,64], index: 1, kind: input, shape index: {}]
  %s2 = inlined_call_operand.vmem [shape: f32[1,64], index: 2, kind: input, shape index: {}]
  %s3 = inlined_call_operand.vmem [shape: bf16[64,192], index: 3, kind: input, shape index: {}]
  %s4 = inlined_call_operand.vmem [shape: f32[1,192], index: 4, kind: input, shape index: {}]
  %s5 = inlined_call_operand.vmem [shape: bf16[64,192], index: 5, kind: output, shape index: {}]
  %s6 = sld [smem:[#allocation0]]
  $region53: #{gpt2_forward.7} parent=0
    _
  %s8 = ssub.s32 1, %s6
  %s9 = scalar_select 0, %s8, %s6
  loop: start=0, step=1, limit=4
  $region2: #{gpt2_forward.7} parent=0 // loop_pre_header
    _
  $region3: #{gpt2_forward.7} parent=0 // loop_header
    %s11 = sphi 0, %s15
    %p12 = scmp.ge.s32.totalorder %s11, 4
    %s21 = sphi 0, %s23
    %s24 = sphi 0, %s21
    %s25 = sphi 0, %s24
    %s41 = sphi 0, %s25
    %s45 = sphi 0, %s45
    %s47 = sphi 0, %s45
    %s48 = sphi 0, %s47
    %s62 = sphi 0, %s48
    %s66 = sphi 0, %s66
    %s68 = sphi 0, %s66
    %s69 = sphi 0, %s68
    %s83 = sphi 0, %s69
    %s87 = sphi 0, %s87
    %s89 = sphi 0, %s87
    %s90 = sphi 0, %s89
    %s104 = sphi 0, %s90
    %s108 = sphi 0, %s108
    %s110 = sphi 0, %s108
    %s111 = sphi 0, %s110
    %s125 = sphi 0, %s111
    %s131 = sphi 0, %s133
    %s134 = sphi 0, %s131
    %s135 = sphi 0, %s134
    %s151 = sphi 0, %s135
  $region4: #{gpt2_forward.7} parent=0 // loop_header_branch
    %14 = sbr.rel (%p12) target = $region8
  $region5: #{gpt2_forward.7} parent=0 // loop_body
    %s16 = ssub.s32 %s11, 1
    %s17 = ssub.s32 %s11, 2
    %s18 = sadd.s32 %s11, 1
    %s19 = ssub.s32 %s11, %s18
    %p20 = scmp.eq.s32.totalorder %s19, 0
    %s22 = sadd.s32 %s21, 1
    %s23 = scalar_select %p20, %s21, %s22
    %p26 = pneg %p20
    %p27 = scmp.eq.s32.totalorder %s11, 1
    %p28 = por %p26, %p27
    %p29 = scmp.ne.s32.totalorder %s21, %s24
    %p30 = scmp.eq.s32.totalorder %s11, 0
    %p31 = por %p29, %p30
    %p32 = scmp.ne.s32.totalorder %s21, %s24
    %p33 = scmp.eq.s32.totalorder %s16, 1
    %p34 = por %p32, %p33
    %p35 = scmp.ne.s32.totalorder %s24, %s25
    %p36 = scmp.eq.s32.totalorder %s16, 0
    %p37 = por %p35, %p36
    %p38 = scmp.ne.s32.totalorder %s24, %s25
    %p39 = scmp.eq.s32.totalorder %s17, 1
    %p40 = por %p38, %p39
    %p42 = scmp.ne.s32.totalorder %s25, %s41
    %p43 = scmp.eq.s32.totalorder %s17, 0
    %p44 = por %p42, %p43
    %s46 = sadd.s32 %s45, 1
    %p49 = scmp.eq.s32.totalorder %s11, 1
    %p50 = scmp.ne.s32.totalorder %s45, %s47
    %p51 = scmp.eq.s32.totalorder %s11, 0
    %p52 = por %p50, %p51
    %p53 = scmp.ne.s32.totalorder %s45, %s47
    %p54 = scmp.eq.s32.totalorder %s16, 1
    %p55 = por %p53, %p54
    %p56 = scmp.ne.s32.totalorder %s47, %s48
    %p57 = scmp.eq.s32.totalorder %s16, 0
    %p58 = por %p56, %p57
    %p59 = scmp.ne.s32.totalorder %s47, %s48
    %p60 = scmp.eq.s32.totalorder %s17, 1
    %p61 = por %p59, %p60
    %p63 = scmp.ne.s32.totalorder %s48, %s62
    %p64 = scmp.eq.s32.totalorder %s17, 0
    %p65 = por %p63, %p64
    %s67 = sadd.s32 %s66, 1
    %p70 = scmp.eq.s32.totalorder %s11, 1
    %p71 = scmp.ne.s32.totalorder %s66, %s68
    %p72 = scmp.eq.s32.totalorder %s11, 0
    %p73 = por %p71, %p72
    %p74 = scmp.ne.s32.totalorder %s66, %s68
    %p75 = scmp.eq.s32.totalorder %s16, 1
    %p76 = por %p74, %p75
    %p77 = scmp.ne.s32.totalorder %s68, %s69
    %p78 = scmp.eq.s32.totalorder %s16, 0
    %p79 = por %p77, %p78
    %p80 = scmp.ne.s32.totalorder %s68, %s69
    %p81 = scmp.eq.s32.totalorder %s17, 1
    %p82 = por %p80, %p81
    %p84 = scmp.ne.s32.totalorder %s69, %s83
    %p85 = scmp.eq.s32.totalorder %s17, 0
    %p86 = por %p84, %p85
    %s88 = sadd.s32 %s87, 1
    %p91 = scmp.eq.s32.totalorder %s11, 1
    %p92 = scmp.ne.s32.totalorder %s87, %s89
    %p93 = scmp.eq.s32.totalorder %s11, 0
    %p94 = por %p92, %p93
    %p95 = scmp.ne.s32.totalorder %s87, %s89
    %p96 = scmp.eq.s32.totalorder %s16, 1
    %p97 = por %p95, %p96
    %p98 = scmp.ne.s32.totalorder %s89, %s90
    %p99 = scmp.eq.s32.totalorder %s16, 0
    %p100 = por %p98, %p99
    %p101 = scmp.ne.s32.totalorder %s89, %s90
    %p102 = scmp.eq.s32.totalorder %s17, 1
    %p103 = por %p101, %p102
    %p105 = scmp.ne.s32.totalorder %s90, %s104
    %p106 = scmp.eq.s32.totalorder %s17, 0
    %p107 = por %p105, %p106
    %s109 = sadd.s32 %s108, 1
    %p112 = scmp.eq.s32.totalorder %s11, 1
    %p113 = scmp.ne.s32.totalorder %s108, %s110
    %p114 = scmp.eq.s32.totalorder %s11, 0
    %p115 = por %p113, %p114
    %p116 = scmp.ne.s32.totalorder %s108, %s110
    %p117 = scmp.eq.s32.totalorder %s16, 1
    %p118 = por %p116, %p117
    %p119 = scmp.ne.s32.totalorder %s110, %s111
    %p120 = scmp.eq.s32.totalorder %s16, 0
    %p121 = por %p119, %p120
    %p122 = scmp.ne.s32.totalorder %s110, %s111
    %p123 = scmp.eq.s32.totalorder %s17, 1
    %p124 = por %p122, %p123
    %p126 = scmp.ne.s32.totalorder %s111, %s125
    %p127 = scmp.eq.s32.totalorder %s17, 0
    %p128 = por %p126, %p127
    %s129 = ssub.s32 %s11, %s18
    %p130 = scmp.eq.s32.totalorder %s129, 0
    %s132 = sadd.s32 %s131, 1
    %s133 = scalar_select %p130, %s131, %s132
    %p136 = pneg %p130
    %p137 = scmp.eq.s32.totalorder %s11, 1
    %p138 = por %p136, %p137
    %p139 = scmp.ne.s32.totalorder %s131, %s134
    %p140 = scmp.eq.s32.totalorder %s11, 0
    %p141 = por %p139, %p140
    %p142 = scmp.ne.s32.totalorder %s131, %s134
    %p143 = scmp.eq.s32.totalorder %s16, 1
    %p144 = por %p142, %p143
    %p145 = scmp.ne.s32.totalorder %s134, %s135
    %p146 = scmp.eq.s32.totalorder %s16, 0
    %p147 = por %p145, %p146
    %p148 = scmp.ne.s32.totalorder %s134, %s135
    %p149 = scmp.eq.s32.totalorder %s17, 1
    %p150 = por %p148, %p149
    %p152 = scmp.ne.s32.totalorder %s135, %s151
    %p153 = scmp.eq.s32.totalorder %s17, 0
    %p154 = por %p152, %p153
    %p155 = scmp.le.s32.totalorder 1, %s11
    %p156 = scmp.lt.s32.totalorder %s11, 3
    %p157 = pnand %p155, %p156
    %p158 = pneg %p157
    // Predicated region
    $region9: #{gpt2_forward.7} parent=5 // pred_check
      _
    $region10: #{gpt2_forward.7} parent=5 // pred_check_branch
      %160 = sbr.rel (%p157) target = $region12
    $region11: #{gpt2_forward.7} parent=5 // pred_region
      %s161 = ssub.s32 %s11, 1
      // Predicated region
      $region13: #{gpt2_forward.7} parent=11 // pred_check
        %p162 = pneg %p58
      $region14: #{gpt2_forward.7} parent=11 // pred_check_branch
        %164 = sbr.rel (%p162) target = $region16
      $region15: #{gpt2_forward.7} parent=11 // pred_region
        _
      $region16: #{gpt2_forward.7} parent=11 // pred_fallthru
        _
      // Predicated region
      $region17: #{gpt2_forward.7} parent=11 // pred_check
        %p165 = pneg %p79
      $region18: #{gpt2_forward.7} parent=11 // pred_check_branch
        %167 = sbr.rel (%p165) target = $region20
      $region19: #{gpt2_forward.7} parent=11 // pred_region
        _
      $region20: #{gpt2_forward.7} parent=11 // pred_fallthru
        _
      // Predicated region
      $region21: #{gpt2_forward.7} parent=11 // pred_check
        %p168 = pneg %p100
      $region22: #{gpt2_forward.7} parent=11 // pred_check_branch
        %170 = sbr.rel (%p168) target = $region24
      $region23: #{gpt2_forward.7} parent=11 // pred_region
        _
      $region24: #{gpt2_forward.7} parent=11 // pred_fallthru
        _
      // Predicated region
      $region25: #{gpt2_forward.7} parent=11 // pred_check
        %p171 = pneg %p121
      $region26: #{gpt2_forward.7} parent=11 // pred_check_branch
        %173 = sbr.rel (%p171) target = $region28
      $region27: #{gpt2_forward.7} parent=11 // pred_region
        _
      $region28: #{gpt2_forward.7} parent=11 // pred_fallthru
        _
    $region12: #{gpt2_forward.7} parent=5 // pred_fallthru
      _
    %p174 = scmp.lt.s32.totalorder %s11, 2
    // Predicated region
    $region29: #{gpt2_forward.7} parent=5 // pred_check
      %p175 = pneg %p174
    $region30: #{gpt2_forward.7} parent=5 // pred_check_branch
      %177 = sbr.rel (%p175) target = $region32
    $region31: #{gpt2_forward.7} parent=5 // pred_region
      // Predicated region
      $region33: #{gpt2_forward.7} parent=31 // pred_check
        %p178 = pneg %p31
      $region34: #{gpt2_forward.7} parent=31 // pred_check_branch
        %180 = sbr.rel (%p178) target = $region36
      $region35: #{gpt2_forward.7} parent=31 // pred_region
        %s181 = smul.u32 4, %s11
        %p182 = scmp.lt.s32.totalorder %s181, 7
        %s183 = scalar_select %p182, %s181, 7
        %s184 = smul.addr %s183, 8
        %s185 = scalar_lea.vmem %s0, %s184
        %s186 = smul.u32 4, %s11
      $region36: #{gpt2_forward.7} parent=31 // pred_fallthru
        _
    $region32: #{gpt2_forward.7} parent=5 // pred_fallthru
      _
    %p187 = scmp.le.s32.totalorder 1, %s11
    %p188 = scmp.lt.s32.totalorder %s11, 3
    %p189 = pnand %p187, %p188
    %p190 = pneg %p189
    // Predicated region
    $region37: #{gpt2_forward.7} parent=5 // pred_check
      _
    $region38: #{gpt2_forward.7} parent=5 // pred_check_branch
      %192 = sbr.rel (%p189) target = $region40
    $region39: #{gpt2_forward.7} parent=5 // pred_region
      %s193 = ssub.s32 %s11, 1
      %s194 = smul.u32 4, %s16
      %p195 = scmp.lt.s32.totalorder %s194, 7
      %s196 = scalar_select %p195, %s194, 7
      %s197 = smul.addr %s196, 8
      %s198 = scalar_lea.vmem %s0, %s197
      %p199 = pneg %p37
      %p200 = pneg %p34
      %p201 = pneg %p58
      %p202 = pneg %p55
      %p203 = pneg %p79
      %p204 = pneg %p76
      %p205 = pneg %p100
      %p206 = pneg %p97
      %p207 = pneg %p121
      %p208 = pneg %p118
      %p209 = pneg %p147
      %p210 = pneg %p144
      %s211 = smul.u32 4, %s16
      %p212 = scmp.lt.s32.totalorder %s211, 7
      %s213 = scalar_select %p212, %s211, 7
      %s214 = smul.addr %s213, 2
      %s215 = smul.addr %s214, 4
      %s216 = scalar_lea.vmem %s5, %s215
      %s217 = smul.u32 4, %s16
      %p218 = scmp.lt.s32.totalorder %s217, 7
      %s219 = scalar_select %p218, %s217, 7
      %s220 = smul.addr %s219, 8
      %s221 = scalar_lea.vmem %s0, %s220
      %s222 = smul.u32 4, %s16
      %s223 = smul.u32 4, %s16
      %p224 = scmp.lt.s32.totalorder %s223, 7
      %s225 = scalar_select %p224, %s223, 7
      %s226 = smul.addr %s225, 2
      %s227 = smul.addr %s226, 4
      %s228 = scalar_lea.vmem %s5, %s227
      %s229 = smul.u32 4, %s16
      %v231 = vld [vmem:[%s221] sm:$0xff]
      %v232 = vld [vmem:[%s221 + $0x8] sm:$0xff]
      %v233 = vld [vmem:[%s221 + $0x10] sm:$0xff]
      %v234 = vld [vmem:[%s221 + $0x18] sm:$0xff]
      %v235 = vld [vmem:[%s1] sm:$0x1]
      %v236 = vld [vmem:[%s2] sm:$0x1]
      %vm237 = vcmask 523264
      %v238 = vsel %vm237, %v231, 0.0
      %239 = vadd.xlane.f32.xlu0 %v238
      %v240 = vpop.xlane.xlu0 %239
      %v241 = vsel %vm237, %v232, 0.0
      %242 = vadd.xlane.f32.xlu0 %v241
      %v243 = vpop.xlane.xlu0 %242
      %v244 = vsel %vm237, %v233, 0.0
      %245 = vadd.xlane.f32.xlu0 %v244
      %v246 = vpop.xlane.xlu0 %245
      %v247 = vsel %vm237, %v234, 0.0
      %248 = vadd.xlane.f32.xlu0 %v247
      %v249 = vpop.xlane.xlu0 %248
      %v250 = vrcp.pop 64.0
      %v251 = vmul.f32 %v240, %v250
      %v252 = vmul.f32 %v243, %v250
      %v253 = vmul.f32 %v246, %v250
      %v254 = vmul.f32 %v249, %v250
      %v255 = vsub.f32 %v231, %v251
      %v256 = vsub.f32 %v232, %v252
      %v257 = vsub.f32 %v233, %v253
      %v258 = vsub.f32 %v234, %v254
      %v259 = vmul.f32 %v255, %v255
      %v260 = vmul.f32 %v256, %v256
      %v261 = vmul.f32 %v257, %v257
      %v262 = vmul.f32 %v258, %v258
      %v263 = vsel %vm237, %v259, 0.0
      %264 = vadd.xlane.f32.xlu0 %v263
      %v265 = vpop.xlane.xlu0 %264
      %v266 = vsel %vm237, %v260, 0.0
      %267 = vadd.xlane.f32.xlu0 %v266
      %v268 = vpop.xlane.xlu0 %267
      %v269 = vsel %vm237, %v261, 0.0
      %270 = vadd.xlane.f32.xlu0 %v269
      %v271 = vpop.xlane.xlu0 %270
      %v272 = vsel %vm237, %v262, 0.0
      %273 = vadd.xlane.f32.xlu0 %v272
      %v274 = vpop.xlane.xlu0 %273
      %v275 = vmul.f32 %v265, %v250
      %v276 = vmul.f32 %v268, %v250
      %v277 = vmul.f32 %v271, %v250
      %v278 = vmul.f32 %v274, %v250
      %v279 = vadd.f32 %v275, 1e-05
      %v280 = vadd.f32 %v276, 1e-05
      %v281 = vadd.f32 %v277, 1e-05
      %v282 = vadd.f32 %v278, 1e-05
      %v283 = vrsqrt.pop %v279
      %v284 = vrsqrt.pop %v280
      %v285 = vrsqrt.pop %v281
      %v286 = vrsqrt.pop %v282
      %v287 = vmul.f32 %v255, %v283
      %v288 = vmul.f32 %v256, %v284
      %v289 = vmul.f32 %v257, %v285
      %v290 = vmul.f32 %v258, %v286
      %v292 = vlaneseq
      %v293 = vshrl.u32 %v292, 7
      %v294 = vsub.s32 0, %v293
      %v295 = vrot.slane %v235, %v294
      %v297 = vmul.f32 %v287, %v295
      %v298 = vmul.f32 %v288, %v295
      %v299 = vmul.f32 %v289, %v295
      %v300 = vmul.f32 %v290, %v295
      %v302 = vlaneseq
      %v303 = vshrl.u32 %v302, 7
      %v304 = vsub.s32 0, %v303
      %v305 = vrot.slane %v236, %v304
      %v307 = vadd.f32 %v297, %v305
      %v308 = vadd.f32 %v298, %v305
      %v309 = vadd.f32 %v299, %v305
      %v310 = vadd.f32 %v300, %v305
      %v311 = vpack.c.bf16 %v308, %v307
      %v312 = vpack.c.bf16 %v310, %v309
      %v313 = vld [vmem:[%s3] sm:$0xff]
      %v314 = vld [vmem:[%s3 + $0x8] sm:$0xff]
      %v315 = vld [vmem:[%s3 + $0x10] sm:$0xff]
      %v316 = vld [vmem:[%s3 + $0x18] sm:$0xff]
      %v317 = vld [vmem:[%s3 + $0x20] sm:$0xff]
      %v318 = vld [vmem:[%s3 + $0x28] sm:$0xff]
      %v319 = vld [vmem:[%s3 + $0x30] sm:$0xff]
      %v320 = vld [vmem:[%s3 + $0x38] sm:$0xff]
      %v321 = vld [vmem:[%s4] sm:$0x3]
      %v323 = vlaneseq
      %v324 = vshrl.u32 %v323, 7
      %v325 = vsub.s32 0, %v324
      %v326 = vrot.slane %v321, %v325
      %v327 = vlaneseq
      %v328 = vshrl.u32 %v327, 7
      %v329 = vsub.s32 1, %v328
      %v330 = vrot.slane %v321, %v329
      %v341 = vunpack.c.l.b16 %v313
      %v342 = vunpack.c.h.b16 %v313
      %v343 = vunpack.c.l.b16 %v314
      %v344 = vunpack.c.h.b16 %v314
      %v345 = vunpack.c.l.b16 %v315
      %v346 = vunpack.c.h.b16 %v315
      %v347 = vunpack.c.l.b16 %v316
      %v348 = vunpack.c.h.b16 %v316
      %v349 = vunpack.c.l.b16 %v317
      %v350 = vunpack.c.h.b16 %v317
      %v351 = vunpack.c.l.b16 %v318
      %v352 = vunpack.c.h.b16 %v318
      %v353 = vunpack.c.l.b16 %v319
      %v354 = vunpack.c.h.b16 %v319
      %v355 = vunpack.c.l.b16 %v320
      %v356 = vunpack.c.h.b16 %v320
      %v357 = vpack.c.b16 %v343, %v341
      %v358 = vpack.c.b16 %v344, %v342
      %v359 = vpack.c.b16 %v347, %v345
      %v360 = vpack.c.b16 %v348, %v346
      %v361 = vpack.c.b16 %v351, %v349
      %v362 = vpack.c.b16 %v352, %v350
      %v363 = vpack.c.b16 %v355, %v353
      %v364 = vpack.c.b16 %v356, %v354
      %v374 = vsel %vm237, %v311, 0
      %v377 = vsel %vm237, %v312, 0
      %379 = vmatprep.subr.bf16.mxu0 0
      %380 = vmatpush1.bf16.msra.mxu0 0
      %381 = vmatprep.subr.bf16.mxu0 0
      %382 = vmatpush1.bf16.msra.mxu0 0
      %383 = vmatprep.subr.bf16.mxu0 0
      %384 = vmatpush1.bf16.msra.mxu0 0
      %385 = vmatprep.subr.bf16.mxu0 0
      %386 = vmatpush1.bf16.msra.mxu0 0
      %387 = vmatprep.subr.bf16.mxu0 %v364
      %388 = vmatpush1.bf16.msra.mxu0 %v363
      %389 = vmatprep.subr.bf16.mxu0 %v362
      %390 = vmatpush1.bf16.msra.mxu0 %v361
      %391 = vmatprep.subr.bf16.mxu0 %v360
      %392 = vmatpush1.bf16.msra.mxu0 %v359
      %393 = vmatprep.subr.bf16.mxu0 %v358
      %394 = vmatpush1.bf16.msra.mxu0 %v357
      %395 = vmatprep.subr.bf16.mxu0 0
      %396 = vmatpush2.bf16.msra.mxu0 0
      %397 = vmatprep.subr.bf16.mxu0 0
      %398 = vmatpush2.bf16.msra.mxu0 0
      %399 = vmatprep.subr.bf16.mxu0 0
      %400 = vmatpush2.bf16.msra.mxu0 0
      %401 = vmatprep.subr.bf16.mxu0 0
      %402 = vmatpush2.bf16.msra.mxu0 0
      %403 = vmatprep.subr.bf16.mxu0 0
      %404 = vmatpush2.bf16.msra.mxu0 0
      %405 = vmatprep.subr.bf16.mxu0 0
      %406 = vmatpush2.bf16.msra.mxu0 0
      %407 = vmatprep.subr.bf16.mxu0 0
      %408 = vmatpush2.bf16.msra.mxu0 0
      %409 = vmatprep.subr.bf16.mxu0 0
      %410 = vmatpush2.bf16.msra.mxu0 0
      %411 = vmatprep.mubr.bf16.mxu0 0
      %412 = vmatmul.mubr.bf16.gmra.mxu0 %v374
      %v413 = vpop.f32.mrf.mxu0
      %v414 = vadd.f32 %v326, %v413
      %v415 = vpop.f32.mrf.mxu0
      %v416 = vadd.f32 %v330, %v415
      %v417 = vpop.f32.mrf.mxu0
      %v418 = vadd.f32 %v326, %v417
      %v419 = vpop.f32.mrf.mxu0
      %v420 = vadd.f32 %v330, %v419
      %421 = vmatprep.mubr.bf16.mxu0 0
      %422 = vmatmul.mubr.bf16.gmra.mxu0 %v377
      %v423 = vpop.f32.mrf.mxu0
      %v424 = vadd.f32 %v326, %v423
      %v425 = vpop.f32.mrf.mxu0
      %v426 = vadd.f32 %v330, %v425
      %v427 = vpop.f32.mrf.mxu0
      %v428 = vadd.f32 %v326, %v427
      %v429 = vpop.f32.mrf.mxu0
      %v430 = vadd.f32 %v330, %v429
      %431 = vdwg.mxu0
      %v432 = vpack.c.bf16 %v418, %v414
      %v433 = vpack.c.bf16 %v420, %v416
      %v434 = vpack.c.bf16 %v428, %v424
      %v435 = vpack.c.bf16 %v430, %v426
      %v440 = vunpack.c.l.b16 %v432
      %v441 = vunpack.c.l.b16 %v433
      %v442 = vunpack.c.h.b16 %v432
      %v443 = vunpack.c.h.b16 %v433
      %v444 = vunpack.c.l.b16 %v434
      %v445 = vunpack.c.l.b16 %v435
      %v446 = vunpack.c.h.b16 %v434
      %v447 = vunpack.c.h.b16 %v435
      %v448 = vpack.c.b16 %v441, %v440
      %v449 = vpack.c.b16 %v443, %v442
      %v450 = vpack.c.b16 %v445, %v444
      %v451 = vpack.c.b16 %v447, %v446
      %vm456 = vcmask 1043456
      %vm457 = vcmask 523268
      %vm458 = vmor %vm457, %vm456
      %459 = vst.msk [vmem:[%s228] sm:$0xff] %vm458, %v448
      %460 = vst.msk [vmem:[%s228 + $0x8] sm:$0xff] %vm458, %v449
      %461 = vst.msk [vmem:[%s228 + $0x10] sm:$0xff] %vm458, %v450
      %462 = vst.msk [vmem:[%s228 + $0x18] sm:$0xff] %vm458, %v451
      %s463 = smul.u32 4, %s16
      %p464 = scmp.lt.s32.totalorder %s463, 7
      %s465 = scalar_select %p464, %s463, 7
      %s466 = smul.addr %s465, 2
      %s467 = smul.addr %s466, 4
      %s468 = scalar_lea.vmem %s5, %s467
      // Predicated region
      $region41: #{gpt2_forward.7} parent=39 // pred_check
        %p469 = pneg %p144
      $region42: #{gpt2_forward.7} parent=39 // pred_check_branch
        %471 = sbr.rel (%p469) target = $region44
      $region43: #{gpt2_forward.7} parent=39 // pred_region
        %s472 = smul.u32 4, %s16
      $region44: #{gpt2_forward.7} parent=39 // pred_fallthru
        _
    $region40: #{gpt2_forward.7} parent=5 // pred_fallthru
      _
    %p473 = scmp.le.s32.totalorder 2, %s11
    // Predicated region
    $region45: #{gpt2_forward.7} parent=5 // pred_check
      %p474 = pneg %p473
    $region46: #{gpt2_forward.7} parent=5 // pred_check_branch
      %476 = sbr.rel (%p474) target = $region48
    $region47: #{gpt2_forward.7} parent=5 // pred_region
      %s477 = ssub.s32 %s11, 2
      // Predicated region
      $region49: #{gpt2_forward.7} parent=47 // pred_check
        %p478 = pneg %p150
      $region50: #{gpt2_forward.7} parent=47 // pred_check_branch
        %480 = sbr.rel (%p478) target = $region52
      $region51: #{gpt2_forward.7} parent=47 // pred_region
        %s481 = smul.u32 4, %s17
        %p482 = scmp.lt.s32.totalorder %s481, 7
        %s483 = scalar_select %p482, %s481, 7
        %s484 = smul.addr %s483, 2
        %s485 = smul.addr %s484, 4
        %s486 = scalar_lea.vmem %s5, %s485
      $region52: #{gpt2_forward.7} parent=47 // pred_fallthru
        _
    $region48: #{gpt2_forward.7} parent=5 // pred_fallthru
      _
  $region6: #{gpt2_forward.7} parent=0 // loop_footer
    %s15 = sadd.s32 1, %s11
  $region7: #{gpt2_forward.7} parent=0 // loop_footer_branch
    %10 = sbr.rel target = $region3
  $region8: #{gpt2_forward.7} parent=0 // loop_exit
    _

// kernel: gpt2_forward.13
$region0: #{gpt2_forward.13}
  #allocation0 [shape = 'u32[]', space=smem, size = 0x4, offset = 0x4, fixed_abs, tag = 'smem constant byte address 0x4 - core index']
  #allocation1 [shape = 'u32[144,128]{1,0:T(1,128)}', space=vmem, size = 0x12000, scoped, tag = 'internal scratch']
  %s0 = inlined_call_operand.vmem [shape: f32[2,64], index: 0, kind: input, shape index: {}]
  %s1 = inlined_call_operand.vmem [shape: bf16[256,64], index: 1, kind: input, shape index: {}]
  %s2 = inlined_call_operand.hbm [shape: f32[2,256], index: 2, kind: output, shape index: {}]
  %s3 = sld [smem:[#allocation0]]
  $region41: #{gpt2_forward.13} parent=0
    _
  %s5 = ssub.s32 1, %s3
  %s6 = scalar_select 0, %s5, %s3
  $region1: #{gpt2_forward.13} parent=0
    #allocation2 [shape = 'u8[2048]{0}', space=vmem, size = 0x800, scoped, tag = 'output window, operand 0']
    #allocation3 [shape = 's32[2]{0}', space=sflag, size = 0x8, scoped, tag = 'scoped memory for gpt2_forward.13']
    %7 = vsyncpa [#allocation3], 0
    %s8 = scalar_lea.sflag [#allocation3], 1
    %9 = vsyncpa %s8, 0
    loop: start=0, step=1, limit=4
    $region2: #{gpt2_forward.13} parent=1 // loop_pre_header
      _
    $region3: #{gpt2_forward.13} parent=1 // loop_header
      %s11 = sphi 0, %s15
      %p12 = scmp.ge.s32.totalorder %s11, 4
      %s19 = sphi 0, %s19
      %s21 = sphi 0, %s19
      %s22 = sphi 0, %s21
      %s36 = sphi 0, %s22
      %s42 = sphi 0, %s44
      %s45 = sphi 0, %s42
      %s46 = sphi 0, %s45
      %s62 = sphi 0, %s46
      %s68 = sphi 0, %s70
      %s71 = sphi 0, %s68
      %s72 = sphi 0, %s71
      %s88 = sphi 0, %s72
    $region4: #{gpt2_forward.13} parent=1 // loop_header_branch
      %14 = sbr.rel (%p12) target = $region8
    $region5: #{gpt2_forward.13} parent=1 // loop_body
      %s16 = ssub.s32 %s11, 1
      %s17 = ssub.s32 %s11, 2
      %s18 = sadd.s32 %s11, 1
      %s20 = sadd.s32 %s19, 1
      %p23 = scmp.eq.s32.totalorder %s11, 1
      %p24 = scmp.ne.s32.totalorder %s19, %s21
      %p25 = scmp.eq.s32.totalorder %s11, 0
      %p26 = por %p24, %p25
      %p27 = scmp.ne.s32.totalorder %s19, %s21
      %p28 = scmp.eq.s32.totalorder %s16, 1
      %p29 = por %p27, %p28
      %p30 = scmp.ne.s32.totalorder %s21, %s22
      %p31 = scmp.eq.s32.totalorder %s16, 0
      %p32 = por %p30, %p31
      %p33 = scmp.ne.s32.totalorder %s21, %s22
      %p34 = scmp.eq.s32.totalorder %s17, 1
      %p35 = por %p33, %p34
      %p37 = scmp.ne.s32.totalorder %s22, %s36
      %p38 = scmp.eq.s32.totalorder %s17, 0
      %p39 = por %p37, %p38
      %s40 = ssub.s32 %s11, %s18
      %p41 = scmp.eq.s32.totalorder %s40, 0
      %s43 = sadd.s32 %s42, 1
      %s44 = scalar_select %p41, %s42, %s43
      %p47 = pneg %p41
      %p48 = scmp.eq.s32.totalorder %s11, 1
      %p49 = por %p47, %p48
      %p50 = scmp.ne.s32.totalorder %s42, %s45
      %p51 = scmp.eq.s32.totalorder %s11, 0
      %p52 = por %p50, %p51
      %p53 = scmp.ne.s32.totalorder %s42, %s45
      %p54 = scmp.eq.s32.totalorder %s16, 1
      %p55 = por %p53, %p54
      %p56 = scmp.ne.s32.totalorder %s45, %s46
      %p57 = scmp.eq.s32.totalorder %s16, 0
      %p58 = por %p56, %p57
      %p59 = scmp.ne.s32.totalorder %s45, %s46
      %p60 = scmp.eq.s32.totalorder %s17, 1
      %p61 = por %p59, %p60
      %p63 = scmp.ne.s32.totalorder %s46, %s62
      %p64 = scmp.eq.s32.totalorder %s17, 0
      %p65 = por %p63, %p64
      %s66 = ssub.s32 %s11, %s18
      %p67 = scmp.eq.s32.totalorder %s66, 0
      %s69 = sadd.s32 %s68, 1
      %s70 = scalar_select %p67, %s68, %s69
      %p73 = pneg %p67
      %p74 = scmp.eq.s32.totalorder %s11, 1
      %p75 = por %p73, %p74
      %p76 = scmp.ne.s32.totalorder %s68, %s71
      %p77 = scmp.eq.s32.totalorder %s11, 0
      %p78 = por %p76, %p77
      %p79 = scmp.ne.s32.totalorder %s68, %s71
      %p80 = scmp.eq.s32.totalorder %s16, 1
      %p81 = por %p79, %p80
      %p82 = scmp.ne.s32.totalorder %s71, %s72
      %p83 = scmp.eq.s32.totalorder %s16, 0
      %p84 = por %p82, %p83
      %p85 = scmp.ne.s32.totalorder %s71, %s72
      %p86 = scmp.eq.s32.totalorder %s17, 1
      %p87 = por %p85, %p86
      %p89 = scmp.ne.s32.totalorder %s72, %s88
      %p90 = scmp.eq.s32.totalorder %s17, 0
      %p91 = por %p89, %p90
      %p92 = scmp.le.s32.totalorder 1, %s11
      %p93 = scmp.lt.s32.totalorder %s11, 3
      %p94 = pnand %p92, %p93
      %p95 = pneg %p94
      // Predicated region
      $region9: #{gpt2_forward.13} parent=5 // pred_check
        _
      $region10: #{gpt2_forward.13} parent=5 // pred_check_branch
        %97 = sbr.rel (%p94) target = $region12
      $region11: #{gpt2_forward.13} parent=5 // pred_region
        %s98 = ssub.s32 %s11, 1
        // Predicated region
        $region13: #{gpt2_forward.13} parent=11 // pred_check
          %p99 = pneg %p32
        $region14: #{gpt2_forward.13} parent=11 // pred_check_branch
          %101 = sbr.rel (%p99) target = $region16
        $region15: #{gpt2_forward.13} parent=11 // pred_region
          _
        $region16: #{gpt2_forward.13} parent=11 // pred_fallthru
          _
      $region12: #{gpt2_forward.13} parent=5 // pred_fallthru
        _
      %p102 = scmp.lt.s32.totalorder %s11, 2
      // Predicated region
      $region17: #{gpt2_forward.13} parent=5 // pred_check
        %p103 = pneg %p102
      $region18: #{gpt2_forward.13} parent=5 // pred_check_branch
        %105 = sbr.rel (%p103) target = $region20
      $region19: #{gpt2_forward.13} parent=5 // pred_region
        // Predicated region
        $region21: #{gpt2_forward.13} parent=19 // pred_check
          %p106 = pneg %p52
        $region22: #{gpt2_forward.13} parent=19 // pred_check_branch
          %108 = sbr.rel (%p106) target = $region24
        $region23: #{gpt2_forward.13} parent=19 // pred_region
          %s109 = smul.u32 16, %s11
          %p110 = scmp.lt.s32.totalorder %s109, 31
          %s111 = scalar_select %p110, %s109, 31
          %s112 = smul.addr %s111, 4
          %s113 = scalar_lea.vmem %s1, %s112
          %s114 = smul.u32 16, %s11
        $region24: #{gpt2_forward.13} parent=19 // pred_fallthru
          _
      $region20: #{gpt2_forward.13} parent=5 // pred_fallthru
        _
      %p115 = scmp.le.s32.totalorder 1, %s11
      %p116 = scmp.lt.s32.totalorder %s11, 3
      %p117 = pnand %p115, %p116
      %p118 = pneg %p117
      // Predicated region
      $region25: #{gpt2_forward.13} parent=5 // pred_check
        _
      $region26: #{gpt2_forward.13} parent=5 // pred_check_branch
        %120 = sbr.rel (%p117) target = $region28
      $region27: #{gpt2_forward.13} parent=5 // pred_region
        %s121 = ssub.s32 %s11, 1
        %p122 = pneg %p32
        %p123 = pneg %p29
        %s124 = smul.u32 16, %s16
        %p125 = scmp.lt.s32.totalorder %s124, 31
        %s126 = scalar_select %p125, %s124, 31
        %s127 = smul.addr %s126, 4
        %s128 = scalar_lea.vmem %s1, %s127
        %p129 = pneg %p58
        %p130 = pneg %p55
        %p131 = pneg %p84
        %p132 = pneg %p81
        %s133 = sand.u32 %s71, 1
        %s134 = scalar_lea.sflag [#allocation3], %s133
        %s135 = sand.u32 %s71, 1
        %s136 = smul.addr %s135, 2
        %s137 = scalar_lea.vmem [#allocation2], %s136
        %s138 = smul.u32 16, %s16
        %p139 = scmp.lt.s32.totalorder %s138, 31
        %s140 = scalar_select %p139, %s138, 31
        %s141 = smul.addr %s140, 4
        %s142 = scalar_lea.vmem %s1, %s141
        %s143 = smul.u32 16, %s16
        %v145 = vld [vmem:[%s0] sm:$0x3]
        %v146 = vpack.c.bf16 %v145, %v145
        %v147 = vld [vmem:[%s142] sm:$0xf]
        %v148 = vld [vmem:[%s142 + $0x4] sm:$0xf]
        %v149 = vld [vmem:[%s142 + $0x8] sm:$0xf]
        %v150 = vld [vmem:[%s142 + $0xc] sm:$0xf]
        %v151 = vld [vmem:[%s142 + $0x10] sm:$0xf]
        %v152 = vld [vmem:[%s142 + $0x14] sm:$0xf]
        %v153 = vld [vmem:[%s142 + $0x18] sm:$0xf]
        %v154 = vld [vmem:[%s142 + $0x1c] sm:$0xf]
        %v155 = vld [vmem:[%s142 + $0x20] sm:$0xf]
        %v156 = vld [vmem:[%s142 + $0x24] sm:$0xf]
        %v157 = vld [vmem:[%s142 + $0x28] sm:$0xf]
        %v158 = vld [vmem:[%s142 + $0x2c] sm:$0xf]
        %v159 = vld [vmem:[%s142 + $0x30] sm:$0xf]
        %v160 = vld [vmem:[%s142 + $0x34] sm:$0xf]
        %v161 = vld [vmem:[%s142 + $0x38] sm:$0xf]
        %v162 = vld [vmem:[%s142 + $0x3c] sm:$0xf]
        %v179 = vunpack.c.l.b16 %v147
        %v180 = vunpack.c.l.b16 %v148
        %v181 = vunpack.c.l.b16 %v149
        %v182 = vunpack.c.l.b16 %v150
        %v183 = vunpack.c.l.b16 %v151
        %v184 = vunpack.c.l.b16 %v152
        %v185 = vunpack.c.l.b16 %v153
        %v186 = vunpack.c.l.b16 %v154
        %v187 = vunpack.c.l.b16 %v155
        %v188 = vunpack.c.l.b16 %v156
        %v189 = vunpack.c.l.b16 %v157
        %v190 = vunpack.c.l.b16 %v158
        %v191 = vunpack.c.l.b16 %v159
        %v192 = vunpack.c.l.b16 %v160
        %v193 = vunpack.c.l.b16 %v161
        %v194 = vunpack.c.l.b16 %v162
        %v195 = vpack.c.b16 %v180, %v179
        %v196 = vpack.c.b16 %v182, %v181
        %v197 = vpack.c.b16 %v184, %v183
        %v198 = vpack.c.b16 %v186, %v185
        %v199 = vpack.c.b16 %v188, %v187
        %v200 = vpack.c.b16 %v190, %v189
        %v201 = vpack.c.b16 %v192, %v191
        %v202 = vpack.c.b16 %v194, %v193
        %vm203 = vcmask 523264
        %v205 = vsel %vm203, %v146, 0
        %v208 = vsel %vm203, %v195, 0
        %v211 = vsel %vm203, %v196, 0
        %v214 = vsel %vm203, %v197, 0
        %v217 = vsel %vm203, %v198, 0
        %v220 = vsel %vm203, %v199, 0
        %v223 = vsel %vm203, %v200, 0
        %v226 = vsel %vm203, %v201, 0
        %v229 = vsel %vm203, %v202, 0
        %231 = vmatprep.subr.bf16.mxu0 0
        %232 = vmatpush1.bf16.xpose.msra.mxu0 %v229
        %233 = vmatprep.subr.bf16.mxu0 0
        %234 = vmatpush1.bf16.xpose.msra.mxu0 %v226
        %235 = vmatprep.subr.bf16.mxu0 0
        %236 = vmatpush1.bf16.xpose.msra.mxu0 %v223
        %237 = vmatprep.subr.bf16.mxu0 0
        %238 = vmatpush1.bf16.xpose.msra.mxu0 %v220
        %239 = vmatprep.subr.bf16.mxu0 0
        %240 = vmatpush1.bf16.xpose.msra.mxu0 %v217
        %241 = vmatprep.subr.bf16.mxu0 0
        %242 = vmatpush1.bf16.xpose.msra.mxu0 %v214
        %243 = vmatprep.subr.bf16.mxu0 0
        %244 = vmatpush1.bf16.xpose.msra.mxu0 %v211
        %245 = vmatprep.subr.bf16.mxu0 0
        %246 = vmatpush1.bf16.xpose.msra.mxu0 %v208
        %247 = vmatprep.subr.bf16.mxu0 0
        %248 = vmatpush2.bf16.xpose.msra.mxu0 0
        %249 = vmatprep.subr.bf16.mxu0 0
        %250 = vmatpush2.bf16.xpose.msra.mxu0 0
        %251 = vmatprep.subr.bf16.mxu0 0
        %252 = vmatpush2.bf16.xpose.msra.mxu0 0
        %253 = vmatprep.subr.bf16.mxu0 0
        %254 = vmatpush2.bf16.xpose.msra.mxu0 0
        %255 = vmatprep.subr.bf16.mxu0 0
        %256 = vmatpush2.bf16.xpose.msra.mxu0 0
        %257 = vmatprep.subr.bf16.mxu0 0
        %258 = vmatpush2.bf16.xpose.msra.mxu0 0
        %259 = vmatprep.subr.bf16.mxu0 0
        %260 = vmatpush2.bf16.xpose.msra.mxu0 0
        %261 = vmatprep.subr.bf16.mxu0 0
        %262 = vmatpush2.bf16.xpose.msra.mxu0 0
        %263 = vmatprep.mubr.bf16.mxu0 0
        %264 = vmatmul.mubr.bf16.gmra.mxu0 %v205
        %v265 = vpop.f32.mrf.mxu0
        %v266 = vadd.f32 0.0, %v265
        %v267 = vpop.f32.mrf.mxu0
        %v268 = vpop.f32.mrf.mxu0
        %v269 = vpop.f32.mrf.mxu0
        %270 = vdwg.mxu0
        %271 = vst [vmem:[%s137] sm:$0x3] %v266
        %s272 = sand.u32 %s71, 1
        %s273 = scalar_lea.sflag [#allocation3], %s272
        %s274 = sand.u32 %s71, 1
        %s275 = smul.addr %s274, 2
        %s276 = scalar_lea.vmem [#allocation2], %s275
        // Predicated region
        $region29: #{gpt2_forward.13} parent=27 // pred_check
          %p277 = pneg %p81
        $region30: #{gpt2_forward.13} parent=27 // pred_check_branch
          %279 = sbr.rel (%p277) target = $region32
        $region31: #{gpt2_forward.13} parent=27 // pred_region
          %s281 = ssub.s32 32, 32
          %282 = vsyncadd %s273, %s281
          %s283 = smul.addr %s16, 32
          %s284 = scalar_lea.hbm %s2, %s283
          %s286 = sshll.u32 %s276, 4
          %s287 = int_to_ptr.vmem [resolvable:$true] %s286
          %289 = dma.vmem_to_hbm [thread:$0]  %s287, 32, %s284, %s273
        $region32: #{gpt2_forward.13} parent=27 // pred_fallthru
          _
      $region28: #{gpt2_forward.13} parent=5 // pred_fallthru
        _
      %p290 = scmp.le.s32.totalorder 2, %s11
      // Predicated region
      $region33: #{gpt2_forward.13} parent=5 // pred_check
        %p291 = pneg %p290
      $region34: #{gpt2_forward.13} parent=5 // pred_check_branch
        %293 = sbr.rel (%p291) target = $region36
      $region35: #{gpt2_forward.13} parent=5 // pred_region
        %s294 = ssub.s32 %s11, 2
        // Predicated region
        $region37: #{gpt2_forward.13} parent=35 // pred_check
          %p295 = pneg %p87
        $region38: #{gpt2_forward.13} parent=35 // pred_check_branch
          %297 = sbr.rel (%p295) target = $region40
        $region39: #{gpt2_forward.13} parent=35 // pred_region
          %s298 = sand.u32 %s72, 1
          %s299 = scalar_lea.sflag [#allocation3], %s298
          %s300 = sand.u32 %s72, 1
          %s301 = smul.addr %s300, 2
          %s302 = scalar_lea.vmem [#allocation2], %s301
          %303 = dma.done %s299, 32
        $region40: #{gpt2_forward.13} parent=35 // pred_fallthru
          _
      $region36: #{gpt2_forward.13} parent=5 // pred_fallthru
        _
    $region6: #{gpt2_forward.13} parent=1 // loop_footer
      %s15 = sadd.s32 1, %s11
    $region7: #{gpt2_forward.13} parent=1 // loop_footer_branch
      %10 = sbr.rel target = $region3
    $region8: #{gpt2_forward.13} parent=1 // loop_exit
      _
    %304 = vsyncpa [#allocation3], 1
    %s305 = scalar_lea.sflag [#allocation3], 1
    %306 = vsyncpa %s305, 1

// kernel: gpt2_forward.9
$region0: #{gpt2_forward.9}
  #allocation0 [shape = 'u32[]', space=smem, size = 0x4, offset = 0x4, fixed_abs, tag = 'smem constant byte address 0x4 - core index']
  #allocation1 [shape = 'u32[144,128]{1,0:T(1,128)}', space=vmem, size = 0x12000, scoped, tag = 'internal scratch']
  #allocation2 [shape = 'f32[32,64]{1,0:T(8,128)}', space=vmem, size = 0x4000, scoped, tag = 'scratch operand']
  #allocation3 [shape = 'bf16[32,64]{1,0:T(8,128)(2,1)}', space=vmem, size = 0x2000, scoped, tag = 'scratch operand']
  #allocation4 [shape = 'f32[32,64]{1,0:T(8,128)}', space=vmem, size = 0x4000, scoped, tag = 'scratch operand']
  %s0 = inlined_call_operand.vmem [shape: f32[64,64], index: 0, kind: input, shape index: {}]
  %s1 = inlined_call_operand.vmem [shape: bf16[64,64], index: 1, kind: input, shape index: {}]
  %s2 = inlined_call_operand.vmem [shape: bf16[64,64], index: 2, kind: input, shape index: {}]
  %s3 = inlined_call_operand.vmem [shape: f32[1,64], index: 3, kind: input, shape index: {}]
  %s4 = inlined_call_operand.vmem [shape: f32[1,64], index: 4, kind: input, shape index: {}]
  %s5 = inlined_call_operand.vmem [shape: f32[1,64], index: 5, kind: input, shape index: {}]
  %s6 = inlined_call_operand.vmem [shape: bf16[64,256], index: 6, kind: input, shape index: {}]
  %s7 = inlined_call_operand.vmem [shape: f32[1,256], index: 7, kind: input, shape index: {}]
  %s8 = inlined_call_operand.vmem [shape: bf16[256,64], index: 8, kind: input, shape index: {}]
  %s9 = inlined_call_operand.vmem [shape: f32[1,64], index: 9, kind: input, shape index: {}]
  %s10 = inlined_call_operand.vmem [shape: f32[64,64], index: 10, kind: output, shape index: {}]
  %s11 = sld [smem:[#allocation0]]
  $region122: #{gpt2_forward.9} parent=0
    _
  %s13 = ssub.s32 1, %s11
  %s14 = scalar_select 0, %s13, %s11
  $region1: #{gpt2_forward.9} parent=0
    #allocation5 [shape = 'u8[32768]{0}', space=vmem, size = 0x8000, scoped, tag = 'input window, operand 6']
    loop: start=0, step=1, limit=6
    $region2: #{gpt2_forward.9} parent=1 // loop_pre_header
      _
    $region3: #{gpt2_forward.9} parent=1 // loop_header
      %s16 = sphi 0, %s20
      %p17 = scmp.ge.s32.totalorder %s16, 6
      %s23 = sphi 0, %s35
      %s24 = sphi 0, %s31
      %s25 = sphi 0, %s23
      %s26 = sphi 0, %s24
      %s27 = sphi 0, %s25
      %s28 = sphi 0, %s26
      %s38 = sphi 0, %s40
      %s41 = sphi 0, %s38
      %s42 = sphi 0, %s41
      %s58 = sphi 0, %s42
      %s64 = sphi 0, %s66
      %s67 = sphi 0, %s64
      %s68 = sphi 0, %s67
      %s84 = sphi 0, %s68
      %s88 = sphi 0, %s88
      %s90 = sphi 0, %s88
      %s91 = sphi 0, %s90
      %s105 = sphi 0, %s91
      %s109 = sphi 0, %s109
      %s111 = sphi 0, %s109
      %s112 = sphi 0, %s111
      %s126 = sphi 0, %s112
      %s130 = sphi 0, %s130
      %s132 = sphi 0, %s130
      %s133 = sphi 0, %s132
      %s147 = sphi 0, %s133
      %s151 = sphi 0, %s151
      %s153 = sphi 0, %s151
      %s154 = sphi 0, %s153
      %s168 = sphi 0, %s154
      %s174 = sphi 0, %s176
      %s177 = sphi 0, %s174
      %s178 = sphi 0, %s177
      %s194 = sphi 0, %s178
      %s200 = sphi 0, %s202
      %s203 = sphi 0, %s200
      %s204 = sphi 0, %s203
      %s220 = sphi 0, %s204
      %s226 = sphi 0, %s228
      %s229 = sphi 0, %s226
      %s230 = sphi 0, %s229
      %s246 = sphi 0, %s230
      %s250 = sphi 0, %s250
      %s252 = sphi 0, %s250
      %s253 = sphi 0, %s252
      %s267 = sphi 0, %s253
      %s273 = sphi 0, %s275
      %s276 = sphi 0, %s273
      %s277 = sphi 0, %s276
      %s293 = sphi 0, %s277
    $region4: #{gpt2_forward.9} parent=1 // loop_header_branch
      %19 = sbr.rel (%p17) target = $region8
    $region5: #{gpt2_forward.9} parent=1 // loop_body
      %s21 = ssub.s32 %s16, 1
      %s22 = ssub.s32 %s16, 2
      %s29 = sadd.s32 1, %s24
      %p30 = scmp.ge.s32.totalorder %s29, 2
      %s31 = scalar_select %p30, 0, %s29
      %s32 = sadd.s32 1, %s23
      %s33 = scalar_select %p30, %s32, %s23
      %p34 = scmp.ge.s32.totalorder %s33, 2
      %s35 = scalar_select %p34, 0, %s33
      %s36 = ssub.s32 %s23, %s35
      %p37 = scmp.eq.s32.totalorder %s36, 0
      %s39 = sadd.s32 %s38, 1
      %s40 = scalar_select %p37, %s38, %s39
      %p43 = pneg %p37
      %p44 = scmp.eq.s32.totalorder %s16, 3
      %p45 = por %p43, %p44
      %p46 = scmp.ne.s32.totalorder %s38, %s41
      %p47 = scmp.eq.s32.totalorder %s16, 0
      %p48 = por %p46, %p47
      %p49 = scmp.ne.s32.totalorder %s38, %s41
      %p50 = scmp.eq.s32.totalorder %s21, 3
      %p51 = por %p49, %p50
      %p52 = scmp.ne.s32.totalorder %s41, %s42
      %p53 = scmp.eq.s32.totalorder %s21, 0
      %p54 = por %p52, %p53
      %p55 = scmp.ne.s32.totalorder %s41, %s42
      %p56 = scmp.eq.s32.totalorder %s22, 3
      %p57 = por %p55, %p56
      %p59 = scmp.ne.s32.totalorder %s42, %s58
      %p60 = scmp.eq.s32.totalorder %s22, 0
      %p61 = por %p59, %p60
      %s62 = ssub.s32 %s23, %s35
      %p63 = scmp.eq.s32.totalorder %s62, 0
      %s65 = sadd.s32 %s64, 1
      %s66 = scalar_select %p63, %s64, %s65
      %p69 = pneg %p63
      %p70 = scmp.eq.s32.totalorder %s16, 3
      %p71 = por %p69, %p70
      %p72 = scmp.ne.s32.totalorder %s64, %s67
      %p73 = scmp.eq.s32.totalorder %s16, 0
      %p74 = por %p72, %p73
      %p75 = scmp.ne.s32.totalorder %s64, %s67
      %p76 = scmp.eq.s32.totalorder %s21, 3
      %p77 = por %p75, %p76
      %p78 = scmp.ne.s32.totalorder %s67, %s68
      %p79 = scmp.eq.s32.totalorder %s21, 0
      %p80 = por %p78, %p79
      %p81 = scmp.ne.s32.totalorder %s67, %s68
      %p82 = scmp.eq.s32.totalorder %s22, 3
      %p83 = por %p81, %p82
      %p85 = scmp.ne.s32.totalorder %s68, %s84
      %p86 = scmp.eq.s32.totalorder %s22, 0
      %p87 = por %p85, %p86
      %s89 = sadd.s32 %s88, 1
      %p92 = scmp.eq.s32.totalorder %s16, 3
      %p93 = scmp.ne.s32.totalorder %s88, %s90
      %p94 = scmp.eq.s32.totalorder %s16, 0
      %p95 = por %p93, %p94
      %p96 = scmp.ne.s32.totalorder %s88, %s90
      %p97 = scmp.eq.s32.totalorder %s21, 3
      %p98 = por %p96, %p97
      %p99 = scmp.ne.s32.totalorder %s90, %s91
      %p100 = scmp.eq.s32.totalorder %s21, 0
      %p101 = por %p99, %p100
      %p102 = scmp.ne.s32.totalorder %s90, %s91
      %p103 = scmp.eq.s32.totalorder %s22, 3
      %p104 = por %p102, %p103
      %p106 = scmp.ne.s32.totalorder %s91, %s105
      %p107 = scmp.eq.s32.totalorder %s22, 0
      %p108 = por %p106, %p107
      %s110 = sadd.s32 %s109, 1
      %p113 = scmp.eq.s32.totalorder %s16, 3
      %p114 = scmp.ne.s32.totalorder %s109, %s111
      %p115 = scmp.eq.s32.totalorder %s16, 0
      %p116 = por %p114, %p115
      %p117 = scmp.ne.s32.totalorder %s109, %s111
      %p118 = scmp.eq.s32.totalorder %s21, 3
      %p119 = por %p117, %p118
      %p120 = scmp.ne.s32.totalorder %s111, %s112
      %p121 = scmp.eq.s32.totalorder %s21, 0
      %p122 = por %p120, %p121
      %p123 = scmp.ne.s32.totalorder %s111, %s112
      %p124 = scmp.eq.s32.totalorder %s22, 3
      %p125 = por %p123, %p124
      %p127 = scmp.ne.s32.totalorder %s112, %s126
      %p128 = scmp.eq.s32.totalorder %s22, 0
      %p129 = por %p127, %p128
      %s131 = sadd.s32 %s130, 1
      %p134 = scmp.eq.s32.totalorder %s16, 3
      %p135 = scmp.ne.s32.totalorder %s130, %s132
      %p136 = scmp.eq.s32.totalorder %s16, 0
      %p137 = por %p135, %p136
      %p138 = scmp.ne.s32.totalorder %s130, %s132
      %p139 = scmp.eq.s32.totalorder %s21, 3
      %p140 = por %p138, %p139
      %p141 = scmp.ne.s32.totalorder %s132, %s133
      %p142 = scmp.eq.s32.totalorder %s21, 0
      %p143 = por %p141, %p142
      %p144 = scmp.ne.s32.totalorder %s132, %s133
      %p145 = scmp.eq.s32.totalorder %s22, 3
      %p146 = por %p144, %p145
      %p148 = scmp.ne.s32.totalorder %s133, %s147
      %p149 = scmp.eq.s32.totalorder %s22, 0
      %p150 = por %p148, %p149
      %s152 = sadd.s32 %s151, 1
      %p155 = scmp.eq.s32.totalorder %s16, 3
      %p156 = scmp.ne.s32.totalorder %s151, %s153
      %p157 = scmp.eq.s32.totalorder %s16, 0
      %p158 = por %p156, %p157
      %p159 = scmp.ne.s32.totalorder %s151, %s153
      %p160 = scmp.eq.s32.totalorder %s21, 3
      %p161 = por %p159, %p160
      %p162 = scmp.ne.s32.totalorder %s153, %s154
      %p163 = scmp.eq.s32.totalorder %s21, 0
      %p164 = por %p162, %p163
      %p165 = scmp.ne.s32.totalorder %s153, %s154
      %p166 = scmp.eq.s32.totalorder %s22, 3
      %p167 = por %p165, %p166
      %p169 = scmp.ne.s32.totalorder %s154, %s168
      %p170 = scmp.eq.s32.totalorder %s22, 0
      %p171 = por %p169, %p170
      %s172 = ssub.s32 %s24, %s31
      %p173 = scmp.eq.s32.totalorder %s172, 0
      %s175 = sadd.s32 %s174, 1
      %s176 = scalar_select %p173, %s174, %s175
      %p179 = pneg %p173
      %p180 = scmp.eq.s32.totalorder %s16, 3
      %p181 = por %p179, %p180
      %p182 = scmp.ne.s32.totalorder %s174, %s177
      %p183 = scmp.eq.s32.totalorder %s16, 0
      %p184 = por %p182, %p183
      %p185 = scmp.ne.s32.totalorder %s174, %s177
      %p186 = scmp.eq.s32.totalorder %s21, 3
      %p187 = por %p185, %p186
      %p188 = scmp.ne.s32.totalorder %s177, %s178
      %p189 = scmp.eq.s32.totalorder %s21, 0
      %p190 = por %p188, %p189
      %p191 = scmp.ne.s32.totalorder %s177, %s178
      %p192 = scmp.eq.s32.totalorder %s22, 3
      %p193 = por %p191, %p192
      %p195 = scmp.ne.s32.totalorder %s178, %s194
      %p196 = scmp.eq.s32.totalorder %s22, 0
      %p197 = por %p195, %p196
      %s198 = ssub.s32 %s24, %s31
      %p199 = scmp.eq.s32.totalorder %s198, 0
      %s201 = sadd.s32 %s200, 1
      %s202 = scalar_select %p199, %s200, %s201
      %p205 = pneg %p199
      %p206 = scmp.eq.s32.totalorder %s16, 3
      %p207 = por %p205, %p206
      %p208 = scmp.ne.s32.totalorder %s200, %s203
      %p209 = scmp.eq.s32.totalorder %s16, 0
      %p210 = por %p208, %p209
      %p211 = scmp.ne.s32.totalorder %s200, %s203
      %p212 = scmp.eq.s32.totalorder %s21, 3
      %p213 = por %p211, %p212
      %p214 = scmp.ne.s32.totalorder %s203, %s204
      %p215 = scmp.eq.s32.totalorder %s21, 0
      %p216 = por %p214, %p215
      %p217 = scmp.ne.s32.totalorder %s203, %s204
      %p218 = scmp.eq.s32.totalorder %s22, 3
      %p219 = por %p217, %p218
      %p221 = scmp.ne.s32.totalorder %s204, %s220
      %p222 = scmp.eq.s32.totalorder %s22, 0
      %p223 = por %p221, %p222
      %s224 = ssub.s32 %s24, %s31
      %p225 = scmp.eq.s32.totalorder %s224, 0
      %s227 = sadd.s32 %s226, 1
      %s228 = scalar_select %p225, %s226, %s227
      %p231 = pneg %p225
      %p232 = scmp.eq.s32.totalorder %s16, 3
      %p233 = por %p231, %p232
      %p234 = scmp.ne.s32.totalorder %s226, %s229
      %p235 = scmp.eq.s32.totalorder %s16, 0
      %p236 = por %p234, %p235
      %p237 = scmp.ne.s32.totalorder %s226, %s229
      %p238 = scmp.eq.s32.totalorder %s21, 3
      %p239 = por %p237, %p238
      %p240 = scmp.ne.s32.totalorder %s229, %s230
      %p241 = scmp.eq.s32.totalorder %s21, 0
      %p242 = por %p240, %p241
      %p243 = scmp.ne.s32.totalorder %s229, %s230
      %p244 = scmp.eq.s32.totalorder %s22, 3
      %p245 = por %p243, %p244
      %p247 = scmp.ne.s32.totalorder %s230, %s246
      %p248 = scmp.eq.s32.totalorder %s22, 0
      %p249 = por %p247, %p248
      %s251 = sadd.s32 %s250, 1
      %p254 = scmp.eq.s32.totalorder %s16, 3
      %p255 = scmp.ne.s32.totalorder %s250, %s252
      %p256 = scmp.eq.s32.totalorder %s16, 0
      %p257 = por %p255, %p256
      %p258 = scmp.ne.s32.totalorder %s250, %s252
      %p259 = scmp.eq.s32.totalorder %s21, 3
      %p260 = por %p258, %p259
      %p261 = scmp.ne.s32.totalorder %s252, %s253
      %p262 = scmp.eq.s32.totalorder %s21, 0
      %p263 = por %p261, %p262
      %p264 = scmp.ne.s32.totalorder %s252, %s253
      %p265 = scmp.eq.s32.totalorder %s22, 3
      %p266 = por %p264, %p265
      %p268 = scmp.ne.s32.totalorder %s253, %s267
      %p269 = scmp.eq.s32.totalorder %s22, 0
      %p270 = por %p268, %p269
      %s271 = ssub.s32 %s23, %s35
      %p272 = scmp.eq.s32.totalorder %s271, 0
      %s274 = sadd.s32 %s273, 1
      %s275 = scalar_select %p272, %s273, %s274
      %p278 = pneg %p272
      %p279 = scmp.eq.s32.totalorder %s16, 3
      %p280 = por %p278, %p279
      %p281 = scmp.ne.s32.totalorder %s273, %s276
      %p282 = scmp.eq.s32.totalorder %s16, 0
      %p283 = por %p281, %p282
      %p284 = scmp.ne.s32.totalorder %s273, %s276
      %p285 = scmp.eq.s32.totalorder %s21, 3
      %p286 = por %p284, %p285
      %p287 = scmp.ne.s32.totalorder %s276, %s277
      %p288 = scmp.eq.s32.totalorder %s21, 0
      %p289 = por %p287, %p288
      %p290 = scmp.ne.s32.totalorder %s276, %s277
      %p291 = scmp.eq.s32.totalorder %s22, 3
      %p292 = por %p290, %p291
      %p294 = scmp.ne.s32.totalorder %s277, %s293
      %p295 = scmp.eq.s32.totalorder %s22, 0
      %p296 = por %p294, %p295
      %p297 = scmp.le.s32.totalorder 1, %s16
      %p298 = scmp.lt.s32.totalorder %s16, 5
      %p299 = pnand %p297, %p298
      %p300 = pneg %p299
      // Predicated region
      $region9: #{gpt2_forward.9} parent=5 // pred_check
        _
      $region10: #{gpt2_forward.9} parent=5 // pred_check_branch
        %302 = sbr.rel (%p299) target = $region12
      $region11: #{gpt2_forward.9} parent=5 // pred_region
        %s303 = ssub.s32 %s16, 1
        // Predicated region
        $region13: #{gpt2_forward.9} parent=11 // pred_check
          %p304 = pneg %p101
        $region14: #{gpt2_forward.9} parent=11 // pred_check_branch
          %306 = sbr.rel (%p304) target = $region16
        $region15: #{gpt2_forward.9} parent=11 // pred_region
          _
        $region16: #{gpt2_forward.9} parent=11 // pred_fallthru
          _
        // Predicated region
        $region17: #{gpt2_forward.9} parent=11 // pred_check
          %p307 = pneg %p122
        $region18: #{gpt2_forward.9} parent=11 // pred_check_branch
          %309 = sbr.rel (%p307) target = $region20
        $region19: #{gpt2_forward.9} parent=11 // pred_region
          _
        $region20: #{gpt2_forward.9} parent=11 // pred_fallthru
          _
        // Predicated region
        $region21: #{gpt2_forward.9} parent=11 // pred_check
          %p310 = pneg %p143
        $region22: #{gpt2_forward.9} parent=11 // pred_check_branch
          %312 = sbr.rel (%p310) target = $region24
        $region23: #{gpt2_forward.9} parent=11 // pred_region
          _
        $region24: #{gpt2_forward.9} parent=11 // pred_fallthru
          _
        // Predicated region
        $region25: #{gpt2_forward.9} parent=11 // pred_check
          %p313 = pneg %p164
        $region26: #{gpt2_forward.9} parent=11 // pred_check_branch
          %315 = sbr.rel (%p313) target = $region28
        $region27: #{gpt2_forward.9} parent=11 // pred_region
          _
        $region28: #{gpt2_forward.9} parent=11 // pred_fallthru
          _
        // Predicated region
        $region29: #{gpt2_forward.9} parent=11 // pred_check
          %p316 = pneg %p263
        $region30: #{gpt2_forward.9} parent=11 // pred_check_branch
          %318 = sbr.rel (%p316) target = $region32
        $region31: #{gpt2_forward.9} parent=11 // pred_region
          _
        $region32: #{gpt2_forward.9} parent=11 // pred_fallthru
          _
      $region12: #{gpt2_forward.9} parent=5 // pred_fallthru
        _
      %p319 = scmp.lt.s32.totalorder %s16, 4
      // Predicated region
      $region33: #{gpt2_forward.9} parent=5 // pred_check
        %p320 = pneg %p319
      $region34: #{gpt2_forward.9} parent=5 // pred_check_branch
        %322 = sbr.rel (%p320) target = $region36
      $region35: #{gpt2_forward.9} parent=5 // pred_region
        // Predicated region
        $region37: #{gpt2_forward.9} parent=35 // pred_check
          %p323 = pneg %p48
        $region38: #{gpt2_forward.9} parent=35 // pred_check_branch
          %325 = sbr.rel (%p323) target = $region40
        $region39: #{gpt2_forward.9} parent=35 // pred_region
          %s326 = smul.u32 4, %s23
          %p327 = scmp.lt.s32.totalorder %s326, 7
          %s328 = scalar_select %p327, %s326, 7
          %s329 = smul.addr %s328, 8
          %s330 = scalar_lea.vmem %s0, %s329
          %s331 = smul.u32 4, %s23
        $region40: #{gpt2_forward.9} parent=35 // pred_fallthru
          _
        // Predicated region
        $region41: #{gpt2_forward.9} parent=35 // pred_check
          %p332 = pneg %p74
        $region42: #{gpt2_forward.9} parent=35 // pred_check_branch
          %334 = sbr.rel (%p332) target = $region44
        $region43: #{gpt2_forward.9} parent=35 // pred_region
          %s335 = smul.u32 4, %s23
          %p336 = scmp.lt.s32.totalorder %s335, 7
          %s337 = scalar_select %p336, %s335, 7
          %s338 = smul.addr %s337, 4
          %s339 = scalar_lea.vmem %s1, %s338
          %s340 = smul.u32 4, %s23
        $region44: #{gpt2_forward.9} parent=35 // pred_fallthru
          _
        // Predicated region
        $region45: #{gpt2_forward.9} parent=35 // pred_check
          %p341 = pneg %p184
        $region46: #{gpt2_forward.9} parent=35 // pred_check_branch
          %343 = sbr.rel (%p341) target = $region48
        $region47: #{gpt2_forward.9} parent=35 // pred_region
          %s344 = sand.u32 %s174, 1
          %s345 = sand.u32 %s174, 1
          %s346 = smul.addr %s345, 32
          %s347 = scalar_lea.vmem [#allocation5], %s346
          %s348 = smul.addr %s24, 4
          %s349 = scalar_lea.vmem %s6, %s348
          // Predicated region
          $region49: #{gpt2_forward.9} parent=47 // pred_check
            _
          $region50: #{gpt2_forward.9} parent=47 // pred_check_branch
            %351 = sbr.rel (0) target = $region52
          $region51: #{gpt2_forward.9} parent=47 // pred_region
            // Predicated region
            $region53: #{gpt2_forward.9} parent=51 // pred_check
              _
            $region54: #{gpt2_forward.9} parent=51 // pred_check_branch
              %353 = sbr.rel target = $region56
            $region55: #{gpt2_forward.9} parent=51 // pred_region
              // Predicated region
              $region68: #{gpt2_forward.9} parent=55 // pred_check
                _
              $region69: #{gpt2_forward.9} parent=55 // pred_check_branch
                %383 = sbr.rel (0) target = $region71
              $region70: #{gpt2_forward.9} parent=55 // pred_region
                loop: start=0, step=1, limit=1
                $region72: #{gpt2_forward.9} parent=70 // loop_pre_header
                  _
                $region73: #{gpt2_forward.9} parent=70 // loop_header
                  %s385 = sphi 0, %s389
                  %p386 = scmp.ge.s32.totalorder %s385, 1
                  %s390 = sphi %s349, %s349
                  %s391 = sphi %s347, %s347
                $region74: #{gpt2_forward.9} parent=70 // loop_header_branch
                  %388 = sbr.rel (%p386) target = $region78
                $region75: #{gpt2_forward.9} parent=70 // loop_body
                  _
                $region76: #{gpt2_forward.9} parent=70 // loop_footer
                  %s389 = sadd.s32 1, %s385
                $region77: #{gpt2_forward.9} parent=70 // loop_footer_branch
                  %384 = sbr.rel target = $region73
                $region78: #{gpt2_forward.9} parent=70 // loop_exit
                  _
                %s393 = ssub.s32 16, 1
                loop: start=0, step=1, limit=1
                $region79: #{gpt2_forward.9} parent=70 // loop_pre_header
                  _
                $region80: #{gpt2_forward.9} parent=70 // loop_header
                  %s395 = sphi 0, %s399
                  %p396 = scmp.ge.s32.totalorder %s395, 1
                  %s400 = sphi %s349, %s349
                  %s401 = sphi %s347, %s347
                $region81: #{gpt2_forward.9} parent=70 // loop_header_branch
                  %398 = sbr.rel (%p396) target = $region85
                $region82: #{gpt2_forward.9} parent=70 // loop_body
                  %v402 = vld [vmem:[%s400] sm:%s393]
                  %403 = vst [vmem:[%s401] sm:%s393] %v402
                  %v404 = vld [vmem:[%s400 + $0x8] sm:%s393]
                  %405 = vst [vmem:[%s401 + $0x4] sm:%s393] %v404
                  %v406 = vld [vmem:[%s400 + $0x10] sm:%s393]
                  %407 = vst [vmem:[%s401 + $0x8] sm:%s393] %v406
                  %v408 = vld [vmem:[%s400 + $0x18] sm:%s393]
                  %409 = vst [vmem:[%s401 + $0xc] sm:%s393] %v408
                  %v410 = vld [vmem:[%s400 + $0x20] sm:%s393]
                  %411 = vst [vmem:[%s401 + $0x10] sm:%s393] %v410
                  %v412 = vld [vmem:[%s400 + $0x28] sm:%s393]
                  %413 = vst [vmem:[%s401 + $0x14] sm:%s393] %v412
                  %v414 = vld [vmem:[%s400 + $0x30] sm:%s393]
                  %415 = vst [vmem:[%s401 + $0x18] sm:%s393] %v414
                  %v416 = vld [vmem:[%s400 + $0x38] sm:%s393]
                  %417 = vst [vmem:[%s401 + $0x1c] sm:%s393] %v416
                $region83: #{gpt2_forward.9} parent=70 // loop_footer
                  %s399 = sadd.s32 1, %s395
                $region84: #{gpt2_forward.9} parent=70 // loop_footer_branch
                  %394 = sbr.rel target = $region80
                $region85: #{gpt2_forward.9} parent=70 // loop_exit
                  _
              $region71: #{gpt2_forward.9} parent=55 // pred_fallthru
                _
            $region56: #{gpt2_forward.9} parent=51 // pred_fallthru
              _
            // Predicated region
            $region57: #{gpt2_forward.9} parent=51 // pred_check
              _
            $region58: #{gpt2_forward.9} parent=51 // pred_check_branch
              %355 = sbr.rel (0) target = $region60
            $region59: #{gpt2_forward.9} parent=51 // pred_region
              %s357 = ssub.s32 16, 1
              loop: start=0, step=1, limit=1
              $region61: #{gpt2_forward.9} parent=59 // loop_pre_header
                _
              $region62: #{gpt2_forward.9} parent=59 // loop_header
                %s359 = sphi 0, %s363
                %p360 = scmp.ge.s32.totalorder %s359, 1
                %s364 = sphi %s349, %s349
                %s365 = sphi %s347, %s347
              $region63: #{gpt2_forward.9} parent=59 // loop_header_branch
                %362 = sbr.rel (%p360) target = $region67
              $region64: #{gpt2_forward.9} parent=59 // loop_body
                %v366 = vld [vmem:[%s364] sm:%s357]
                %367 = vst [vmem:[%s365] sm:%s357] %v366
                %v368 = vld [vmem:[%s364 + $0x8] sm:%s357]
                %369 = vst [vmem:[%s365 + $0x4] sm:%s357] %v368
                %v370 = vld [vmem:[%s364 + $0x10] sm:%s357]
                %371 = vst [vmem:[%s365 + $0x8] sm:%s357] %v370
                %v372 = vld [vmem:[%s364 + $0x18] sm:%s357]
                %373 = vst [vmem:[%s365 + $0xc] sm:%s357] %v372
                %v374 = vld [vmem:[%s364 + $0x20] sm:%s357]
                %375 = vst [vmem:[%s365 + $0x10] sm:%s357] %v374
                %v376 = vld [vmem:[%s364 + $0x28] sm:%s357]
                %377 = vst [vmem:[%s365 + $0x14] sm:%s357] %v376
                %v378 = vld [vmem:[%s364 + $0x30] sm:%s357]
                %379 = vst [vmem:[%s365 + $0x18] sm:%s357] %v378
                %v380 = vld [vmem:[%s364 + $0x38] sm:%s357]
                %381 = vst [vmem:[%s365 + $0x1c] sm:%s357] %v380
              $region65: #{gpt2_forward.9} parent=59 // loop_footer
                %s363 = sadd.s32 1, %s359
              $region66: #{gpt2_forward.9} parent=59 // loop_footer_branch
                %358 = sbr.rel target = $region62
              $region67: #{gpt2_forward.9} parent=59 // loop_exit
                _
            $region60: #{gpt2_forward.9} parent=51 // pred_fallthru
              _
          $region52: #{gpt2_forward.9} parent=47 // pred_fallthru
            _
          %418 = vnop
        $region48: #{gpt2_forward.9} parent=35 // pred_fallthru
          _
        // Predicated region
        $region86: #{gpt2_forward.9} parent=35 // pred_check
          %p419 = pneg %p210
        $region87: #{gpt2_forward.9} parent=35 // pred_check_branch
          %421 = sbr.rel (%p419) target = $region89
        $region88: #{gpt2_forward.9} parent=35 // pred_region
          %p422 = scmp.lt.s32.totalorder %s24, 1
          %s423 = scalar_select %p422, %s24, 1
          %s424 = scalar_lea.vmem %s7, %s423
        $region89: #{gpt2_forward.9} parent=35 // pred_fallthru
          _
        // Predicated region
        $region90: #{gpt2_forward.9} parent=35 // pred_check
          %p425 = pneg %p236
        $region91: #{gpt2_forward.9} parent=35 // pred_check_branch
          %427 = sbr.rel (%p425) target = $region93
        $region92: #{gpt2_forward.9} parent=35 // pred_region
          %s428 = smul.u32 16, %s24
          %p429 = scmp.lt.s32.totalorder %s428, 31
          %s430 = scalar_select %p429, %s428, 31
          %s431 = smul.addr %s430, 4
          %s432 = scalar_lea.vmem %s8, %s431
          %s433 = smul.u32 16, %s24
        $region93: #{gpt2_forward.9} parent=35 // pred_fallthru
          _
      $region36: #{gpt2_forward.9} parent=5 // pred_fallthru
        _
      %p434 = scmp.le.s32.totalorder 1, %s16
      %p435 = scmp.lt.s32.totalorder %s16, 5
      %p436 = pnand %p434, %p435
      %p437 = pneg %p436
      // Predicated region
      $region94: #{gpt2_forward.9} parent=5 // pred_check
        _
      $region95: #{gpt2_forward.9} parent=5 // pred_check_branch
        %439 = sbr.rel (%p436) target = $region97
      $region96: #{gpt2_forward.9} parent=5 // pred_region
        %s440 = ssub.s32 %s16, 1
        %s441 = sand.u32 %s177, 1
        %s442 = sand.u32 %s177, 1
        %s443 = smul.addr %s442, 32
        %s444 = scalar_lea.vmem [#allocation5], %s443
        // Predicated region
        $region98: #{gpt2_forward.9} parent=96 // pred_check
          %p445 = pneg %p190
        $region99: #{gpt2_forward.9} parent=96 // pred_check_branch
          %447 = sbr.rel (%p445) target = $region101
        $region100: #{gpt2_forward.9} parent=96 // pred_region
          _
        $region101: #{gpt2_forward.9} parent=96 // pred_fallthru
          _
        %s448 = smul.u32 4, %s25
        %p449 = scmp.lt.s32.totalorder %s448, 7
        %s450 = scalar_select %p449, %s448, 7
        %s451 = smul.addr %s450, 8
        %s452 = scalar_lea.vmem %s0, %s451
        %p453 = pneg %p54
        %p454 = pneg %p51
        %s455 = smul.u32 4, %s25
        %p456 = scmp.lt.s32.totalorder %s455, 7
        %s457 = scalar_select %p456, %s455, 7
        %s458 = smul.addr %s457, 4
        %s459 = scalar_lea.vmem %s1, %s458
        %p460 = pneg %p80
        %p461 = pneg %p77
        %p462 = pneg %p101
        %p463 = pneg %p98
        %p464 = pneg %p122
        %p465 = pneg %p119
        %p466 = pneg %p143
        %p467 = pneg %p140
        %p468 = pneg %p164
        %p469 = pneg %p161
        %s470 = sand.u32 %s177, 1
        %s471 = sand.u32 %s177, 1
        %s472 = smul.addr %s471, 32
        %s473 = scalar_lea.vmem [#allocation5], %s472
        %p474 = pneg %p190
        %p475 = pneg %p187
        %p476 = scmp.lt.s32.totalorder %s26, 1
        %s477 = scalar_select %p476, %s26, 1
        %s478 = scalar_lea.vmem %s7, %s477
        %p479 = pneg %p216
        %p480 = pneg %p213
        %s481 = smul.u32 16, %s26
        %p482 = scmp.lt.s32.totalorder %s481, 31
        %s483 = scalar_select %p482, %s481, 31
        %s484 = smul.addr %s483, 4
        %s485 = scalar_lea.vmem %s8, %s484
        %p486 = pneg %p242
        %p487 = pneg %p239
        %p488 = pneg %p263
        %p489 = pneg %p260
        %p490 = pneg %p289
        %p491 = pneg %p286
        %s492 = smul.u32 4, %s25
        %p493 = scmp.lt.s32.totalorder %s492, 7
        %s494 = scalar_select %p493, %s492, 7
        %s495 = smul.addr %s494, 8
        %s496 = scalar_lea.vmem %s10, %s495
        %s497 = smul.u32 4, %s25
        %p498 = scmp.lt.s32.totalorder %s497, 7
        %s499 = scalar_select %p498, %s497, 7
        %s500 = smul.addr %s499, 8
        %s501 = scalar_lea.vmem %s0, %s500
        %s502 = smul.u32 4, %s25
        %s503 = smul.u32 4, %s25
        %p504 = scmp.lt.s32.totalorder %s503, 7
        %s505 = scalar_select %p504, %s503, 7
        %s506 = smul.addr %s505, 4
        %s507 = scalar_lea.vmem %s1, %s506
        %s508 = smul.u32 4, %s25
        %p509 = scmp.lt.s32.totalorder %s26, 1
        %s510 = scalar_select %p509, %s26, 1
        %s511 = scalar_lea.vmem %s7, %s510
        %s512 = smul.u32 16, %s26
        %p513 = scmp.lt.s32.totalorder %s512, 31
        %s514 = scalar_select %p513, %s512, 31
        %s515 = smul.addr %s514, 4
        %s516 = scalar_lea.vmem %s8, %s515
        %s517 = smul.u32 16, %s26
        %s518 = smul.u32 4, %s25
        %p519 = scmp.lt.s32.totalorder %s518, 7
        %s520 = scalar_select %p519, %s518, 7
        %s521 = smul.addr %s520, 8
        %s522 = scalar_lea.vmem %s10, %s521
        %s523 = smul.u32 4, %s25
        %p525 = scmp.eq.s32.totalorder %s26, 0
        // Predicated region
        $region102: #{gpt2_forward.9} parent=96 // pred_check
          %p526 = pneg %p525
        $region103: #{gpt2_forward.9} parent=96 // pred_check_branch
          %528 = sbr.rel (%p526) target = $region105
        $region104: #{gpt2_forward.9} parent=96 // pred_region
          %v529 = vld [vmem:[%s507] sm:$0xf]
          %v530 = vld [vmem:[%s507 + $0x4] sm:$0xf]
          %v531 = vld [vmem:[%s507 + $0x8] sm:$0xf]
          %v532 = vld [vmem:[%s507 + $0xc] sm:$0xf]
          %v533 = vld [vmem:[%s2] sm:$0xf]
          %v534 = vld [vmem:[%s2 + $0x4] sm:$0xf]
          %v535 = vld [vmem:[%s2 + $0x8] sm:$0xf]
          %v536 = vld [vmem:[%s2 + $0xc] sm:$0xf]
          %v537 = vld [vmem:[%s2 + $0x10] sm:$0xf]
          %v538 = vld [vmem:[%s2 + $0x14] sm:$0xf]
          %v539 = vld [vmem:[%s2 + $0x18] sm:$0xf]
          %v540 = vld [vmem:[%s2 + $0x1c] sm:$0xf]
          %v541 = vld [vmem:[%s3] sm:$0x1]
          %v543 = vlaneseq
          %v544 = vshrl.u32 %v543, 7
          %v545 = vsub.s32 0, %v544
          %v546 = vrot.slane %v541, %v545
          %v552 = vunpack.c.l.b16 %v529
          %v553 = vunpack.c.l.b16 %v530
          %v554 = vunpack.c.l.b16 %v531
          %v555 = vunpack.c.l.b16 %v532
          %v556 = vpack.c.b16 %v553, %v552
          %v557 = vpack.c.b16 %v555, %v554
          %v566 = vunpack.c.l.b16 %v533
          %v567 = vunpack.c.l.b16 %v534
          %v568 = vunpack.c.l.b16 %v535
          %v569 = vunpack.c.l.b16 %v536
          %v570 = vunpack.c.l.b16 %v537
          %v571 = vunpack.c.l.b16 %v538
          %v572 = vunpack.c.l.b16 %v539
          %v573 = vunpack.c.l.b16 %v540
          %v574 = vpack.c.b16 %v567, %v566
          %v575 = vpack.c.b16 %v569, %v568
          %v576 = vpack.c.b16 %v571, %v570
          %v577 = vpack.c.b16 %v573, %v572
          %vm582 = vcmask 523264
          %v584 = vsel %vm582, %v556, 0
          %v587 = vsel %vm582, %v557, 0
          %589 = vmatprep.subr.bf16.mxu0 0
          %590 = vmatpush1.bf16.msra.mxu0 0
          %591 = vmatprep.subr.bf16.mxu0 0
          %592 = vmatpush1.bf16.msra.mxu0 0
          %593 = vmatprep.subr.bf16.mxu0 0
          %594 = vmatpush1.bf16.msra.mxu0 0
          %595 = vmatprep.subr.bf16.mxu0 0
          %596 = vmatpush1.bf16.msra.mxu0 0
          %597 = vmatprep.subr.bf16.mxu0 0
          %598 = vmatpush1.bf16.msra.mxu0 %v577
          %599 = vmatprep.subr.bf16.mxu0 0
          %600 = vmatpush1.bf16.msra.mxu0 %v576
          %601 = vmatprep.subr.bf16.mxu0 0
          %602 = vmatpush1.bf16.msra.mxu0 %v575
          %603 = vmatprep.subr.bf16.mxu0 0
          %604 = vmatpush1.bf16.msra.mxu0 %v574
          %605 = vmatprep.subr.bf16.mxu0 0
          %606 = vmatpush2.bf16.msra.mxu0 0
          %607 = vmatprep.subr.bf16.mxu0 0
          %608 = vmatpush2.bf16.msra.mxu0 0
          %609 = vmatprep.subr.bf16.mxu0 0
          %610 = vmatpush2.bf16.msra.mxu0 0
          %611 = vmatprep.subr.bf16.mxu0 0
          %612 = vmatpush2.bf16.msra.mxu0 0
          %613 = vmatprep.subr.bf16.mxu0 0
          %614 = vmatpush2.bf16.msra.mxu0 0
          %615 = vmatprep.subr.bf16.mxu0 0
          %616 = vmatpush2.bf16.msra.mxu0 0
          %617 = vmatprep.subr.bf16.mxu0 0
          %618 = vmatpush2.bf16.msra.mxu0 0
          %619 = vmatprep.subr.bf16.mxu0 0
          %620 = vmatpush2.bf16.msra.mxu0 0
          %621 = vmatprep.mubr.bf16.mxu0 0
          %622 = vmatmul.mubr.bf16.gmra.mxu0 %v584
          %v623 = vpop.f32.mrf.mxu0
          %v624 = vadd.f32 %v546, %v623
          %v625 = vpop.f32.mrf.mxu0
          %v626 = vpop.f32.mrf.mxu0
          %v627 = vadd.f32 %v546, %v626
          %v628 = vpop.f32.mrf.mxu0
          %629 = vmatprep.mubr.bf16.mxu0 0
          %630 = vmatmul.mubr.bf16.gmra.mxu0 %v587
          %v631 = vpop.f32.mrf.mxu0
          %v632 = vadd.f32 %v546, %v631
          %v633 = vpop.f32.mrf.mxu0
          %v634 = vpop.f32.mrf.mxu0
          %v635 = vadd.f32 %v546, %v634
          %v636 = vpop.f32.mrf.mxu0
          %637 = vdwg.mxu0
          %v638 = vld [vmem:[%s501] sm:$0xff]
          %v639 = vld [vmem:[%s501 + $0x8] sm:$0xff]
          %v640 = vld [vmem:[%s501 + $0x10] sm:$0xff]
          %v641 = vld [vmem:[%s501 + $0x18] sm:$0xff]
          %v642 = vadd.f32 %v638, %v624
          %v643 = vadd.f32 %v639, %v627
          %v644 = vadd.f32 %v640, %v632
          %v645 = vadd.f32 %v641, %v635
          %646 = vst.msk [vmem:[#allocation2] sm:$0xff] %vm582, %v642
          %647 = vst.msk [vmem:[#allocation2 + $0x8] sm:$0xff] %vm582, %v643
          %648 = vst.msk [vmem:[#allocation2 + $0x10] sm:$0xff] %vm582, %v644
          %649 = vst.msk [vmem:[#allocation2 + $0x18] sm:$0xff] %vm582, %v645
          %v650 = vld [vmem:[%s4] sm:$0x1]
          %v651 = vld [vmem:[%s5] sm:$0x1]
          %v652 = vsel %vm582, %v642, 0.0
          %653 = vadd.xlane.f32.xlu0 %v652
          %v654 = vpop.xlane.xlu0 %653
          %v655 = vsel %vm582, %v643, 0.0
          %656 = vadd.xlane.f32.xlu0 %v655
          %v657 = vpop.xlane.xlu0 %656
          %v658 = vsel %vm582, %v644, 0.0
          %659 = vadd.xlane.f32.xlu0 %v658
          %v660 = vpop.xlane.xlu0 %659
          %v661 = vsel %vm582, %v645, 0.0
          %662 = vadd.xlane.f32.xlu0 %v661
          %v663 = vpop.xlane.xlu0 %662
          %v664 = vrcp.pop 64.0
          %v665 = vmul.f32 %v654, %v664
          %v666 = vmul.f32 %v657, %v664
          %v667 = vmul.f32 %v660, %v664
          %v668 = vmul.f32 %v663, %v664
          %v669 = vsub.f32 %v642, %v665
          %v670 = vsub.f32 %v643, %v666
          %v671 = vsub.f32 %v644, %v667
          %v672 = vsub.f32 %v645, %v668
          %v673 = vmul.f32 %v669, %v669
          %v674 = vmul.f32 %v670, %v670
          %v675 = vmul.f32 %v671, %v671
          %v676 = vmul.f32 %v672, %v672
          %v677 = vsel %vm582, %v673, 0.0
          %678 = vadd.xlane.f32.xlu0 %v677
          %v679 = vpop.xlane.xlu0 %678
          %v680 = vsel %vm582, %v674, 0.0
          %681 = vadd.xlane.f32.xlu0 %v680
          %v682 = vpop.xlane.xlu0 %681
          %v683 = vsel %vm582, %v675, 0.0
          %684 = vadd.xlane.f32.xlu0 %v683
          %v685 = vpop.xlane.xlu0 %684
          %v686 = vsel %vm582, %v676, 0.0
          %687 = vadd.xlane.f32.xlu0 %v686
          %v688 = vpop.xlane.xlu0 %687
          %v689 = vmul.f32 %v679, %v664
          %v690 = vmul.f32 %v682, %v664
          %v691 = vmul.f32 %v685, %v664
          %v692 = vmul.f32 %v688, %v664
          %v693 = vadd.f32 %v689, 1e-05
          %v694 = vadd.f32 %v690, 1e-05
          %v695 = vadd.f32 %v691, 1e-05
          %v696 = vadd.f32 %v692, 1e-05
          %v697 = vrsqrt.pop %v693
          %v698 = vrsqrt.pop %v694
          %v699 = vrsqrt.pop %v695
          %v700 = vrsqrt.pop %v696
          %v701 = vmul.f32 %v669, %v697
          %v702 = vmul.f32 %v670, %v698
          %v703 = vmul.f32 %v671, %v699
          %v704 = vmul.f32 %v672, %v700
          %v706 = vlaneseq
          %v707 = vshrl.u32 %v706, 7
          %v708 = vsub.s32 0, %v707
          %v709 = vrot.slane %v650, %v708
          %v711 = vmul.f32 %v701, %v709
          %v712 = vmul.f32 %v702, %v709
          %v713 = vmul.f32 %v703, %v709
          %v714 = vmul.f32 %v704, %v709
          %v716 = vlaneseq
          %v717 = vshrl.u32 %v716, 7
          %v718 = vsub.s32 0, %v717
          %v719 = vrot.slane %v651, %v718
          %v721 = vadd.f32 %v711, %v719
          %v722 = vadd.f32 %v712, %v719
          %v723 = vadd.f32 %v713, %v719
          %v724 = vadd.f32 %v714, %v719
          %v725 = vpack.c.bf16 %v722, %v721
          %v726 = vpack.c.bf16 %v724, %v723
          %v729 = vunpack.c.l.b16 %v725
          %v730 = vunpack.c.h.b16 %v725
          %v731 = vunpack.c.l.b16 %v726
          %v732 = vunpack.c.h.b16 %v726
          %v733 = vpack.c.b16 %v729, %v729
          %v734 = vpack.c.b16 %v730, %v730
          %v735 = vpack.c.b16 %v731, %v731
          %v736 = vpack.c.b16 %v732, %v732
          %vm741 = vcmask 519168
          %742 = vst.msk [vmem:[#allocation3] sm:$0xf] %vm741, %v733
          %743 = vst.msk [vmem:[#allocation3 + $0x4] sm:$0xf] %vm741, %v734
          %744 = vst.msk [vmem:[#allocation3 + $0x8] sm:$0xf] %vm741, %v735
          %745 = vst.msk [vmem:[#allocation3 + $0xc] sm:$0xf] %vm741, %v736
          %746 = vst.msk [vmem:[#allocation4] sm:$0xff] %vm582, 0.0
          %747 = vst.msk [vmem:[#allocation4 + $0x8] sm:$0xff] %vm582, 0.0
          %748 = vst.msk [vmem:[#allocation4 + $0x10] sm:$0xff] %vm582, 0.0
          %749 = vst.msk [vmem:[#allocation4 + $0x18] sm:$0xff] %vm582, 0.0
        $region105: #{gpt2_forward.9} parent=96 // pred_fallthru
          _
        %v750 = vld [vmem:[#allocation3] sm:$0xf]
        %v751 = vld [vmem:[#allocation3 + $0x4] sm:$0xf]
        %v752 = vld [vmem:[#allocation3 + $0x8] sm:$0xf]
        %v753 = vld [vmem:[#allocation3 + $0xc] sm:$0xf]
        %v754 = vld [vmem:[%s444] sm:$0xf]
        %v755 = vld [vmem:[%s444 + $0x4] sm:$0xf]
        %v756 = vld [vmem:[%s444 + $0x8] sm:$0xf]
        %v757 = vld [vmem:[%s444 + $0xc] sm:$0xf]
        %v758 = vld [vmem:[%s444 + $0x10] sm:$0xf]
        %v759 = vld [vmem:[%s444 + $0x14] sm:$0xf]
        %v760 = vld [vmem:[%s444 + $0x18] sm:$0xf]
        %v761 = vld [vmem:[%s444 + $0x1c] sm:$0xf]
        %v762 = vld [vmem:[%s511] sm:$0x1]
        %v764 = vlaneseq
        %v765 = vshrl.u32 %v764, 7
        %v766 = vsub.s32 0, %v765
        %v767 = vrot.slane %v762, %v766
        %v773 = vunpack.c.l.b16 %v750
        %v774 = vunpack.c.l.b16 %v751
        %v775 = vunpack.c.l.b16 %v752
        %v776 = vunpack.c.l.b16 %v753
        %v777 = vpack.c.b16 %v774, %v773
        %v778 = vpack.c.b16 %v776, %v775
        %v787 = vunpack.c.l.b16 %v754
        %v788 = vunpack.c.l.b16 %v755
        %v789 = vunpack.c.l.b16 %v756
        %v790 = vunpack.c.l.b16 %v757
        %v791 = vunpack.c.l.b16 %v758
        %v792 = vunpack.c.l.b16 %v759
        %v793 = vunpack.c.l.b16 %v760
        %v794 = vunpack.c.l.b16 %v761
        %v795 = vpack.c.b16 %v788, %v787
        %v796 = vpack.c.b16 %v790, %v789
        %v797 = vpack.c.b16 %v792, %v791
        %v798 = vpack.c.b16 %v794, %v793
        %vm803 = vcmask 523264
        %v805 = vsel %vm803, %v777, 0
        %v808 = vsel %vm803, %v778, 0
        %810 = vmatprep.subr.bf16.mxu0 0
        %811 = vmatpush1.bf16.msra.mxu0 0
        %812 = vmatprep.subr.bf16.mxu0 0
        %813 = vmatpush1.bf16.msra.mxu0 0
        %814 = vmatprep.subr.bf16.mxu0 0
        %815 = vmatpush1.bf16.msra.mxu0 0
        %816 = vmatprep.subr.bf16.mxu0 0
        %817 = vmatpush1.bf16.msra.mxu0 0
        %818 = vmatprep.subr.bf16.mxu0 0
        %819 = vmatpush1.bf16.msra.mxu0 %v798
        %820 = vmatprep.subr.bf16.mxu0 0
        %821 = vmatpush1.bf16.msra.mxu0 %v797
        %822 = vmatprep.subr.bf16.mxu0 0
        %823 = vmatpush1.bf16.msra.mxu0 %v796
        %824 = vmatprep.subr.bf16.mxu0 0
        %825 = vmatpush1.bf16.msra.mxu0 %v795
        %826 = vmatprep.subr.bf16.mxu0 0
        %827 = vmatpush2.bf16.msra.mxu0 0
        %828 = vmatprep.subr.bf16.mxu0 0
        %829 = vmatpush2.bf16.msra.mxu0 0
        %830 = vmatprep.subr.bf16.mxu0 0
        %831 = vmatpush2.bf16.msra.mxu0 0
        %832 = vmatprep.subr.bf16.mxu0 0
        %833 = vmatpush2.bf16.msra.mxu0 0
        %834 = vmatprep.subr.bf16.mxu0 0
        %835 = vmatpush2.bf16.msra.mxu0 0
        %836 = vmatprep.subr.bf16.mxu0 0
        %837 = vmatpush2.bf16.msra.mxu0 0
        %838 = vmatprep.subr.bf16.mxu0 0
        %839 = vmatpush2.bf16.msra.mxu0 0
        %840 = vmatprep.subr.bf16.mxu0 0
        %841 = vmatpush2.bf16.msra.mxu0 0
        %842 = vmatprep.mubr.bf16.mxu0 0
        %843 = vmatmul.mubr.bf16.gmra.mxu0 %v805
        %v844 = vpop.f32.mrf.mxu0
        %v845 = vadd.f32 %v767, %v844
        %v846 = vpop.f32.mrf.mxu0
        %v847 = vpop.f32.mrf.mxu0
        %v848 = vadd.f32 %v767, %v847
        %v849 = vpop.f32.mrf.mxu0
        %850 = vmatprep.mubr.bf16.mxu0 0
        %851 = vmatmul.mubr.bf16.gmra.mxu0 %v808
        %v852 = vpop.f32.mrf.mxu0
        %v853 = vadd.f32 %v767, %v852
        %v854 = vpop.f32.mrf.mxu0
        %v855 = vpop.f32.mrf.mxu0
        %v856 = vadd.f32 %v767, %v855
        %v857 = vpop.f32.mrf.mxu0
        %858 = vdwg.mxu0
        %v859 = vmul.f32 %v845, %v845
        %v860 = vmul.f32 %v848, %v848
        %v861 = vmul.f32 %v853, %v853
        %v862 = vmul.f32 %v856, %v856
        %v863 = vmul.f32 %v845, %v859
        %v864 = vmul.f32 %v848, %v860
        %v865 = vmul.f32 %v853, %v861
        %v866 = vmul.f32 %v856, %v862
        %v867 = vmul.f32 %v863, 0.044715
        %v868 = vmul.f32 %v864, 0.044715
        %v869 = vmul.f32 %v865, 0.044715
        %v870 = vmul.f32 %v866, 0.044715
        %v871 = vadd.f32 %v845, %v867
        %v872 = vadd.f32 %v848, %v868
        %v873 = vadd.f32 %v853, %v869
        %v874 = vadd.f32 %v856, %v870
        %v875 = vmul.f32 %v871, 0.7978846
        %v876 = vmul.f32 %v872, 0.7978846
        %v877 = vmul.f32 %v873, 0.7978846
        %v878 = vmul.f32 %v874, 0.7978846
        %v879 = vtanh.pop %v875
        %v880 = vtanh.pop %v876
        %v881 = vtanh.pop %v877
        %v882 = vtanh.pop %v878
        %v883 = vadd.f32 %v879, 1.0
        %v884 = vadd.f32 %v880, 1.0
        %v885 = vadd.f32 %v881, 1.0
        %v886 = vadd.f32 %v882, 1.0
        %v887 = vmul.f32 %v883, 0.5
        %v888 = vmul.f32 %v884, 0.5
        %v889 = vmul.f32 %v885, 0.5
        %v890 = vmul.f32 %v886, 0.5
        %v891 = vmul.f32 %v845, %v887
        %v892 = vmul.f32 %v848, %v888
        %v893 = vmul.f32 %v853, %v889
        %v894 = vmul.f32 %v856, %v890
        %v895 = vld [vmem:[#allocation4] sm:$0xff]
        %v896 = vld [vmem:[#allocation4 + $0x8] sm:$0xff]
        %v897 = vld [vmem:[#allocation4 + $0x10] sm:$0xff]
        %v898 = vld [vmem:[#allocation4 + $0x18] sm:$0xff]
        %v899 = vpack.c.bf16 %v892, %v891
        %v900 = vpack.c.bf16 %v894, %v893
        %v901 = vld [vmem:[%s516] sm:$0xf]
        %v902 = vld [vmem:[%s516 + $0x4] sm:$0xf]
        %v903 = vld [vmem:[%s516 + $0x8] sm:$0xf]
        %v904 = vld [vmem:[%s516 + $0xc] sm:$0xf]
        %v905 = vld [vmem:[%s516 + $0x10] sm:$0xf]
        %v906 = vld [vmem:[%s516 + $0x14] sm:$0xf]
        %v907 = vld [vmem:[%s516 + $0x18] sm:$0xf]
        %v908 = vld [vmem:[%s516 + $0x1c] sm:$0xf]
        %v909 = vld [vmem:[%s516 + $0x20] sm:$0xf]
        %v910 = vld [vmem:[%s516 + $0x24] sm:$0xf]
        %v911 = vld [vmem:[%s516 + $0x28] sm:$0xf]
        %v912 = vld [vmem:[%s516 + $0x2c] sm:$0xf]
        %v913 = vld [vmem:[%s516 + $0x30] sm:$0xf]
        %v914 = vld [vmem:[%s516 + $0x34] sm:$0xf]
        %v915 = vld [vmem:[%s516 + $0x38] sm:$0xf]
        %v916 = vld [vmem:[%s516 + $0x3c] sm:$0xf]
        %v933 = vunpack.c.l.b16 %v901
        %v934 = vunpack.c.l.b16 %v902
        %v935 = vunpack.c.l.b16 %v903
        %v936 = vunpack.c.l.b16 %v904
        %v937 = vunpack.c.l.b16 %v905
        %v938 = vunpack.c.l.b16 %v906
        %v939 = vunpack.c.l.b16 %v907
        %v940 = vunpack.c.l.b16 %v908
        %v941 = vunpack.c.l.b16 %v909
        %v942 = vunpack.c.l.b16 %v910
        %v943 = vunpack.c.l.b16 %v911
        %v944 = vunpack.c.l.b16 %v912
        %v945 = vunpack.c.l.b16 %v913
        %v946 = vunpack.c.l.b16 %v914
        %v947 = vunpack.c.l.b16 %v915
        %v948 = vunpack.c.l.b16 %v916
        %v949 = vpack.c.b16 %v934, %v933
        %v950 = vpack.c.b16 %v936, %v935
        %v951 = vpack.c.b16 %v938, %v937
        %v952 = vpack.c.b16 %v940, %v939
        %v953 = vpack.c.b16 %v942, %v941
        %v954 = vpack.c.b16 %v944, %v943
        %v955 = vpack.c.b16 %v946, %v945
        %v956 = vpack.c.b16 %v948, %v947
        %965 = vmatprep.subr.bf16.mxu0 0
        %966 = vmatpush1.bf16.msra.mxu0 %v956
        %967 = vmatprep.subr.bf16.mxu0 0
        %968 = vmatpush1.bf16.msra.mxu0 %v955
        %969 = vmatprep.subr.bf16.mxu0 0
        %970 = vmatpush1.bf16.msra.mxu0 %v954
        %971 = vmatprep.subr.bf16.mxu0 0
        %972 = vmatpush1.bf16.msra.mxu0 %v953
        %973 = vmatprep.subr.bf16.mxu0 0
        %974 = vmatpush1.bf16.msra.mxu0 %v952
        %975 = vmatprep.subr.bf16.mxu0 0
        %976 = vmatpush1.bf16.msra.mxu0 %v951
        %977 = vmatprep.subr.bf16.mxu0 0
        %978 = vmatpush1.bf16.msra.mxu0 %v950
        %979 = vmatprep.subr.bf16.mxu0 0
        %980 = vmatpush1.bf16.msra.mxu0 %v949
        %981 = vmatprep.subr.bf16.mxu0 0
        %982 = vmatpush2.bf16.msra.mxu0 0
        %983 = vmatprep.subr.bf16.mxu0 0
        %984 = vmatpush2.bf16.msra.mxu0 0
        %985 = vmatprep.subr.bf16.mxu0 0
        %986 = vmatpush2.bf16.msra.mxu0 0
        %987 = vmatprep.subr.bf16.mxu0 0
        %988 = vmatpush2.bf16.msra.mxu0 0
        %989 = vmatprep.subr.bf16.mxu0 0
        %990 = vmatpush2.bf16.msra.mxu0 0
        %991 = vmatprep.subr.bf16.mxu0 0
        %992 = vmatpush2.bf16.msra.mxu0 0
        %993 = vmatprep.subr.bf16.mxu0 0
        %994 = vmatpush2.bf16.msra.mxu0 0
        %995 = vmatprep.subr.bf16.mxu0 0
        %996 = vmatpush2.bf16.msra.mxu0 0
        %997 = vmatprep.mubr.bf16.mxu0 0
        %998 = vmatmul.mubr.bf16.gmra.mxu0 %v899
        %v999 = vpop.f32.mrf.mxu0
        %v1000 = vadd.f32 0.0, %v999
        %v1001 = vpop.f32.mrf.mxu0
        %v1002 = vpop.f32.mrf.mxu0
        %v1003 = vadd.f32 0.0, %v1002
        %v1004 = vpop.f32.mrf.mxu0
        %1005 = vmatprep.mubr.bf16.mxu0 0
        %1006 = vmatmul.mubr.bf16.gmra.mxu0 %v900
        %v1007 = vpop.f32.mrf.mxu0
        %v1008 = vadd.f32 0.0, %v1007
        %v1009 = vpop.f32.mrf.mxu0
        %v1010 = vpop.f32.mrf.mxu0
        %v1011 = vadd.f32 0.0, %v1010
        %v1012 = vpop.f32.mrf.mxu0
        %1013 = vdwg.mxu0
        %v1014 = vadd.f32 %v895, %v1000
        %v1015 = vadd.f32 %v896, %v1003
        %v1016 = vadd.f32 %v897, %v1008
        %v1017 = vadd.f32 %v898, %v1011
        %1018 = vst.msk [vmem:[#allocation4] sm:$0xff] %vm803, %v1014
        %1019 = vst.msk [vmem:[#allocation4 + $0x8] sm:$0xff] %vm803, %v1015
        %1020 = vst.msk [vmem:[#allocation4 + $0x10] sm:$0xff] %vm803, %v1016
        %1021 = vst.msk [vmem:[#allocation4 + $0x18] sm:$0xff] %vm803, %v1017
        %p1022 = scmp.eq.s32.totalorder %s26, 1
        // Predicated region
        $region106: #{gpt2_forward.9} parent=96 // pred_check
          %p1023 = pneg %p1022
        $region107: #{gpt2_forward.9} parent=96 // pred_check_branch
          %1025 = sbr.rel (%p1023) target = $region109
        $region108: #{gpt2_forward.9} parent=96 // pred_region
          %v1026 = vld [vmem:[#allocation2] sm:$0xff]
          %v1027 = vld [vmem:[#allocation2 + $0x8] sm:$0xff]
          %v1028 = vld [vmem:[#allocation2 + $0x10] sm:$0xff]
          %v1029 = vld [vmem:[#allocation2 + $0x18] sm:$0xff]
          %v1030 = vld [vmem:[#allocation4] sm:$0xff]
          %v1031 = vld [vmem:[#allocation4 + $0x8] sm:$0xff]
          %v1032 = vld [vmem:[#allocation4 + $0x10] sm:$0xff]
          %v1033 = vld [vmem:[#allocation4 + $0x18] sm:$0xff]
          %v1034 = vadd.f32 %v1026, %v1030
          %v1035 = vadd.f32 %v1027, %v1031
          %v1036 = vadd.f32 %v1028, %v1032
          %v1037 = vadd.f32 %v1029, %v1033
          %v1038 = vld [vmem:[%s9] sm:$0x1]
          %v1040 = vlaneseq
          %v1041 = vshrl.u32 %v1040, 7
          %v1042 = vsub.s32 0, %v1041
          %v1043 = vrot.slane %v1038, %v1042
          %v1045 = vadd.f32 %v1034, %v1043
          %v1046 = vadd.f32 %v1035, %v1043
          %v1047 = vadd.f32 %v1036, %v1043
          %v1048 = vadd.f32 %v1037, %v1043
          %1049 = vst.msk [vmem:[%s522] sm:$0xff] %vm803, %v1045
          %1050 = vst.msk [vmem:[%s522 + $0x8] sm:$0xff] %vm803, %v1046
          %1051 = vst.msk [vmem:[%s522 + $0x10] sm:$0xff] %vm803, %v1047
          %1052 = vst.msk [vmem:[%s522 + $0x18] sm:$0xff] %vm803, %v1048
        $region109: #{gpt2_forward.9} parent=96 // pred_fallthru
          _
        %s1053 = smul.u32 4, %s25
        %p1054 = scmp.lt.s32.totalorder %s1053, 7
        %s1055 = scalar_select %p1054, %s1053, 7
        %s1056 = smul.addr %s1055, 8
        %s1057 = scalar_lea.vmem %s10, %s1056
        // Predicated region
        $region110: #{gpt2_forward.9} parent=96 // pred_check
          %p1058 = pneg %p286
        $region111: #{gpt2_forward.9} parent=96 // pred_check_branch
          %1060 = sbr.rel (%p1058) target = $region113
        $region112: #{gpt2_forward.9} parent=96 // pred_region
          %s1061 = smul.u32 4, %s25
        $region113: #{gpt2_forward.9} parent=96 // pred_fallthru
          _
      $region97: #{gpt2_forward.9} parent=5 // pred_fallthru
        _
      %p1062 = scmp.le.s32.totalorder 2, %s16
      // Predicated region
      $region114: #{gpt2_forward.9} parent=5 // pred_check
        %p1063 = pneg %p1062
      $region115: #{gpt2_forward.9} parent=5 // pred_check_branch
        %1065 = sbr.rel (%p1063) target = $region117
      $region116: #{gpt2_forward.9} parent=5 // pred_region
        %s1066 = ssub.s32 %s16, 2
        // Predicated region
        $region118: #{gpt2_forward.9} parent=116 // pred_check
          %p1067 = pneg %p292
        $region119: #{gpt2_forward.9} parent=116 // pred_check_branch
          %1069 = sbr.rel (%p1067) target = $region121
        $region120: #{gpt2_forward.9} parent=116 // pred_region
          %s1070 = smul.u32 4, %s27
          %p1071 = scmp.lt.s32.totalorder %s1070, 7
          %s1072 = scalar_select %p1071, %s1070, 7
          %s1073 = smul.addr %s1072, 8
          %s1074 = scalar_lea.vmem %s10, %s1073
        $region121: #{gpt2_forward.9} parent=116 // pred_fallthru
          _
      $region117: #{gpt2_forward.9} parent=5 // pred_fallthru
        _
    $region6: #{gpt2_forward.9} parent=1 // loop_footer
      %s20 = sadd.s32 1, %s16
    $region7: #{gpt2_forward.9} parent=1 // loop_footer_branch
      %15 = sbr.rel target = $region3
    $region8: #{gpt2_forward.9} parent=1 // loop_exit
      _

// kernel: gpt2_forward.8
$region0: #{gpt2_forward.8}
  #allocation0 [shape = 'u32[]', space=smem, size = 0x4, offset = 0x4, fixed_abs, tag = 'smem constant byte address 0x4 - core index']
  #allocation1 [shape = 'u32[144,128]{1,0:T(1,128)}', space=vmem, size = 0x12000, scoped, tag = 'internal scratch']
  #allocation2 [shape = 'f32[4,16,1]{2,1,0:T(8,128)}', space=vmem, size = 0x8000, scoped, tag = 'scratch operand']
  #allocation3 [shape = 'f32[4,16,1]{2,1,0:T(8,128)}', space=vmem, size = 0x8000, scoped, tag = 'scratch operand']
  #allocation4 [shape = 'f32[4,16,16]{2,1,0:T(8,128)}', space=vmem, size = 0x8000, scoped, tag = 'scratch operand']
  %s0 = inlined_call_operand.vmem [shape: bf16[2,32,192], index: 0, kind: input, shape index: {}, may-alias: {0,1}]
  %s1 = inlined_call_operand.vmem [shape: bf16[2,32,192], index: 1, kind: input, shape index: {}, may-alias: {0,1}]
  %s2 = inlined_call_operand.vmem [shape: bf16[2,32,64], index: 2, kind: output, shape index: {}]
  %s3 = sld [smem:[#allocation0]]
  $region53: #{gpt2_forward.8} parent=0
    _
  %s5 = ssub.s32 1, %s3
  %s6 = scalar_select 0, %s5, %s3
  loop: start=0, step=1, limit=10
  $region2: #{gpt2_forward.8} parent=0 // loop_pre_header
    _
  $region3: #{gpt2_forward.8} parent=0 // loop_header
    %s8 = sphi 0, %s12
    %p9 = scmp.ge.s32.totalorder %s8, 10
    %s15 = sphi 0, %s34
    %s16 = sphi 0, %s30
    %s17 = sphi 0, %s26
    %s18 = sphi 0, %s15
    %s19 = sphi 0, %s16
    %s20 = sphi 0, %s17
    %s21 = sphi 0, %s18
    %s22 = sphi 0, %s19
    %s23 = sphi 0, %s20
    %s39 = sphi 0, %s41
    %s42 = sphi 0, %s39
    %s43 = sphi 0, %s42
    %s59 = sphi 0, %s43
    %s67 = sphi 0, %s69
    %s70 = sphi 0, %s67
    %s71 = sphi 0, %s70
    %s87 = sphi 0, %s71
    %s95 = sphi 0, %s97
    %s98 = sphi 0, %s95
    %s99 = sphi 0, %s98
    %s115 = sphi 0, %s99
  $region4: #{gpt2_forward.8} parent=0 // loop_header_branch
    %11 = sbr.rel (%p9) target = $region8
  $region5: #{gpt2_forward.8} parent=0 // loop_body
    %s13 = ssub.s32 %s8, 1
    %s14 = ssub.s32 %s8, 2
    %s24 = sadd.s32 1, %s17
    %p25 = scmp.ge.s32.totalorder %s24, 2
    %s26 = scalar_select %p25, 0, %s24
    %s27 = sadd.s32 1, %s16
    %s28 = scalar_select %p25, %s27, %s16
    %p29 = scmp.ge.s32.totalorder %s28, 2
    %s30 = scalar_select %p29, 0, %s28
    %s31 = sadd.s32 1, %s15
    %s32 = scalar_select %p29, %s31, %s15
    %p33 = scmp.ge.s32.totalorder %s32, 2
    %s34 = scalar_select %p33, 0, %s32
    %s35 = ssub.s32 %s15, %s34
    %s36 = ssub.s32 %s16, %s30
    %s37 = sor.u32 %s35, %s36
    %p38 = scmp.eq.s32.totalorder %s37, 0
    %s40 = sadd.s32 %s39, 1
    %s41 = scalar_select %p38, %s39, %s40
    %p44 = pneg %p38
    %p45 = scmp.eq.s32.totalorder %s8, 7
    %p46 = por %p44, %p45
    %p47 = scmp.ne.s32.totalorder %s39, %s42
    %p48 = scmp.eq.s32.totalorder %s8, 0
    %p49 = por %p47, %p48
    %p50 = scmp.ne.s32.totalorder %s39, %s42
    %p51 = scmp.eq.s32.totalorder %s13, 7
    %p52 = por %p50, %p51
    %p53 = scmp.ne.s32.totalorder %s42, %s43
    %p54 = scmp.eq.s32.totalorder %s13, 0
    %p55 = por %p53, %p54
    %p56 = scmp.ne.s32.totalorder %s42, %s43
    %p57 = scmp.eq.s32.totalorder %s14, 7
    %p58 = por %p56, %p57
    %p60 = scmp.ne.s32.totalorder %s43, %s59
    %p61 = scmp.eq.s32.totalorder %s14, 0
    %p62 = por %p60, %p61
    %s63 = ssub.s32 %s15, %s34
    %s64 = ssub.s32 %s17, %s26
    %s65 = sor.u32 %s63, %s64
    %p66 = scmp.eq.s32.totalorder %s65, 0
    %s68 = sadd.s32 %s67, 1
    %s69 = scalar_select %p66, %s67, %s68
    %p72 = pneg %p66
    %p73 = scmp.eq.s32.totalorder %s8, 7
    %p74 = por %p72, %p73
    %p75 = scmp.ne.s32.totalorder %s67, %s70
    %p76 = scmp.eq.s32.totalorder %s8, 0
    %p77 = por %p75, %p76
    %p78 = scmp.ne.s32.totalorder %s67, %s70
    %p79 = scmp.eq.s32.totalorder %s13, 7
    %p80 = por %p78, %p79
    %p81 = scmp.ne.s32.totalorder %s70, %s71
    %p82 = scmp.eq.s32.totalorder %s13, 0
    %p83 = por %p81, %p82
    %p84 = scmp.ne.s32.totalorder %s70, %s71
    %p85 = scmp.eq.s32.totalorder %s14, 7
    %p86 = por %p84, %p85
    %p88 = scmp.ne.s32.totalorder %s71, %s87
    %p89 = scmp.eq.s32.totalorder %s14, 0
    %p90 = por %p88, %p89
    %s91 = ssub.s32 %s15, %s34
    %s92 = ssub.s32 %s16, %s30
    %s93 = sor.u32 %s91, %s92
    %p94 = scmp.eq.s32.totalorder %s93, 0
    %s96 = sadd.s32 %s95, 1
    %s97 = scalar_select %p94, %s95, %s96
    %p100 = pneg %p94
    %p101 = scmp.eq.s32.totalorder %s8, 7
    %p102 = por %p100, %p101
    %p103 = scmp.ne.s32.totalorder %s95, %s98
    %p104 = scmp.eq.s32.totalorder %s8, 0
    %p105 = por %p103, %p104
    %p106 = scmp.ne.s32.totalorder %s95, %s98
    %p107 = scmp.eq.s32.totalorder %s13, 7
    %p108 = por %p106, %p107
    %p109 = scmp.ne.s32.totalorder %s98, %s99
    %p110 = scmp.eq.s32.totalorder %s13, 0
    %p111 = por %p109, %p110
    %p112 = scmp.ne.s32.totalorder %s98, %s99
    %p113 = scmp.eq.s32.totalorder %s14, 7
    %p114 = por %p112, %p113
    %p116 = scmp.ne.s32.totalorder %s99, %s115
    %p117 = scmp.eq.s32.totalorder %s14, 0
    %p118 = por %p116, %p117
    %p119 = scmp.le.s32.totalorder 1, %s8
    %p120 = scmp.lt.s32.totalorder %s8, 9
    %p121 = pnand %p119, %p120
    %p122 = pneg %p121
    // Predicated region
    $region9: #{gpt2_forward.8} parent=5 // pred_check
      _
    $region10: #{gpt2_forward.8} parent=5 // pred_check_branch
      %124 = sbr.rel (%p121) target = $region12
    $region11: #{gpt2_forward.8} parent=5 // pred_region
      %s125 = ssub.s32 %s8, 1
    $region12: #{gpt2_forward.8} parent=5 // pred_fallthru
      _
    %p126 = scmp.lt.s32.totalorder %s8, 8
    // Predicated region
    $region13: #{gpt2_forward.8} parent=5 // pred_check
      %p127 = pneg %p126
    $region14: #{gpt2_forward.8} parent=5 // pred_check_branch
      %129 = sbr.rel (%p127) target = $region16
    $region15: #{gpt2_forward.8} parent=5 // pred_region
      // Predicated region
      $region17: #{gpt2_forward.8} parent=15 // pred_check
        %p130 = pneg %p49
      $region18: #{gpt2_forward.8} parent=15 // pred_check_branch
        %132 = sbr.rel (%p130) target = $region20
      $region19: #{gpt2_forward.8} parent=15 // pred_region
        %s133 = smul.u32 2, %s16
        %p134 = scmp.lt.s32.totalorder %s15, 1
        %s135 = scalar_select %p134, %s15, 1
        %p136 = scmp.lt.s32.totalorder %s133, 3
        %s137 = scalar_select %p136, %s133, 3
        %s138 = smul.addr %s137, 2
        %s139 = smul.addr %s135, 8
        %s140 = sadd.s32 %s138, %s139
        %s141 = smul.addr %s140, 4
        %s142 = scalar_lea.vmem %s0, %s141
        %s143 = smul.u32 2, %s16
      $region20: #{gpt2_forward.8} parent=15 // pred_fallthru
        _
      // Predicated region
      $region21: #{gpt2_forward.8} parent=15 // pred_check
        %p144 = pneg %p77
      $region22: #{gpt2_forward.8} parent=15 // pred_check_branch
        %146 = sbr.rel (%p144) target = $region24
      $region23: #{gpt2_forward.8} parent=15 // pred_region
        %s147 = smul.u32 2, %s17
        %p148 = scmp.lt.s32.totalorder %s15, 1
        %s149 = scalar_select %p148, %s15, 1
        %p150 = scmp.lt.s32.totalorder %s147, 3
        %s151 = scalar_select %p150, %s147, 3
        %s152 = smul.addr %s151, 2
        %s153 = smul.addr %s149, 8
        %s154 = sadd.s32 %s152, %s153
        %s155 = smul.addr %s154, 4
        %s156 = scalar_lea.vmem %s1, %s155
        %s157 = smul.u32 2, %s17
      $region24: #{gpt2_forward.8} parent=15 // pred_fallthru
        _
    $region16: #{gpt2_forward.8} parent=5 // pred_fallthru
      _
    %p158 = scmp.le.s32.totalorder 1, %s8
    %p159 = scmp.lt.s32.totalorder %s8, 9
    %p160 = pnand %p158, %p159
    %p161 = pneg %p160
    // Predicated region
    $region25: #{gpt2_forward.8} parent=5 // pred_check
      _
    $region26: #{gpt2_forward.8} parent=5 // pred_check_branch
      %163 = sbr.rel (%p160) target = $region28
    $region27: #{gpt2_forward.8} parent=5 // pred_region
      %s164 = ssub.s32 %s8, 1
      %s165 = smul.u32 2, %s19
      %p166 = scmp.lt.s32.totalorder %s18, 1
      %s167 = scalar_select %p166, %s18, 1
      %p168 = scmp.lt.s32.totalorder %s165, 3
      %s169 = scalar_select %p168, %s165, 3
      %s170 = smul.addr %s169, 2
      %s171 = smul.addr %s167, 8
      %s172 = sadd.s32 %s170, %s171
      %s173 = smul.addr %s172, 4
      %s174 = scalar_lea.vmem %s0, %s173
      %p175 = pneg %p55
      %p176 = pneg %p52
      %s177 = smul.u32 2, %s20
      %p178 = scmp.lt.s32.totalorder %s18, 1
      %s179 = scalar_select %p178, %s18, 1
      %p180 = scmp.lt.s32.totalorder %s177, 3
      %s181 = scalar_select %p180, %s177, 3
      %s182 = smul.addr %s181, 2
      %s183 = smul.addr %s179, 8
      %s184 = sadd.s32 %s182, %s183
      %s185 = smul.addr %s184, 4
      %s186 = scalar_lea.vmem %s1, %s185
      %p187 = pneg %p83
      %p188 = pneg %p80
      %p189 = pneg %p111
      %p190 = pneg %p108
      %s191 = smul.u32 2, %s19
      %p192 = scmp.lt.s32.totalorder %s18, 1
      %s193 = scalar_select %p192, %s18, 1
      %p194 = scmp.lt.s32.totalorder %s191, 3
      %s195 = scalar_select %p194, %s191, 3
      %s196 = smul.addr %s193, 4
      %s197 = sadd.s32 %s195, %s196
      %s198 = smul.addr %s197, 4
      %s199 = scalar_lea.vmem %s2, %s198
      %s200 = smul.u32 2, %s19
      %p201 = scmp.lt.s32.totalorder %s18, 1
      %s202 = scalar_select %p201, %s18, 1
      %p203 = scmp.lt.s32.totalorder %s200, 3
      %s204 = scalar_select %p203, %s200, 3
      %s205 = smul.addr %s204, 2
      %s206 = smul.addr %s202, 8
      %s207 = sadd.s32 %s205, %s206
      %s208 = smul.addr %s207, 4
      %s209 = scalar_lea.vmem %s0, %s208
      %s210 = smul.u32 2, %s19
      %s211 = smul.u32 2, %s20
      %p212 = scmp.lt.s32.totalorder %s18, 1
      %s213 = scalar_select %p212, %s18, 1
      %p214 = scmp.lt.s32.totalorder %s211, 3
      %s215 = scalar_select %p214, %s211, 3
      %s216 = smul.addr %s215, 2
      %s217 = smul.addr %s213, 8
      %s218 = sadd.s32 %s216, %s217
      %s219 = smul.addr %s218, 4
      %s220 = scalar_lea.vmem %s1, %s219
      %s221 = smul.u32 2, %s20
      %s222 = smul.u32 2, %s19
      %p223 = scmp.lt.s32.totalorder %s18, 1
      %s224 = scalar_select %p223, %s18, 1
      %p225 = scmp.lt.s32.totalorder %s222, 3
      %s226 = scalar_select %p225, %s222, 3
      %s227 = smul.addr %s224, 4
      %s228 = sadd.s32 %s226, %s227
      %s229 = smul.addr %s228, 4
      %s230 = scalar_lea.vmem %s2, %s229
      %s231 = smul.u32 2, %s19
      %p233 = scmp.eq.s32.totalorder %s20, 0
      // Predicated region
      $region29: #{gpt2_forward.8} parent=27 // pred_check
        %p234 = pneg %p233
      $region30: #{gpt2_forward.8} parent=27 // pred_check_branch
        %236 = sbr.rel (%p234) target = $region32
      $region31: #{gpt2_forward.8} parent=27 // pred_region
        %vm237 = vcmask 7168
        %238 = vst.msk [vmem:[#allocation2] sm:$0xff] %vm237, -1e+30
        %239 = vst.msk [vmem:[#allocation2 + $0x8] sm:$0xff] %vm237, -1e+30
        %240 = vst.msk [vmem:[#allocation2 + $0x10] sm:$0xff] %vm237, -1e+30
        %241 = vst.msk [vmem:[#allocation2 + $0x18] sm:$0xff] %vm237, -1e+30
        %242 = vst.msk [vmem:[#allocation2 + $0x20] sm:$0xff] %vm237, -1e+30
        %243 = vst.msk [vmem:[#allocation2 + $0x28] sm:$0xff] %vm237, -1e+30
        %244 = vst.msk [vmem:[#allocation2 + $0x30] sm:$0xff] %vm237, -1e+30
        %245 = vst.msk [vmem:[#allocation2 + $0x38] sm:$0xff] %vm237, -1e+30
        %246 = vst.msk [vmem:[#allocation3] sm:$0xff] %vm237, 0.0
        %247 = vst.msk [vmem:[#allocation3 + $0x8] sm:$0xff] %vm237, 0.0
        %248 = vst.msk [vmem:[#allocation3 + $0x10] sm:$0xff] %vm237, 0.0
        %249 = vst.msk [vmem:[#allocation3 + $0x18] sm:$0xff] %vm237, 0.0
        %250 = vst.msk [vmem:[#allocation3 + $0x20] sm:$0xff] %vm237, 0.0
        %251 = vst.msk [vmem:[#allocation3 + $0x28] sm:$0xff] %vm237, 0.0
        %252 = vst.msk [vmem:[#allocation3 + $0x30] sm:$0xff] %vm237, 0.0
        %253 = vst.msk [vmem:[#allocation3 + $0x38] sm:$0xff] %vm237, 0.0
        %vm254 = vcmask 130048
        %255 = vst.msk [vmem:[#allocation4] sm:$0xff] %vm254, 0.0
        %256 = vst.msk [vmem:[#allocation4 + $0x8] sm:$0xff] %vm254, 0.0
        %257 = vst.msk [vmem:[#allocation4 + $0x10] sm:$0xff] %vm254, 0.0
        %258 = vst.msk [vmem:[#allocation4 + $0x18] sm:$0xff] %vm254, 0.0
        %259 = vst.msk [vmem:[#allocation4 + $0x20] sm:$0xff] %vm254, 0.0
        %260 = vst.msk [vmem:[#allocation4 + $0x28] sm:$0xff] %vm254, 0.0
        %261 = vst.msk [vmem:[#allocation4 + $0x30] sm:$0xff] %vm254, 0.0
        %262 = vst.msk [vmem:[#allocation4 + $0x38] sm:$0xff] %vm254, 0.0
      $region32: #{gpt2_forward.8} parent=27 // pred_fallthru
        _
      %s263 = smul.u32 %s19, 16
      %s264 = smul.u32 %s20, 16
      %s265 = sadd.s32 %s263, 15
      %p266 = scmp.le.s32.totalorder %s264, %s265
      // Predicated region
      $region33: #{gpt2_forward.8} parent=27 // pred_check
        %p267 = pneg %p266
      $region34: #{gpt2_forward.8} parent=27 // pred_check_branch
        %269 = sbr.rel (%p267) target = $region36
      $region35: #{gpt2_forward.8} parent=27 // pred_region
        %v270 = vld [vmem:[%s209] sm:$0xff]
        %v271 = vld [vmem:[%s209 + $0x8] sm:$0xff]
        %v272 = vld [vmem:[%s220] sm:$0xff]
        %v273 = vld [vmem:[%s220 + $0x8] sm:$0xff]
        %v274 = vlaneseq
        %v275 = vshrl.u32 %v274, 7
        %v276 = vadd.s32 %v275, 8
        %v277 = vstv %s263
        %v278 = vadd.s32 %v277, %v275
        %v279 = vadd.s32 %v277, %v276
        %v280 = vlaneseq
        %v281 = vand.u32 %v280, 127
        %v282 = vstv %s264
        %v283 = vadd.s32 %v282, %v281
        %vm284 = vcmp.le.s32.totalorder %v283, %v278
        %vm285 = vcmp.le.s32.totalorder %v283, %v279
        %v288 = vunpack.c.l.b16 %v270
        %v289 = vunpack.c.l.b16 %v271
        %v290 = vpack.c.b16 %v289, %v288
        %v293 = vunpack.c.l.b16 %v272
        %v294 = vunpack.c.l.b16 %v273
        %v295 = vpack.c.b16 %v294, %v293
        %296 = vrot.lane.b32.xlu0 %v295, 64
        %v297 = vpop.permute.xlu0 %296
        %vm298 = vcmask 130048
        %v300 = vsel %vm298, %v290, 0
        %v303 = vsel %vm298, %v297, 0
        %305 = vmatprep.subr.bf16.mxu0 0
        %306 = vmatpush1.bf16.xpose.msra.mxu0 0
        %307 = vmatprep.subr.bf16.mxu0 0
        %308 = vmatpush1.bf16.xpose.msra.mxu0 0
        %309 = vmatprep.subr.bf16.mxu0 0
        %310 = vmatpush1.bf16.xpose.msra.mxu0 0
        %311 = vmatprep.subr.bf16.mxu0 0
        %312 = vmatpush1.bf16.xpose.msra.mxu0 0
        %313 = vmatprep.subr.bf16.mxu0 0
        %314 = vmatpush1.bf16.xpose.msra.mxu0 0
        %315 = vmatprep.subr.bf16.mxu0 0
        %316 = vmatpush1.bf16.xpose.msra.mxu0 0
        %317 = vmatprep.subr.bf16.mxu0 0
        %318 = vmatpush1.bf16.xpose.msra.mxu0 0
        %319 = vmatprep.subr.bf16.mxu0 0
        %320 = vmatpush1.bf16.xpose.msra.mxu0 %v303
        %321 = vmatprep.subr.bf16.mxu0 0
        %322 = vmatpush2.bf16.xpose.msra.mxu0 0
        %323 = vmatprep.subr.bf16.mxu0 0
        %324 = vmatpush2.bf16.xpose.msra.mxu0 0
        %325 = vmatprep.subr.bf16.mxu0 0
        %326 = vmatpush2.bf16.xpose.msra.mxu0 0
        %327 = vmatprep.subr.bf16.mxu0 0
        %328 = vmatpush2.bf16.xpose.msra.mxu0 0
        %329 = vmatprep.subr.bf16.mxu0 0
        %330 = vmatpush2.bf16.xpose.msra.mxu0 0
        %331 = vmatprep.subr.bf16.mxu0 0
        %332 = vmatpush2.bf16.xpose.msra.mxu0 0
        %333 = vmatprep.subr.bf16.mxu0 0
        %334 = vmatpush2.bf16.xpose.msra.mxu0 0
        %335 = vmatprep.subr.bf16.mxu0 0
        %336 = vmatpush2.bf16.xpose.msra.mxu0 0
        %337 = vmatprep.mubr.bf16.mxu0 0
        %338 = vmatmul.mubr.bf16.gmra.mxu0 %v300
        %v339 = vpop.f32.mrf.mxu0
        %v340 = vadd.f32 0.0, %v339
        %v341 = vpop.f32.mrf.mxu0
        %v342 = vpop.f32.mrf.mxu0
        %v343 = vadd.f32 0.0, %v342
        %v344 = vpop.f32.mrf.mxu0
        %345 = vdwg.mxu0
        %v346 = vmul.f32 %v340, 0.25
        %v347 = vmul.f32 %v343, 0.25
        %v348 = vsel %vm284, %v346, -1e+30
        %v349 = vsel %vm285, %v347, -1e+30
        %v350 = vld [vmem:[#allocation2] sm:$0xff]
        %v351 = vld [vmem:[#allocation2 + $0x8] sm:$0xff]
        %v352 = vsel %vm298, %v348, -inf
        %353 = vmax.xlane.f32.xlu0 %v352
        %v354 = vpop.xlane.xlu0 %353
        %v355 = vsel %vm298, %v349, -inf
        %356 = vmax.xlane.f32.xlu0 %v355
        %v357 = vpop.xlane.xlu0 %356
        %v358 = vmax.f32 %v350, %v354
        %v359 = vmax.f32 %v351, %v357
        %v360 = vsub.f32 %v350, %v358
        %v361 = vsub.f32 %v351, %v359
        %v362 = vmul.f32 %v360, 1.442695
        %v363 = vpow.pop %v362
        %v364 = vmul.f32 %v361, 1.442695
        %v365 = vpow.pop %v364
        %367 = vset.pattern.permute.xlu0 0
        %368 = vperm.xlu0 %367, %v358
        %v369 = vpop.permute.xlu0 %368
        %372 = vset.pattern.permute.xlu0 0
        %373 = vperm.xlu0 %372, %v359
        %v374 = vpop.permute.xlu0 %373
        %v376 = vsub.f32 %v348, %v369
        %v377 = vsub.f32 %v349, %v374
        %v378 = vmul.f32 %v376, 1.442695
        %v379 = vpow.pop %v378
        %v380 = vmul.f32 %v377, 1.442695
        %v381 = vpow.pop %v380
        %v382 = vld [vmem:[#allocation3] sm:$0xff]
        %v383 = vld [vmem:[#allocation3 + $0x8] sm:$0xff]
        %v384 = vmul.f32 %v363, %v382
        %v385 = vmul.f32 %v365, %v383
        %v386 = vsel %vm298, %v379, 0.0
        %387 = vadd.xlane.f32.xlu0 %v386
        %v388 = vpop.xlane.xlu0 %387
        %v389 = vsel %vm298, %v381, 0.0
        %390 = vadd.xlane.f32.xlu0 %v389
        %v391 = vpop.xlane.xlu0 %390
        %v392 = vadd.f32 %v384, %v388
        %v393 = vadd.f32 %v385, %v391
        %vm394 = vcmask 7168
        %395 = vst.msk [vmem:[#allocation3] sm:$0xff] %vm394, %v392
        %396 = vst.msk [vmem:[#allocation3 + $0x8] sm:$0xff] %vm394, %v393
        %v397 = vld [vmem:[#allocation4] sm:$0xff]
        %v398 = vld [vmem:[#allocation4 + $0x8] sm:$0xff]
        %400 = vset.pattern.permute.xlu0 0
        %401 = vperm.xlu0 %400, %v363
        %v402 = vpop.permute.xlu0 %401
        %405 = vset.pattern.permute.xlu0 0
        %406 = vperm.xlu0 %405, %v365
        %v407 = vpop.permute.xlu0 %406
        %v409 = vmul.f32 %v402, %v397
        %v410 = vmul.f32 %v407, %v398
        %v411 = vpack.c.bf16 %v381, %v379
        %v412 = vunpack.c.h.b16 %v272
        %v413 = vunpack.c.h.b16 %v273
        %v414 = vpack.c.b16 %v413, %v412
        %v417 = vsel %vm298, %v411, 0
        %419 = vmatprep.subr.bf16.mxu0 0
        %420 = vmatpush1.bf16.msra.mxu0 0
        %421 = vmatprep.subr.bf16.mxu0 0
        %422 = vmatpush1.bf16.msra.mxu0 0
        %423 = vmatprep.subr.bf16.mxu0 0
        %424 = vmatpush1.bf16.msra.mxu0 0
        %425 = vmatprep.subr.bf16.mxu0 0
        %426 = vmatpush1.bf16.msra.mxu0 0
        %427 = vmatprep.subr.bf16.mxu0 0
        %428 = vmatpush1.bf16.msra.mxu0 0
        %429 = vmatprep.subr.bf16.mxu0 0
        %430 = vmatpush1.bf16.msra.mxu0 0
        %431 = vmatprep.subr.bf16.mxu0 0
        %432 = vmatpush1.bf16.msra.mxu0 0
        %433 = vmatprep.subr.bf16.mxu0 0
        %434 = vmatpush1.bf16.msra.mxu0 %v414
        %435 = vmatprep.subr.bf16.mxu0 0
        %436 = vmatpush2.bf16.msra.mxu0 0
        %437 = vmatprep.subr.bf16.mxu0 0
        %438 = vmatpush2.bf16.msra.mxu0 0
        %439 = vmatprep.subr.bf16.mxu0 0
        %440 = vmatpush2.bf16.msra.mxu0 0
        %441 = vmatprep.subr.bf16.mxu0 0
        %442 = vmatpush2.bf16.msra.mxu0 0
        %443 = vmatprep.subr.bf16.mxu0 0
        %444 = vmatpush2.bf16.msra.mxu0 0
        %445 = vmatprep.subr.bf16.mxu0 0
        %446 = vmatpush2.bf16.msra.mxu0 0
        %447 = vmatprep.subr.bf16.mxu0 0
        %448 = vmatpush2.bf16.msra.mxu0 0
        %449 = vmatprep.subr.bf16.mxu0 0
        %450 = vmatpush2.bf16.msra.mxu0 0
        %451 = vmatprep.mubr.bf16.mxu0 0
        %452 = vmatmul.mubr.bf16.gmra.mxu0 %v417
        %v453 = vpop.f32.mrf.mxu0
        %v454 = vadd.f32 0.0, %v453
        %v455 = vpop.f32.mrf.mxu0
        %v456 = vpop.f32.mrf.mxu0
        %v457 = vadd.f32 0.0, %v456
        %v458 = vpop.f32.mrf.mxu0
        %459 = vdwg.mxu0
        %v460 = vadd.f32 %v409, %v454
        %v461 = vadd.f32 %v410, %v457
        %462 = vst.msk [vmem:[#allocation4] sm:$0xff] %vm298, %v460
        %463 = vst.msk [vmem:[#allocation4 + $0x8] sm:$0xff] %vm298, %v461
        %464 = vst.msk [vmem:[#allocation2] sm:$0xff] %vm394, %v358
        %465 = vst.msk [vmem:[#allocation2 + $0x8] sm:$0xff] %vm394, %v359
        %466 = vrot.lane.b32.xlu0 %v290, 112
        %v467 = vpop.permute.xlu0 %466
        %468 = vrot.lane.b32.xlu0 %v295, 48
        %v469 = vpop.permute.xlu0 %468
        %v471 = vsel %vm298, %v467, 0
        %v474 = vsel %vm298, %v469, 0
        %476 = vmatprep.subr.bf16.mxu0 0
        %477 = vmatpush1.bf16.xpose.msra.mxu0 0
        %478 = vmatprep.subr.bf16.mxu0 0
        %479 = vmatpush1.bf16.xpose.msra.mxu0 0
        %480 = vmatprep.subr.bf16.mxu0 0
        %481 = vmatpush1.bf16.xpose.msra.mxu0 0
        %482 = vmatprep.subr.bf16.mxu0 0
        %483 = vmatpush1.bf16.xpose.msra.mxu0 0
        %484 = vmatprep.subr.bf16.mxu0 0
        %485 = vmatpush1.bf16.xpose.msra.mxu0 0
        %486 = vmatprep.subr.bf16.mxu0 0
        %487 = vmatpush1.bf16.xpose.msra.mxu0 0
        %488 = vmatprep.subr.bf16.mxu0 0
        %489 = vmatpush1.bf16.xpose.msra.mxu0 0
        %490 = vmatprep.subr.bf16.mxu0 0
        %491 = vmatpush1.bf16.xpose.msra.mxu0 %v474
        %492 = vmatprep.subr.bf16.mxu0 0
        %493 = vmatpush2.bf16.xpose.msra.mxu0 0
        %494 = vmatprep.subr.bf16.mxu0 0
        %495 = vmatpush2.bf16.xpose.msra.mxu0 0
        %496 = vmatprep.subr.bf16.mxu0 0
        %497 = vmatpush2.bf16.xpose.msra.mxu0 0
        %498 = vmatprep.subr.bf16.mxu0 0
        %499 = vmatpush2.bf16.xpose.msra.mxu0 0
        %500 = vmatprep.subr.bf16.mxu0 0
        %501 = vmatpush2.bf16.xpose.msra.mxu0 0
        %502 = vmatprep.subr.bf16.mxu0 0
        %503 = vmatpush2.bf16.xpose.msra.mxu0 0
        %504 = vmatprep.subr.bf16.mxu0 0
        %505 = vmatpush2.bf16.xpose.msra.mxu0 0
        %506 = vmatprep.subr.bf16.mxu0 0
        %507 = vmatpush2.bf16.xpose.msra.mxu0 0
        %508 = vmatprep.mubr.bf16.mxu0 0
        %509 = vmatmul.mubr.bf16.gmra.mxu0 %v471
        %v510 = vpop.f32.mrf.mxu0
        %v511 = vadd.f32 0.0, %v510
        %v512 = vpop.f32.mrf.mxu0
        %v513 = vpop.f32.mrf.mxu0
        %v514 = vadd.f32 0.0, %v513
        %v515 = vpop.f32.mrf.mxu0
        %516 = vdwg.mxu0
        %v517 = vmul.f32 %v511, 0.25
        %v518 = vmul.f32 %v514, 0.25
        %v519 = vsel %vm284, %v517, -1e+30
        %v520 = vsel %vm285, %v518, -1e+30
        %s521 = scalar_lea.vmem [#allocation2], 16
        %v522 = vld [vmem:[%s521] sm:$0xff]
        %v523 = vld [vmem:[%s521 + $0x8] sm:$0xff]
        %v524 = vsel %vm298, %v519, -inf
        %525 = vmax.xlane.f32.xlu0 %v524
        %v526 = vpop.xlane.xlu0 %525
        %v527 = vsel %vm298, %v520, -inf
        %528 = vmax.xlane.f32.xlu0 %v527
        %v529 = vpop.xlane.xlu0 %528
        %v530 = vmax.f32 %v522, %v526
        %v531 = vmax.f32 %v523, %v529
        %v532 = vsub.f32 %v522, %v530
        %v533 = vsub.f32 %v523, %v531
        %v534 = vmul.f32 %v532, 1.442695
        %v535 = vpow.pop %v534
        %v536 = vmul.f32 %v533, 1.442695
        %v537 = vpow.pop %v536
        %539 = vset.pattern.permute.xlu0 0
        %540 = vperm.xlu0 %539, %v530
        %v541 = vpop.permute.xlu0 %540
        %544 = vset.pattern.permute.xlu0 0
        %545 = vperm.xlu0 %544, %v531
        %v546 = vpop.permute.xlu0 %545
        %v548 = vsub.f32 %v519, %v541
        %v549 = vsub.f32 %v520, %v546
        %v550 = vmul.f32 %v548, 1.442695
        %v551 = vpow.pop %v550
        %v552 = vmul.f32 %v549, 1.442695
        %v553 = vpow.pop %v552
        %s554 = scalar_lea.vmem [#allocation3], 16
        %v555 = vld [vmem:[%s554] sm:$0xff]
        %v556 = vld [vmem:[%s554 + $0x8] sm:$0xff]
        %v557 = vmul.f32 %v535, %v555
        %v558 = vmul.f32 %v537, %v556
        %v559 = vsel %vm298, %v551, 0.0
        %560 = vadd.xlane.f32.xlu0 %v559
        %v561 = vpop.xlane.xlu0 %560
        %v562 = vsel %vm298, %v553, 0.0
        %563 = vadd.xlane.f32.xlu0 %v562
        %v564 = vpop.xlane.xlu0 %563
        %v565 = vadd.f32 %v557, %v561
        %v566 = vadd.f32 %v558, %v564
        %567 = vst.msk [vmem:[%s554] sm:$0xff] %vm394, %v565
        %568 = vst.msk [vmem:[%s554 + $0x8] sm:$0xff] %vm394, %v566
        %s569 = scalar_lea.vmem [#allocation4], 16
        %v570 = vld [vmem:[%s569] sm:$0xff]
        %v571 = vld [vmem:[%s569 + $0x8] sm:$0xff]
        %573 = vset.pattern.permute.xlu0 0
        %574 = vperm.xlu0 %573, %v535
        %v575 = vpop.permute.xlu0 %574
        %578 = vset.pattern.permute.xlu0 0
        %579 = vperm.xlu0 %578, %v537
        %v580 = vpop.permute.xlu0 %579
        %v582 = vmul.f32 %v575, %v570
        %v583 = vmul.f32 %v580, %v571
        %v584 = vpack.c.bf16 %v553, %v551
        %585 = vrot.lane.b32.xlu0 %v414, 112
        %v586 = vpop.permute.xlu0 %585
        %v589 = vsel %vm298, %v584, 0
        %591 = vmatprep.subr.bf16.mxu0 0
        %592 = vmatpush1.bf16.msra.mxu0 0
        %593 = vmatprep.subr.bf16.mxu0 0
        %594 = vmatpush1.bf16.msra.mxu0 0
        %595 = vmatprep.subr.bf16.mxu0 0
        %596 = vmatpush1.bf16.msra.mxu0 0
        %597 = vmatprep.subr.bf16.mxu0 0
        %598 = vmatpush1.bf16.msra.mxu0 0
        %599 = vmatprep.subr.bf16.mxu0 0
        %600 = vmatpush1.bf16.msra.mxu0 0
        %601 = vmatprep.subr.bf16.mxu0 0
        %602 = vmatpush1.bf16.msra.mxu0 0
        %603 = vmatprep.subr.bf16.mxu0 0
        %604 = vmatpush1.bf16.msra.mxu0 0
        %605 = vmatprep.subr.bf16.mxu0 0
        %606 = vmatpush1.bf16.msra.mxu0 %v586
        %607 = vmatprep.subr.bf16.mxu0 0
        %608 = vmatpush2.bf16.msra.mxu0 0
        %609 = vmatprep.subr.bf16.mxu0 0
        %610 = vmatpush2.bf16.msra.mxu0 0
        %611 = vmatprep.subr.bf16.mxu0 0
        %612 = vmatpush2.bf16.msra.mxu0 0
        %613 = vmatprep.subr.bf16.mxu0 0
        %614 = vmatpush2.bf16.msra.mxu0 0
        %615 = vmatprep.subr.bf16.mxu0 0
        %616 = vmatpush2.bf16.msra.mxu0 0
        %617 = vmatprep.subr.bf16.mxu0 0
        %618 = vmatpush2.bf16.msra.mxu0 0
        %619 = vmatprep.subr.bf16.mxu0 0
        %620 = vmatpush2.bf16.msra.mxu0 0
        %621 = vmatprep.subr.bf16.mxu0 0
        %622 = vmatpush2.bf16.msra.mxu0 0
        %623 = vmatprep.mubr.bf16.mxu0 0
        %624 = vmatmul.mubr.bf16.gmra.mxu0 %v589
        %v625 = vpop.f32.mrf.mxu0
        %v626 = vadd.f32 0.0, %v625
        %v627 = vpop.f32.mrf.mxu0
        %v628 = vpop.f32.mrf.mxu0
        %v629 = vadd.f32 0.0, %v628
        %v630 = vpop.f32.mrf.mxu0
        %631 = vdwg.mxu0
        %v632 = vadd.f32 %v582, %v626
        %v633 = vadd.f32 %v583, %v629
        %634 = vst.msk [vmem:[%s569] sm:$0xff] %vm298, %v632
        %635 = vst.msk [vmem:[%s569 + $0x8] sm:$0xff] %vm298, %v633
        %636 = vst.msk [vmem:[%s521] sm:$0xff] %vm394, %v530
        %637 = vst.msk [vmem:[%s521 + $0x8] sm:$0xff] %vm394, %v531
        %638 = vrot.lane.b32.xlu0 %v290, 96
        %v639 = vpop.permute.xlu0 %638
        %640 = vrot.lane.b32.xlu0 %v295, 32
        %v641 = vpop.permute.xlu0 %640
        %v643 = vsel %vm298, %v639, 0
        %v646 = vsel %vm298, %v641, 0
        %648 = vmatprep.subr.bf16.mxu0 0
        %649 = vmatpush1.bf16.xpose.msra.mxu0 0
        %650 = vmatprep.subr.bf16.mxu0 0
        %651 = vmatpush1.bf16.xpose.msra.mxu0 0
        %652 = vmatprep.subr.bf16.mxu0 0
        %653 = vmatpush1.bf16.xpose.msra.mxu0 0
        %654 = vmatprep.subr.bf16.mxu0 0
        %655 = vmatpush1.bf16.xpose.msra.mxu0 0
        %656 = vmatprep.subr.bf16.mxu0 0
        %657 = vmatpush1.bf16.xpose.msra.mxu0 0
        %658 = vmatprep.subr.bf16.mxu0 0
        %659 = vmatpush1.bf16.xpose.msra.mxu0 0
        %660 = vmatprep.subr.bf16.mxu0 0
        %661 = vmatpush1.bf16.xpose.msra.mxu0 0
        %662 = vmatprep.subr.bf16.mxu0 0
        %663 = vmatpush1.bf16.xpose.msra.mxu0 %v646
        %664 = vmatprep.subr.bf16.mxu0 0
        %665 = vmatpush2.bf16.xpose.msra.mxu0 0
        %666 = vmatprep.subr.bf16.mxu0 0
        %667 = vmatpush2.bf16.xpose.msra.mxu0 0
        %668 = vmatprep.subr.bf16.mxu0 0
        %669 = vmatpush2.bf16.xpose.msra.mxu0 0
        %670 = vmatprep.subr.bf16.mxu0 0
        %671 = vmatpush2.bf16.xpose.msra.mxu0 0
        %672 = vmatprep.subr.bf16.mxu0 0
        %673 = vmatpush2.bf16.xpose.msra.mxu0 0
        %674 = vmatprep.subr.bf16.mxu0 0
        %675 = vmatpush2.bf16.xpose.msra.mxu0 0
        %676 = vmatprep.subr.bf16.mxu0 0
        %677 = vmatpush2.bf16.xpose.msra.mxu0 0
        %678 = vmatprep.subr.bf16.mxu0 0
        %679 = vmatpush2.bf16.xpose.msra.mxu0 0
        %680 = vmatprep.mubr.bf16.mxu0 0
        %681 = vmatmul.mubr.bf16.gmra.mxu0 %v643
        %v682 = vpop.f32.mrf.mxu0
        %v683 = vadd.f32 0.0, %v682
        %v684 = vpop.f32.mrf.mxu0
        %v685 = vpop.f32.mrf.mxu0
        %v686 = vadd.f32 0.0, %v685
        %v687 = vpop.f32.mrf.mxu0
        %688 = vdwg.mxu0
        %v689 = vmul.f32 %v683, 0.25
        %v690 = vmul.f32 %v686, 0.25
        %v691 = vsel %vm284, %v689, -1e+30
        %v692 = vsel %vm285, %v690, -1e+30
        %s693 = scalar_lea.vmem [#allocation2], 32
        %v694 = vld [vmem:[%s693] sm:$0xff]
        %v695 = vld [vmem:[%s693 + $0x8] sm:$0xff]
        %v696 = vsel %vm298, %v691, -inf
        %697 = vmax.xlane.f32.xlu0 %v696
        %v698 = vpop.xlane.xlu0 %697
        %v699 = vsel %vm298, %v692, -inf
        %700 = vmax.xlane.f32.xlu0 %v699
        %v701 = vpop.xlane.xlu0 %700
        %v702 = vmax.f32 %v694, %v698
        %v703 = vmax.f32 %v695, %v701
        %v704 = vsub.f32 %v694, %v702
        %v705 = vsub.f32 %v695, %v703
        %v706 = vmul.f32 %v704, 1.442695
        %v707 = vpow.pop %v706
        %v708 = vmul.f32 %v705, 1.442695
        %v709 = vpow.pop %v708
        %711 = vset.pattern.permute.xlu0 0
        %712 = vperm.xlu0 %711, %v702
        %v713 = vpop.permute.xlu0 %712
        %716 = vset.pattern.permute.xlu0 0
        %717 = vperm.xlu0 %716, %v703
        %v718 = vpop.permute.xlu0 %717
        %v720 = vsub.f32 %v691, %v713
        %v721 = vsub.f32 %v692, %v718
        %v722 = vmul.f32 %v720, 1.442695
        %v723 = vpow.pop %v722
        %v724 = vmul.f32 %v721, 1.442695
        %v725 = vpow.pop %v724
        %s726 = scalar_lea.vmem [#allocation3], 32
        %v727 = vld [vmem:[%s726] sm:$0xff]
        %v728 = vld [vmem:[%s726 + $0x8] sm:$0xff]
        %v729 = vmul.f32 %v707, %v727
        %v730 = vmul.f32 %v709, %v728
        %v731 = vsel %vm298, %v723, 0.0
        %732 = vadd.xlane.f32.xlu0 %v731
        %v733 = vpop.xlane.xlu0 %732
        %v734 = vsel %vm298, %v725, 0.0
        %735 = vadd.xlane.f32.xlu0 %v734
        %v736 = vpop.xlane.xlu0 %735
        %v737 = vadd.f32 %v729, %v733
        %v738 = vadd.f32 %v730, %v736
        %739 = vst.msk [vmem:[%s726] sm:$0xff] %vm394, %v737
        %740 = vst.msk [vmem:[%s726 + $0x8] sm:$0xff] %vm394, %v738
        %s741 = scalar_lea.vmem [#allocation4], 32
        %v742 = vld [vmem:[%s741] sm:$0xff]
        %v743 = vld [vmem:[%s741 + $0x8] sm:$0xff]
        %745 = vset.pattern.permute.xlu0 0
        %746 = vperm.xlu0 %745, %v707
        %v747 = vpop.permute.xlu0 %746
        %750 = vset.pattern.permute.xlu0 0
        %751 = vperm.xlu0 %750, %v709
        %v752 = vpop.permute.xlu0 %751
        %v754 = vmul.f32 %v747, %v742
        %v755 = vmul.f32 %v752, %v743
        %v756 = vpack.c.bf16 %v725, %v723
        %757 = vrot.lane.b32.xlu0 %v414, 96
        %v758 = vpop.permute.xlu0 %757
        %v761 = vsel %vm298, %v756, 0
        %763 = vmatprep.subr.bf16.mxu0 0
        %764 = vmatpush1.bf16.msra.mxu0 0
        %765 = vmatprep.subr.bf16.mxu0 0
        %766 = vmatpush1.bf16.msra.mxu0 0
        %767 = vmatprep.subr.bf16.mxu0 0
        %768 = vmatpush1.bf16.msra.mxu0 0
        %769 = vmatprep.subr.bf16.mxu0 0
        %770 = vmatpush1.bf16.msra.mxu0 0
        %771 = vmatprep.subr.bf16.mxu0 0
        %772 = vmatpush1.bf16.msra.mxu0 0
        %773 = vmatprep.subr.bf16.mxu0 0
        %774 = vmatpush1.bf16.msra.mxu0 0
        %775 = vmatprep.subr.bf16.mxu0 0
        %776 = vmatpush1.bf16.msra.mxu0 0
        %777 = vmatprep.subr.bf16.mxu0 0
        %778 = vmatpush1.bf16.msra.mxu0 %v758
        %779 = vmatprep.subr.bf16.mxu0 0
        %780 = vmatpush2.bf16.msra.mxu0 0
        %781 = vmatprep.subr.bf16.mxu0 0
        %782 = vmatpush2.bf16.msra.mxu0 0
        %783 = vmatprep.subr.bf16.mxu0 0
        %784 = vmatpush2.bf16.msra.mxu0 0
        %785 = vmatprep.subr.bf16.mxu0 0
        %786 = vmatpush2.bf16.msra.mxu0 0
        %787 = vmatprep.subr.bf16.mxu0 0
        %788 = vmatpush2.bf16.msra.mxu0 0
        %789 = vmatprep.subr.bf16.mxu0 0
        %790 = vmatpush2.bf16.msra.mxu0 0
        %791 = vmatprep.subr.bf16.mxu0 0
        %792 = vmatpush2.bf16.msra.mxu0 0
        %793 = vmatprep.subr.bf16.mxu0 0
        %794 = vmatpush2.bf16.msra.mxu0 0
        %795 = vmatprep.mubr.bf16.mxu0 0
        %796 = vmatmul.mubr.bf16.gmra.mxu0 %v761
        %v797 = vpop.f32.mrf.mxu0
        %v798 = vadd.f32 0.0, %v797
        %v799 = vpop.f32.mrf.mxu0
        %v800 = vpop.f32.mrf.mxu0
        %v801 = vadd.f32 0.0, %v800
        %v802 = vpop.f32.mrf.mxu0
        %803 = vdwg.mxu0
        %v804 = vadd.f32 %v754, %v798
        %v805 = vadd.f32 %v755, %v801
        %806 = vst.msk [vmem:[%s741] sm:$0xff] %vm298, %v804
        %807 = vst.msk [vmem:[%s741 + $0x8] sm:$0xff] %vm298, %v805
        %808 = vst.msk [vmem:[%s693] sm:$0xff] %vm394, %v702
        %809 = vst.msk [vmem:[%s693 + $0x8] sm:$0xff] %vm394, %v703
        %810 = vrot.lane.b32.xlu0 %v290, 80
        %v811 = vpop.permute.xlu0 %810
        %812 = vrot.lane.b32.xlu0 %v295, 16
        %v813 = vpop.permute.xlu0 %812
        %v815 = vsel %vm298, %v811, 0
        %v818 = vsel %vm298, %v813, 0
        %820 = vmatprep.subr.bf16.mxu0 0
        %821 = vmatpush1.bf16.xpose.msra.mxu0 0
        %822 = vmatprep.subr.bf16.mxu0 0
        %823 = vmatpush1.bf16.xpose.msra.mxu0 0
        %824 = vmatprep.subr.bf16.mxu0 0
        %825 = vmatpush1.bf16.xpose.msra.mxu0 0
        %826 = vmatprep.subr.bf16.mxu0 0
        %827 = vmatpush1.bf16.xpose.msra.mxu0 0
        %828 = vmatprep.subr.bf16.mxu0 0
        %829 = vmatpush1.bf16.xpose.msra.mxu0 0
        %830 = vmatprep.subr.bf16.mxu0 0
        %831 = vmatpush1.bf16.xpose.msra.mxu0 0
        %832 = vmatprep.subr.bf16.mxu0 0
        %833 = vmatpush1.bf16.xpose.msra.mxu0 0
        %834 = vmatprep.subr.bf16.mxu0 0
        %835 = vmatpush1.bf16.xpose.msra.mxu0 %v818
        %836 = vmatprep.subr.bf16.mxu0 0
        %837 = vmatpush2.bf16.xpose.msra.mxu0 0
        %838 = vmatprep.subr.bf16.mxu0 0
        %839 = vmatpush2.bf16.xpose.msra.mxu0 0
        %840 = vmatprep.subr.bf16.mxu0 0
        %841 = vmatpush2.bf16.xpose.msra.mxu0 0
        %842 = vmatprep.subr.bf16.mxu0 0
        %843 = vmatpush2.bf16.xpose.msra.mxu0 0
        %844 = vmatprep.subr.bf16.mxu0 0
        %845 = vmatpush2.bf16.xpose.msra.mxu0 0
        %846 = vmatprep.subr.bf16.mxu0 0
        %847 = vmatpush2.bf16.xpose.msra.mxu0 0
        %848 = vmatprep.subr.bf16.mxu0 0
        %849 = vmatpush2.bf16.xpose.msra.mxu0 0
        %850 = vmatprep.subr.bf16.mxu0 0
        %851 = vmatpush2.bf16.xpose.msra.mxu0 0
        %852 = vmatprep.mubr.bf16.mxu0 0
        %853 = vmatmul.mubr.bf16.gmra.mxu0 %v815
        %v854 = vpop.f32.mrf.mxu0
        %v855 = vadd.f32 0.0, %v854
        %v856 = vpop.f32.mrf.mxu0
        %v857 = vpop.f32.mrf.mxu0
        %v858 = vadd.f32 0.0, %v857
        %v859 = vpop.f32.mrf.mxu0
        %860 = vdwg.mxu0
        %v861 = vmul.f32 %v855, 0.25
        %v862 = vmul.f32 %v858, 0.25
        %v863 = vsel %vm284, %v861, -1e+30
        %v864 = vsel %vm285, %v862, -1e+30
        %s865 = scalar_lea.vmem [#allocation2], 48
        %v866 = vld [vmem:[%s865] sm:$0xff]
        %v867 = vld [vmem:[%s865 + $0x8] sm:$0xff]
        %v868 = vsel %vm298, %v863, -inf
        %869 = vmax.xlane.f32.xlu0 %v868
        %v870 = vpop.xlane.xlu0 %869
        %v871 = vsel %vm298, %v864, -inf
        %872 = vmax.xlane.f32.xlu0 %v871
        %v873 = vpop.xlane.xlu0 %872
        %v874 = vmax.f32 %v866, %v870
        %v875 = vmax.f32 %v867, %v873
        %v876 = vsub.f32 %v866, %v874
        %v877 = vsub.f32 %v867, %v875
        %v878 = vmul.f32 %v876, 1.442695
        %v879 = vpow.pop %v878
        %v880 = vmul.f32 %v877, 1.442695
        %v881 = vpow.pop %v880
        %883 = vset.pattern.permute.xlu0 0
        %884 = vperm.xlu0 %883, %v874
        %v885 = vpop.permute.xlu0 %884
        %888 = vset.pattern.permute.xlu0 0
        %889 = vperm.xlu0 %888, %v875
        %v890 = vpop.permute.xlu0 %889
        %v892 = vsub.f32 %v863, %v885
        %v893 = vsub.f32 %v864, %v890
        %v894 = vmul.f32 %v892, 1.442695
        %v895 = vpow.pop %v894
        %v896 = vmul.f32 %v893, 1.442695
        %v897 = vpow.pop %v896
        %s898 = scalar_lea.vmem [#allocation3], 48
        %v899 = vld [vmem:[%s898] sm:$0xff]
        %v900 = vld [vmem:[%s898 + $0x8] sm:$0xff]
        %v901 = vmul.f32 %v879, %v899
        %v902 = vmul.f32 %v881, %v900
        %v903 = vsel %vm298, %v895, 0.0
        %904 = vadd.xlane.f32.xlu0 %v903
        %v905 = vpop.xlane.xlu0 %904
        %v906 = vsel %vm298, %v897, 0.0
        %907 = vadd.xlane.f32.xlu0 %v906
        %v908 = vpop.xlane.xlu0 %907
        %v909 = vadd.f32 %v901, %v905
        %v910 = vadd.f32 %v902, %v908
        %911 = vst.msk [vmem:[%s898] sm:$0xff] %vm394, %v909
        %912 = vst.msk [vmem:[%s898 + $0x8] sm:$0xff] %vm394, %v910
        %s913 = scalar_lea.vmem [#allocation4], 48
        %v914 = vld [vmem:[%s913] sm:$0xff]
        %v915 = vld [vmem:[%s913 + $0x8] sm:$0xff]
        %917 = vset.pattern.permute.xlu0 0
        %918 = vperm.xlu0 %917, %v879
        %v919 = vpop.permute.xlu0 %918
        %922 = vset.pattern.permute.xlu0 0
        %923 = vperm.xlu0 %922, %v881
        %v924 = vpop.permute.xlu0 %923
        %v926 = vmul.f32 %v919, %v914
        %v927 = vmul.f32 %v924, %v915
        %v928 = vpack.c.bf16 %v897, %v895
        %929 = vrot.lane.b32.xlu0 %v414, 80
        %v930 = vpop.permute.xlu0 %929
        %v933 = vsel %vm298, %v928, 0
        %935 = vmatprep.subr.bf16.mxu0 0
        %936 = vmatpush1.bf16.msra.mxu0 0
        %937 = vmatprep.subr.bf16.mxu0 0
        %938 = vmatpush1.bf16.msra.mxu0 0
        %939 = vmatprep.subr.bf16.mxu0 0
        %940 = vmatpush1.bf16.msra.mxu0 0
        %941 = vmatprep.subr.bf16.mxu0 0
        %942 = vmatpush1.bf16.msra.mxu0 0
        %943 = vmatprep.subr.bf16.mxu0 0
        %944 = vmatpush1.bf16.msra.mxu0 0
        %945 = vmatprep.subr.bf16.mxu0 0
        %946 = vmatpush1.bf16.msra.mxu0 0
        %947 = vmatprep.subr.bf16.mxu0 0
        %948 = vmatpush1.bf16.msra.mxu0 0
        %949 = vmatprep.subr.bf16.mxu0 0
        %950 = vmatpush1.bf16.msra.mxu0 %v930
        %951 = vmatprep.subr.bf16.mxu0 0
        %952 = vmatpush2.bf16.msra.mxu0 0
        %953 = vmatprep.subr.bf16.mxu0 0
        %954 = vmatpush2.bf16.msra.mxu0 0
        %955 = vmatprep.subr.bf16.mxu0 0
        %956 = vmatpush2.bf16.msra.mxu0 0
        %957 = vmatprep.subr.bf16.mxu0 0
        %958 = vmatpush2.bf16.msra.mxu0 0
        %959 = vmatprep.subr.bf16.mxu0 0
        %960 = vmatpush2.bf16.msra.mxu0 0
        %961 = vmatprep.subr.bf16.mxu0 0
        %962 = vmatpush2.bf16.msra.mxu0 0
        %963 = vmatprep.subr.bf16.mxu0 0
        %964 = vmatpush2.bf16.msra.mxu0 0
        %965 = vmatprep.subr.bf16.mxu0 0
        %966 = vmatpush2.bf16.msra.mxu0 0
        %967 = vmatprep.mubr.bf16.mxu0 0
        %968 = vmatmul.mubr.bf16.gmra.mxu0 %v933
        %v969 = vpop.f32.mrf.mxu0
        %v970 = vadd.f32 0.0, %v969
        %v971 = vpop.f32.mrf.mxu0
        %v972 = vpop.f32.mrf.mxu0
        %v973 = vadd.f32 0.0, %v972
        %v974 = vpop.f32.mrf.mxu0
        %975 = vdwg.mxu0
        %v976 = vadd.f32 %v926, %v970
        %v977 = vadd.f32 %v927, %v973
        %978 = vst.msk [vmem:[%s913] sm:$0xff] %vm298, %v976
        %979 = vst.msk [vmem:[%s913 + $0x8] sm:$0xff] %vm298, %v977
        %980 = vst.msk [vmem:[%s865] sm:$0xff] %vm394, %v874
        %981 = vst.msk [vmem:[%s865 + $0x8] sm:$0xff] %vm394, %v875
      $region36: #{gpt2_forward.8} parent=27 // pred_fallthru
        _
      %p982 = scmp.eq.s32.totalorder %s20, 1
      // Predicated region
      $region37: #{gpt2_forward.8} parent=27 // pred_check
        %p983 = pneg %p982
      $region38: #{gpt2_forward.8} parent=27 // pred_check_branch
        %985 = sbr.rel (%p983) target = $region40
      $region39: #{gpt2_forward.8} parent=27 // pred_region
        %v986 = vld [vmem:[#allocation4] sm:$0xff]
        %v987 = vld [vmem:[#allocation4 + $0x8] sm:$0xff]
        %v988 = vld [vmem:[#allocation3] sm:$0xff]
        %v989 = vld [vmem:[#allocation3 + $0x8] sm:$0xff]
        %v990 = vrcp.pop %v988
        %v991 = vrcp.pop %v989
        %993 = vset.pattern.permute.xlu0 0
        %994 = vperm.xlu0 %993, %v990
        %v995 = vpop.permute.xlu0 %994
        %998 = vset.pattern.permute.xlu0 0
        %999 = vperm.xlu0 %998, %v991
        %v1000 = vpop.permute.xlu0 %999
        %v1002 = vmul.f32 %v986, %v995
        %v1003 = vmul.f32 %v987, %v1000
        %s1004 = scalar_lea.vmem [#allocation4], 16
        %v1005 = vld [vmem:[%s1004] sm:$0xff]
        %v1006 = vld [vmem:[%s1004 + $0x8] sm:$0xff]
        %s1007 = scalar_lea.vmem [#allocation3], 16
        %v1008 = vld [vmem:[%s1007] sm:$0xff]
        %v1009 = vld [vmem:[%s1007 + $0x8] sm:$0xff]
        %v1010 = vrcp.pop %v1008
        %v1011 = vrcp.pop %v1009
        %1013 = vset.pattern.permute.xlu0 0
        %1014 = vperm.xlu0 %1013, %v1010
        %v1015 = vpop.permute.xlu0 %1014
        %1018 = vset.pattern.permute.xlu0 0
        %1019 = vperm.xlu0 %1018, %v1011
        %v1020 = vpop.permute.xlu0 %1019
        %v1022 = vmul.f32 %v1005, %v1015
        %v1023 = vmul.f32 %v1006, %v1020
        %s1024 = scalar_lea.vmem [#allocation4], 32
        %v1025 = vld [vmem:[%s1024] sm:$0xff]
        %v1026 = vld [vmem:[%s1024 + $0x8] sm:$0xff]
        %s1027 = scalar_lea.vmem [#allocation3], 32
        %v1028 = vld [vmem:[%s1027] sm:$0xff]
        %v1029 = vld [vmem:[%s1027 + $0x8] sm:$0xff]
        %v1030 = vrcp.pop %v1028
        %v1031 = vrcp.pop %v1029
        %1033 = vset.pattern.permute.xlu0 0
        %1034 = vperm.xlu0 %1033, %v1030
        %v1035 = vpop.permute.xlu0 %1034
        %1038 = vset.pattern.permute.xlu0 0
        %1039 = vperm.xlu0 %1038, %v1031
        %v1040 = vpop.permute.xlu0 %1039
        %v1042 = vmul.f32 %v1025, %v1035
        %v1043 = vmul.f32 %v1026, %v1040
        %s1044 = scalar_lea.vmem [#allocation4], 48
        %v1045 = vld [vmem:[%s1044] sm:$0xff]
        %v1046 = vld [vmem:[%s1044 + $0x8] sm:$0xff]
        %s1047 = scalar_lea.vmem [#allocation3], 48
        %v1048 = vld [vmem:[%s1047] sm:$0xff]
        %v1049 = vld [vmem:[%s1047 + $0x8] sm:$0xff]
        %v1050 = vrcp.pop %v1048
        %v1051 = vrcp.pop %v1049
        %1053 = vset.pattern.permute.xlu0 0
        %1054 = vperm.xlu0 %1053, %v1050
        %v1055 = vpop.permute.xlu0 %1054
        %1058 = vset.pattern.permute.xlu0 0
        %1059 = vperm.xlu0 %1058, %v1051
        %v1060 = vpop.permute.xlu0 %1059
        %v1062 = vmul.f32 %v1045, %v1055
        %v1063 = vmul.f32 %v1046, %v1060
        %1066 = vrot.lane.b32.xlu0 %v1022, 16
        %v1067 = vpop.permute.xlu0 %1066
        %1068 = vrot.lane.b32.xlu0 %v1023, 16
        %v1069 = vpop.permute.xlu0 %1068
        %1074 = vrot.lane.b32.xlu0 %v1042, 32
        %v1075 = vpop.permute.xlu0 %1074
        %1076 = vrot.lane.b32.xlu0 %v1043, 32
        %v1077 = vpop.permute.xlu0 %1076
        %1082 = vrot.lane.b32.xlu0 %v1062, 48
        %v1083 = vpop.permute.xlu0 %1082
        %1084 = vrot.lane.b32.xlu0 %v1063, 48
        %v1085 = vpop.permute.xlu0 %1084
        %vm1088 = vcmask 130048
        %v1089 = vsel %vm1088, %v1002, %v1067
        %v1090 = vsel %vm1088, %v1003, %v1069
        %vm1091 = vcmask 261120
        %v1092 = vsel %vm1091, %v1089, %v1075
        %v1093 = vsel %vm1091, %v1090, %v1077
        %vm1094 = vcmask 392192
        %v1095 = vsel %vm1094, %v1092, %v1083
        %v1096 = vsel %vm1094, %v1093, %v1085
        %v1097 = vpack.c.bf16 %v1096, %v1095
        %v1099 = vunpack.c.l.b16 %v1097
        %v1100 = vunpack.c.h.b16 %v1097
        %v1101 = vpack.c.b16 %v1099, %v1099
        %v1102 = vpack.c.b16 %v1100, %v1100
        %vm1105 = vcmask 519168
        %1106 = vst.msk [vmem:[%s230] sm:$0xf] %vm1105, %v1101
        %1107 = vst.msk [vmem:[%s230 + $0x4] sm:$0xf] %vm1105, %v1102
      $region40: #{gpt2_forward.8} parent=27 // pred_fallthru
        _
      %s1108 = smul.u32 2, %s19
      %p1109 = scmp.lt.s32.totalorder %s18, 1
      %s1110 = scalar_select %p1109, %s18, 1
      %p1111 = scmp.lt.s32.totalorder %s1108, 3
      %s1112 = scalar_select %p1111, %s1108, 3
      %s1113 = smul.addr %s1110, 4
      %s1114 = sadd.s32 %s1112, %s1113
      %s1115 = smul.addr %s1114, 4
      %s1116 = scalar_lea.vmem %s2, %s1115
      // Predicated region
      $region41: #{gpt2_forward.8} parent=27 // pred_check
        %p1117 = pneg %p108
      $region42: #{gpt2_forward.8} parent=27 // pred_check_branch
        %1119 = sbr.rel (%p1117) target = $region44
      $region43: #{gpt2_forward.8} parent=27 // pred_region
        %s1120 = smul.u32 2, %s19
      $region44: #{gpt2_forward.8} parent=27 // pred_fallthru
        _
    $region28: #{gpt2_forward.8} parent=5 // pred_fallthru
      _
    %p1121 = scmp.le.s32.totalorder 2, %s8
    // Predicated region
    $region45: #{gpt2_forward.8} parent=5 // pred_check
      %p1122 = pneg %p1121
    $region46: #{gpt2_forward.8} parent=5 // pred_check_branch
      %1124 = sbr.rel (%p1122) target = $region48
    $region47: #{gpt2_forward.8} parent=5 // pred_region
      %s1125 = ssub.s32 %s8, 2
      // Predicated region
      $region49: #{gpt2_forward.8} parent=47 // pred_check
        %p1126 = pneg %p114
      $region50: #{gpt2_forward.8} parent=47 // pred_check_branch
        %1128 = sbr.rel (%p1126) target = $region52
      $region51: #{gpt2_forward.8} parent=47 // pred_region
        %s1129 = smul.u32 2, %s22
        %p1130 = scmp.lt.s32.totalorder %s21, 1
        %s1131 = scalar_select %p1130, %s21, 1
        %p1132 = scmp.lt.s32.totalorder %s1129, 3
        %s1133 = scalar_select %p1132, %s1129, 3
        %s1134 = smul.addr %s1131, 4
        %s1135 = sadd.s32 %s1133, %s1134
        %s1136 = smul.addr %s1135, 4
        %s1137 = scalar_lea.vmem %s2, %s1136
      $region52: #{gpt2_forward.8} parent=47 // pred_fallthru
        _
    $region48: #{gpt2_forward.8} parent=5 // pred_fallthru
      _
  $region6: #{gpt2_forward.8} parent=0 // loop_footer
    %s12 = sadd.s32 1, %s8
  $region7: #{gpt2_forward.8} parent=0 // loop_footer_branch
    %7 = sbr.rel target = $region3
  $region8: #{gpt2_forward.8} parent=0 // loop_exit
    _

</llo_original>
